<compile_context>
chip_gen: v7x
topology: tpu7x:2x2x1
jax: 0.10.0
libtpu: 0.0.40
codegen_flags: <defaults>
</compile_context>

<pallas_src>
from functools import partial

import jax
import jax.numpy as jnp
from jax.experimental import pallas as pl
from jax.experimental.pallas import tpu as pltpu


def _oni_colum_kernel(z_ref, w_ref, *, T: int, eps: float, d_real: int,
                      mxu_bf16: bool):
    f32 = jnp.float32
    _, n_pad, d_pad = z_ref.shape

    def centered():
        # Center rows over the REAL d entries (padded columns forced to 0).
        z = z_ref[...].astype(f32)                             # (G, n_pad, d_pad)
        col = jax.lax.broadcasted_iota(jnp.int32, (1, n_pad, d_pad), 2)
        mean = jnp.sum(z, axis=-1, keepdims=True) * f32(1.0 / d_real)
        return jnp.where(col < d_real, z - mean, f32(0.0))

    def diag_mask():
        # Real-diagonal mask, recomputed at each use site (keeps fewer d^2
        # buffers live across the matmul-heavy region).
        row = jax.lax.broadcasted_iota(jnp.int32, (1, d_pad, d_pad), 1)
        col = jax.lax.broadcasted_iota(jnp.int32, (1, d_pad, d_pad), 2)
        return (row == col) & (col < d_real)

    # ---- S = Zc^T Zc + eps on the real diagonal ---------------------------
    zc = centered()
    s = jnp.einsum('gnd,gne->gde', zc, zc,
                   preferred_element_type=f32)                 # (G, d_pad, d_pad)
    s = s + jnp.where(diag_mask(), f32(eps), f32(0.0))

    # ---- Frobenius norm per group (padded entries are exactly zero) -------
    norm_s = jnp.sqrt(jnp.sum(s * s, axis=(1, 2), keepdims=True))   # (G,1,1)

    # ---- Newton-Schulz:  B_{t+1} = 1.5 B - 0.5 B^3 S ----------------------
    # B0 = I restricted to the real diagonal so the padded block stays 0.
    b0 = jnp.broadcast_to(jnp.where(diag_mask(), f32(1.0), f32(0.0)), s.shape)

    def mm_f32(a, bb):
        return jnp.einsum('gij,gjk->gik', a, bb, preferred_element_type=f32)

    def ns_step_f32(_, b):
        b2 = mm_f32(b, b)
        b3 = mm_f32(b2, b)
        return 1.5 * b - 0.5 * mm_f32(b3, s)

    if mxu_bf16 and T > 1:
        s_bf = s.astype(jnp.bfloat16)                 # hoisted: cast S once

        def ns_step_bf16(_, b):
            b_bf = b.astype(jnp.bfloat16)             # cast carried B once/iter
            b2_bf = jnp.einsum('gij,gjk->gik', b_bf, b_bf,
                               preferred_element_type=f32).astype(jnp.bfloat16)
            b3_bf = jnp.einsum('gij,gjk->gik', b2_bf, b_bf,
                               preferred_element_type=f32).astype(jnp.bfloat16)
            corr = jnp.einsum('gij,gjk->gik', b3_bf, s_bf,
                              preferred_element_type=f32)
            return 1.5 * b - 0.5 * corr               # update carried in f32

        b = jax.lax.fori_loop(0, T - 1, ns_step_bf16, b0, unroll=True)
        b = ns_step_f32(0, b)                         # last iteration in f32
    elif T > 0:
        b = jax.lax.fori_loop(0, T, ns_step_f32, b0, unroll=True)
    else:
        b = b0

    # ---- W = Zc B_T / sqrt(||S||_F) ---------------------------------------
    # Recompute Zc from the resident input block (frees the f32 copy during
    # the NS loop); rsqrt+mul uses the EUP slot instead of a VALU divide.
    zc2 = centered()
    inv = jax.lax.rsqrt(norm_s)
    w = jnp.einsum('gnd,gde->gne', zc2, b, preferred_element_type=f32) * inv
    w_ref[...] = w.astype(w_ref.dtype)


def _round_up(x: int, m: int) -> int:
    return (x + m - 1) // m * m


def _tpu_vmem_capacity_bytes() -> int:
    """Per-core VMEM capacity; conservative fallback if the query fails."""
    try:
        cap = int(pltpu.get_tpu_info().vmem_capacity_bytes)
        if cap > 0:
            return cap
    except Exception:
        pass
    return 64 << 20          # v7x per-TensorCore VMEM (smallest of v5e/v6e/v7x)


def _pick_group_tile(norm_groups: int, n_pad: int, d_pad: int,
                     io_itemsize: int, budget_bytes: int) -> int:
    """Largest divisor of norm_groups whose per-step working set fits budget,
    while keeping >= 2 grid steps when norm_groups >= 2 (v7x megacore)."""
    per_group = (4 * n_pad * d_pad * io_itemsize    # double-buffered in + out
                 + 2 * n_pad * d_pad * 4            # zc / w f32 copies
                 + 7 * d_pad * d_pad * 4)           # S, B, NS temps, masks
    g_cap = norm_groups if norm_groups < 2 else norm_groups // 2
    g_tile = 1
    for g in range(1, g_cap + 1):
        if norm_groups % g == 0 and g * per_group <= budget_bytes:
            g_tile = g
    return g_tile


def oni_norm_colum(weight: jax.Array, T: int = 5, norm_groups: int = 1,
                   eps: float = 1e-5, mxu_bf16: bool = True) -> jax.Array:
    """Pallas implementation of ONINorm_colum.forward."""
    out_c = weight.shape[0]
    assert out_c % norm_groups == 0
    n = out_c // norm_groups
    d = int(weight.size) // out_c

    z = weight.reshape(norm_groups, n, d)
    itemsize = jnp.dtype(weight.dtype).itemsize
    sub = 8 if itemsize >= 4 else (16 if itemsize == 2 else 32)
    n_pad = _round_up(n, sub)            # sublane-dense for the IO dtype
    d_pad = _round_up(d, 128)            # lane-dense; no padding beyond 128s
    if (n_pad, d_pad) != (n, d):
        z = jnp.pad(z, ((0, 0), (0, n_pad - n), (0, d_pad - d)))

    vmem_cap = _tpu_vmem_capacity_bytes()
    g_tile = _pick_group_tile(norm_groups, n_pad, d_pad, itemsize,
                              budget_bytes=int(vmem_cap * 0.6))
    grid = (norm_groups // g_tile,)

    # VMEM limit sized to the working set, clamped to the chip's capacity
    # with ~10% headroom (v7x: 64 MiB/TC, v5e/v6e: 128 MiB).
    vmem_bytes = (2 * 2 * g_tile * n_pad * d_pad * itemsize
                  + 2 * g_tile * n_pad * d_pad * 4
                  + 7 * g_tile * d_pad * d_pad * 4
                  + (8 << 20))
    vmem_bytes = int(min(max(vmem_bytes, 32 << 20), int(vmem_cap * 0.9)))

    flops_per_group = (4 * n_pad * d_pad * d_pad        # S + final projection
                       + 6 * T * d_pad ** 3)            # Newton-Schulz matmuls
    cost = pl.CostEstimate(
        flops=int(norm_groups * flops_per_group),
        transcendentals=int(2 * norm_groups),
        bytes_accessed=int(2 * norm_groups * n_pad * d_pad * itemsize))

    # TODO(synk): for d_pad >~1.2k (v7x, 64 MiB VMEM) / ~2k (v5e/v6e) the
    # whole-matrix-resident S/B design spills -- add a panel-tiled
    # Newton-Schulz path (pltpu.emit_pipeline over 256/512-wide panels with
    # S/B in HBM via pl.ANY), and for norm_groups == 1 split panels across
    # v7x's two TensorCores with pl.core_map(pltpu.create_tensorcore_mesh()).

    kernel = partial(_oni_colum_kernel, T=T, eps=eps, d_real=d,
                     mxu_bf16=mxu_bf16)
    w = pl.pallas_call(
        kernel,
        out_shape=jax.ShapeDtypeStruct((norm_groups, n_pad, d_pad),
                                       weight.dtype),
        grid_spec=pltpu.PrefetchScalarGridSpec(
            num_scalar_prefetch=0,
            grid=grid,
            in_specs=[pl.BlockSpec((g_tile, n_pad, d_pad),
                                   lambda g: (g, 0, 0))],
            out_specs=pl.BlockSpec((g_tile, n_pad, d_pad),
                                   lambda g: (g, 0, 0)),
        ),
        compiler_params=pltpu.CompilerParams(
            dimension_semantics=("parallel",),   # group axis -> megacore shard
            vmem_limit_bytes=vmem_bytes),
        cost_estimate=cost,
    )(z)

    w = w[:, :n, :d]
    return w.reshape(weight.shape)


def oni_norm_colum_ref(weight: jax.Array, T: int = 5, norm_groups: int = 1,
                       eps: float = 1e-5) -> jax.Array:
    """Plain-JAX reference mirroring the torch module exactly."""
    hp = jax.lax.Precision.HIGHEST
    out_c = weight.shape[0]
    n = out_c // norm_groups
    d = int(weight.size) // out_c
    z = weight.reshape(norm_groups, n, d).astype(jnp.float32)
    zc = z - z.mean(axis=-1, keepdims=True)
    s = jnp.einsum('gnd,gne->gde', zc, zc, precision=hp)
    eye = jnp.eye(d, dtype=jnp.float32)[None]
    s = s + eps * eye
    norm_s = jnp.sqrt(jnp.sum(s * s, axis=(1, 2), keepdims=True))
    b = jnp.broadcast_to(eye, s.shape)
    for _ in range(T):
        b3 = jnp.einsum('gij,gjk,gkl->gil', b, b, b, precision=hp)
        b = 1.5 * b - 0.5 * jnp.einsum('gij,gjk->gik', b3, s, precision=hp)
    w = jnp.einsum('gnd,gde->gne', zc, b, precision=hp) / jnp.sqrt(norm_s)
    return w.reshape(weight.shape).astype(weight.dtype)


if __name__ == "__main__":
    key = jax.random.PRNGKey(0)
    # Small conv weight: (out_ch=8, in_ch=4, kH=3, kW=3); norm_groups=2, T=5.
    # Scaled down so the (deliberately un-normalized, per the torch spec)
    # Newton-Schulz iteration stays well-behaved.
    weight = 0.05 * jax.random.normal(key, (8, 4, 3, 3), dtype=jnp.float32)

    ref = oni_norm_colum_ref(weight, T=5, norm_groups=2)

    # f32 MXU path (exact forward semantics).
    out_f32 = jax.block_until_ready(
        oni_norm_colum(weight, T=5, norm_groups=2, mxu_bf16=False))
    assert out_f32.shape == weight.shape and out_f32.dtype == weight.dtype
    assert jnp.allclose(out_f32, ref, rtol=1e-2, atol=1e-2), \
        "f32 path mismatch vs reference"

    # Default path: bf16 MXU operands for the NS matmuls (f32 accumulate,
    # last iteration + final projection kept in f32).
    out = jax.block_until_ready(oni_norm_colum(weight, T=5, norm_groups=2))
    assert out.shape == weight.shape and out.dtype == weight.dtype
    assert jnp.allclose(out, ref, rtol=2e-2, atol=2e-2), \
        "bf16-MXU path mismatch vs reference"

    print("KERNEL_OK")
</pallas_src>

<mosaic_0001>
module attributes {stable_mosaic.version = 11 : i64} {
  func.func @_oni_colum_kernel(%arg0: i32, %arg1: memref<1x8x128xf32, #tpu.memory_space<vmem>>, %arg2: memref<1x8x128xf32, #tpu.memory_space<vmem>>) attributes {dimension_semantics = [#tpu.dimension_semantics<parallel>], iteration_bounds = array<i64: 2>, scalar_prefetch = 0 : i64, scratch_operands = 0 : i64, tpu.core_type = #tpu.core_type<tc>, window_params = [{transform_indices = @transform_0, window_bounds = array<i64: 1, 8, 128>}, {transform_indices = @transform_1, window_bounds = array<i64: 1, 8, 128>}]} {
    %c0 = arith.constant 0 : index
    %c0_0 = arith.constant 0 : index
    %c0_1 = arith.constant 0 : index
    %0 = vector.load %arg1[%c0, %c0_0, %c0_1] : memref<1x8x128xf32, #tpu.memory_space<vmem>>, vector<1x8x128xf32>
    %1 = tpu.iota {dimensions = array<i32: 2>} : vector<1x8x128xi32>
    %cst = arith.constant dense<0.000000e+00> : vector<1x8xf32>
    %2 = vector.multi_reduction <add>, %0, %cst [2] : vector<1x8x128xf32> to vector<1x8xf32>
    %3 = vector.shape_cast %2 : vector<1x8xf32> to vector<1x8x1xf32>
    %cst_2 = arith.constant 0.027777778 : f32
    %4 = vector.broadcast %cst_2 : f32 to vector<1x8x1xf32>
    %5 = arith.mulf %3, %4 : vector<1x8x1xf32>
    %c36_i32 = arith.constant 36 : i32
    %6 = vector.broadcast %c36_i32 : i32 to vector<1x8x128xi32>
    %7 = arith.cmpi slt, %1, %6 : vector<1x8x128xi32>
    %8 = vector.broadcast %5 : vector<1x8x1xf32> to vector<1x8x128xf32>
    %9 = arith.subf %0, %8 : vector<1x8x128xf32>
    %cst_3 = arith.constant 0.000000e+00 : f32
    %10 = vector.broadcast %cst_3 : f32 to vector<1x8x128xf32>
    %11 = arith.select %7, %9, %10 : vector<1x8x128xi1>, vector<1x8x128xf32>
    "tpu.trace_start"() <{level = 10 : i32, message = "gnd,gne->gde"}> : () -> ()
    %cst_4 = arith.constant dense<0.000000e+00> : vector<1x128x128xf32>
    %12 = tpu.matmul %11, %11, %cst_4 {dimension_numbers = #tpu.dot_dimension_numbers<[1], [1], [2], [2], [0, 0, 0, 2, 1, 2], [0], [0]>} : vector<1x8x128xf32>, vector<1x8x128xf32>, vector<1x128x128xf32> -> vector<1x128x128xf32>
    "tpu.trace_stop"() : () -> ()
    %13 = tpu.iota {dimensions = array<i32: 1>} : vector<1x128x128xi32>
    %14 = tpu.iota {dimensions = array<i32: 2>} : vector<1x128x128xi32>
    %15 = arith.cmpi eq, %13, %14 : vector<1x128x128xi32>
    %c36_i32_5 = arith.constant 36 : i32
    %16 = vector.broadcast %c36_i32_5 : i32 to vector<1x128x128xi32>
    %17 = arith.cmpi slt, %14, %16 : vector<1x128x128xi32>
    %18 = arith.andi %15, %17 : vector<1x128x128xi1>
    %cst_6 = arith.constant 9.99999974E-6 : f32
    %cst_7 = arith.constant 0.000000e+00 : f32
    %19 = vector.broadcast %cst_6 : f32 to vector<1x128x128xf32>
    %20 = vector.broadcast %cst_7 : f32 to vector<1x128x128xf32>
    %21 = arith.select %18, %19, %20 : vector<1x128x128xi1>, vector<1x128x128xf32>
    %22 = arith.addf %12, %21 : vector<1x128x128xf32>
    %23 = arith.mulf %22, %22 : vector<1x128x128xf32>
    %cst_8 = arith.constant dense<0.000000e+00> : vector<1xf32>
    %24 = vector.multi_reduction <add>, %23, %cst_8 [1, 2] : vector<1x128x128xf32> to vector<1xf32>
    %25 = vector.shape_cast %24 : vector<1xf32> to vector<1x1x1xf32>
    %26 = math.sqrt %25 : vector<1x1x1xf32>
    %27 = tpu.iota {dimensions = array<i32: 1>} : vector<1x128x128xi32>
    %28 = tpu.iota {dimensions = array<i32: 2>} : vector<1x128x128xi32>
    %29 = arith.cmpi eq, %27, %28 : vector<1x128x128xi32>
    %c36_i32_9 = arith.constant 36 : i32
    %30 = vector.broadcast %c36_i32_9 : i32 to vector<1x128x128xi32>
    %31 = arith.cmpi slt, %28, %30 : vector<1x128x128xi32>
    %32 = arith.andi %29, %31 : vector<1x128x128xi1>
    %cst_10 = arith.constant 1.000000e+00 : f32
    %cst_11 = arith.constant 0.000000e+00 : f32
    %33 = vector.broadcast %cst_10 : f32 to vector<1x128x128xf32>
    %34 = vector.broadcast %cst_11 : f32 to vector<1x128x128xf32>
    %35 = arith.select %32, %33, %34 : vector<1x128x128xi1>, vector<1x128x128xf32>
    %c0_i32 = arith.constant 0 : i32
    "tpu.trace_start"() <{level = 10 : i32, message = "gij,gjk->gik"}> : () -> ()
    %cst_12 = arith.constant dense<0.000000e+00> : vector<1x128x128xf32>
    %36 = tpu.matmul %35, %35, %cst_12 {dimension_numbers = #tpu.dot_dimension_numbers<[2], [1], [1], [2], [0, 0, 0, 1, 1, 2], [0], [0]>} : vector<1x128x128xf32>, vector<1x128x128xf32>, vector<1x128x128xf32> -> vector<1x128x128xf32>
    %cst_13 = arith.constant dense<0.000000e+00> : vector<1x128x128xf32>
    %37 = tpu.matmul %36, %35, %cst_13 {dimension_numbers = #tpu.dot_dimension_numbers<[2], [1], [1], [2], [0, 0, 0, 1, 1, 2], [0], [0]>} : vector<1x128x128xf32>, vector<1x128x128xf32>, vector<1x128x128xf32> -> vector<1x128x128xf32>
    "tpu.trace_stop"() : () -> ()
    %cst_14 = arith.constant 1.500000e+00 : f32
    %38 = vector.broadcast %cst_14 : f32 to vector<1x128x128xf32>
    %39 = arith.mulf %38, %35 : vector<1x128x128xf32>
    "tpu.trace_start"() <{level = 10 : i32, message = "gij,gjk->gik"}> : () -> ()
    %cst_15 = arith.constant dense<0.000000e+00> : vector<1x128x128xf32>
    %40 = tpu.matmul %37, %22, %cst_15 {dimension_numbers = #tpu.dot_dimension_numbers<[2], [1], [1], [2], [0, 0, 0, 1, 1, 2], [0], [0]>} : vector<1x128x128xf32>, vector<1x128x128xf32>, vector<1x128x128xf32> -> vector<1x128x128xf32>
    "tpu.trace_stop"() : () -> ()
    %cst_16 = arith.constant 5.000000e-01 : f32
    %41 = vector.broadcast %cst_16 : f32 to vector<1x128x128xf32>
    %42 = arith.mulf %41, %40 : vector<1x128x128xf32>
    %43 = arith.subf %39, %42 : vector<1x128x128xf32>
    %c1_i32 = arith.constant 1 : i32
    "tpu.trace_start"() <{level = 10 : i32, message = "gij,gjk->gik"}> : () -> ()
    %cst_17 = arith.constant dense<0.000000e+00> : vector<1x128x128xf32>
    %44 = tpu.matmul %43, %43, %cst_17 {dimension_numbers = #tpu.dot_dimension_numbers<[2], [1], [1], [2], [0, 0, 0, 1, 1, 2], [0], [0]>} : vector<1x128x128xf32>, vector<1x128x128xf32>, vector<1x128x128xf32> -> vector<1x128x128xf32>
    %cst_18 = arith.constant dense<0.000000e+00> : vector<1x128x128xf32>
    %45 = tpu.matmul %44, %43, %cst_18 {dimension_numbers = #tpu.dot_dimension_numbers<[2], [1], [1], [2], [0, 0, 0, 1, 1, 2], [0], [0]>} : vector<1x128x128xf32>, vector<1x128x128xf32>, vector<1x128x128xf32> -> vector<1x128x128xf32>
    "tpu.trace_stop"() : () -> ()
    %cst_19 = arith.constant 1.500000e+00 : f32
    %46 = vector.broadcast %cst_19 : f32 to vector<1x128x128xf32>
    %47 = arith.mulf %46, %43 : vector<1x128x128xf32>
    "tpu.trace_start"() <{level = 10 : i32, message = "gij,gjk->gik"}> : () -> ()
    %cst_20 = arith.constant dense<0.000000e+00> : vector<1x128x128xf32>
    %48 = tpu.matmul %45, %22, %cst_20 {dimension_numbers = #tpu.dot_dimension_numbers<[2], [1], [1], [2], [0, 0, 0, 1, 1, 2], [0], [0]>} : vector<1x128x128xf32>, vector<1x128x128xf32>, vector<1x128x128xf32> -> vector<1x128x128xf32>
    "tpu.trace_stop"() : () -> ()
    %cst_21 = arith.constant 5.000000e-01 : f32
    %49 = vector.broadcast %cst_21 : f32 to vector<1x128x128xf32>
    %50 = arith.mulf %49, %48 : vector<1x128x128xf32>
    %51 = arith.subf %47, %50 : vector<1x128x128xf32>
    %c2_i32 = arith.constant 2 : i32
    "tpu.trace_start"() <{level = 10 : i32, message = "gij,gjk->gik"}> : () -> ()
    %cst_22 = arith.constant dense<0.000000e+00> : vector<1x128x128xf32>
    %52 = tpu.matmul %51, %51, %cst_22 {dimension_numbers = #tpu.dot_dimension_numbers<[2], [1], [1], [2], [0, 0, 0, 1, 1, 2], [0], [0]>} : vector<1x128x128xf32>, vector<1x128x128xf32>, vector<1x128x128xf32> -> vector<1x128x128xf32>
    %cst_23 = arith.constant dense<0.000000e+00> : vector<1x128x128xf32>
    %53 = tpu.matmul %52, %51, %cst_23 {dimension_numbers = #tpu.dot_dimension_numbers<[2], [1], [1], [2], [0, 0, 0, 1, 1, 2], [0], [0]>} : vector<1x128x128xf32>, vector<1x128x128xf32>, vector<1x128x128xf32> -> vector<1x128x128xf32>
    "tpu.trace_stop"() : () -> ()
    %cst_24 = arith.constant 1.500000e+00 : f32
    %54 = vector.broadcast %cst_24 : f32 to vector<1x128x128xf32>
    %55 = arith.mulf %54, %51 : vector<1x128x128xf32>
    "tpu.trace_start"() <{level = 10 : i32, message = "gij,gjk->gik"}> : () -> ()
    %cst_25 = arith.constant dense<0.000000e+00> : vector<1x128x128xf32>
    %56 = tpu.matmul %53, %22, %cst_25 {dimension_numbers = #tpu.dot_dimension_numbers<[2], [1], [1], [2], [0, 0, 0, 1, 1, 2], [0], [0]>} : vector<1x128x128xf32>, vector<1x128x128xf32>, vector<1x128x128xf32> -> vector<1x128x128xf32>
    "tpu.trace_stop"() : () -> ()
    %cst_26 = arith.constant 5.000000e-01 : f32
    %57 = vector.broadcast %cst_26 : f32 to vector<1x128x128xf32>
    %58 = arith.mulf %57, %56 : vector<1x128x128xf32>
    %59 = arith.subf %55, %58 : vector<1x128x128xf32>
    %c3_i32 = arith.constant 3 : i32
    "tpu.trace_start"() <{level = 10 : i32, message = "gij,gjk->gik"}> : () -> ()
    %cst_27 = arith.constant dense<0.000000e+00> : vector<1x128x128xf32>
    %60 = tpu.matmul %59, %59, %cst_27 {dimension_numbers = #tpu.dot_dimension_numbers<[2], [1], [1], [2], [0, 0, 0, 1, 1, 2], [0], [0]>} : vector<1x128x128xf32>, vector<1x128x128xf32>, vector<1x128x128xf32> -> vector<1x128x128xf32>
    %cst_28 = arith.constant dense<0.000000e+00> : vector<1x128x128xf32>
    %61 = tpu.matmul %60, %59, %cst_28 {dimension_numbers = #tpu.dot_dimension_numbers<[2], [1], [1], [2], [0, 0, 0, 1, 1, 2], [0], [0]>} : vector<1x128x128xf32>, vector<1x128x128xf32>, vector<1x128x128xf32> -> vector<1x128x128xf32>
    "tpu.trace_stop"() : () -> ()
    %cst_29 = arith.constant 1.500000e+00 : f32
    %62 = vector.broadcast %cst_29 : f32 to vector<1x128x128xf32>
    %63 = arith.mulf %62, %59 : vector<1x128x128xf32>
    "tpu.trace_start"() <{level = 10 : i32, message = "gij,gjk->gik"}> : () -> ()
    %cst_30 = arith.constant dense<0.000000e+00> : vector<1x128x128xf32>
    %64 = tpu.matmul %61, %22, %cst_30 {dimension_numbers = #tpu.dot_dimension_numbers<[2], [1], [1], [2], [0, 0, 0, 1, 1, 2], [0], [0]>} : vector<1x128x128xf32>, vector<1x128x128xf32>, vector<1x128x128xf32> -> vector<1x128x128xf32>
    "tpu.trace_stop"() : () -> ()
    %cst_31 = arith.constant 5.000000e-01 : f32
    %65 = vector.broadcast %cst_31 : f32 to vector<1x128x128xf32>
    %66 = arith.mulf %65, %64 : vector<1x128x128xf32>
    %67 = arith.subf %63, %66 : vector<1x128x128xf32>
    %c4_i32 = arith.constant 4 : i32
    "tpu.trace_start"() <{level = 10 : i32, message = "gij,gjk->gik"}> : () -> ()
    %cst_32 = arith.constant dense<0.000000e+00> : vector<1x128x128xf32>
    %68 = tpu.matmul %67, %67, %cst_32 {dimension_numbers = #tpu.dot_dimension_numbers<[2], [1], [1], [2], [0, 0, 0, 1, 1, 2], [0], [0]>} : vector<1x128x128xf32>, vector<1x128x128xf32>, vector<1x128x128xf32> -> vector<1x128x128xf32>
    %cst_33 = arith.constant dense<0.000000e+00> : vector<1x128x128xf32>
    %69 = tpu.matmul %68, %67, %cst_33 {dimension_numbers = #tpu.dot_dimension_numbers<[2], [1], [1], [2], [0, 0, 0, 1, 1, 2], [0], [0]>} : vector<1x128x128xf32>, vector<1x128x128xf32>, vector<1x128x128xf32> -> vector<1x128x128xf32>
    "tpu.trace_stop"() : () -> ()
    %cst_34 = arith.constant 1.500000e+00 : f32
    %70 = vector.broadcast %cst_34 : f32 to vector<1x128x128xf32>
    %71 = arith.mulf %70, %67 : vector<1x128x128xf32>
    "tpu.trace_start"() <{level = 10 : i32, message = "gij,gjk->gik"}> : () -> ()
    %cst_35 = arith.constant dense<0.000000e+00> : vector<1x128x128xf32>
    %72 = tpu.matmul %69, %22, %cst_35 {dimension_numbers = #tpu.dot_dimension_numbers<[2], [1], [1], [2], [0, 0, 0, 1, 1, 2], [0], [0]>} : vector<1x128x128xf32>, vector<1x128x128xf32>, vector<1x128x128xf32> -> vector<1x128x128xf32>
    "tpu.trace_stop"() : () -> ()
    %cst_36 = arith.constant 5.000000e-01 : f32
    %73 = vector.broadcast %cst_36 : f32 to vector<1x128x128xf32>
    %74 = arith.mulf %73, %72 : vector<1x128x128xf32>
    %75 = arith.subf %71, %74 : vector<1x128x128xf32>
    %c0_37 = arith.constant 0 : index
    %c0_38 = arith.constant 0 : index
    %c0_39 = arith.constant 0 : index
    %76 = vector.load %arg1[%c0_37, %c0_38, %c0_39] : memref<1x8x128xf32, #tpu.memory_space<vmem>>, vector<1x8x128xf32>
    %77 = tpu.iota {dimensions = array<i32: 2>} : vector<1x8x128xi32>
    %cst_40 = arith.constant dense<0.000000e+00> : vector<1x8xf32>
    %78 = vector.multi_reduction <add>, %76, %cst_40 [2] : vector<1x8x128xf32> to vector<1x8xf32>
    %79 = vector.shape_cast %78 : vector<1x8xf32> to vector<1x8x1xf32>
    %cst_41 = arith.constant 0.027777778 : f32
    %80 = vector.broadcast %cst_41 : f32 to vector<1x8x1xf32>
    %81 = arith.mulf %79, %80 : vector<1x8x1xf32>
    %c36_i32_42 = arith.constant 36 : i32
    %82 = vector.broadcast %c36_i32_42 : i32 to vector<1x8x128xi32>
    %83 = arith.cmpi slt, %77, %82 : vector<1x8x128xi32>
    %84 = vector.broadcast %81 : vector<1x8x1xf32> to vector<1x8x128xf32>
    %85 = arith.subf %76, %84 : vector<1x8x128xf32>
    %cst_43 = arith.constant 0.000000e+00 : f32
    %86 = vector.broadcast %cst_43 : f32 to vector<1x8x128xf32>
    %87 = arith.select %83, %85, %86 : vector<1x8x128xi1>, vector<1x8x128xf32>
    %88 = math.rsqrt %26 : vector<1x1x1xf32>
    "tpu.trace_start"() <{level = 10 : i32, message = "gnd,gde->gne"}> : () -> ()
    %cst_44 = arith.constant dense<0.000000e+00> : vector<1x8x128xf32>
    %89 = tpu.matmul %87, %75, %cst_44 {dimension_numbers = #tpu.dot_dimension_numbers<[2], [1], [1], [2], [0, 0, 0, 1, 1, 2], [0], [0]>} : vector<1x8x128xf32>, vector<1x128x128xf32>, vector<1x8x128xf32> -> vector<1x8x128xf32>
    "tpu.trace_stop"() : () -> ()
    %90 = vector.broadcast %88 : vector<1x1x1xf32> to vector<1x8x128xf32>
    %91 = arith.mulf %89, %90 : vector<1x8x128xf32>
    %c0_45 = arith.constant 0 : index
    %c0_46 = arith.constant 0 : index
    %c0_47 = arith.constant 0 : index
    %92 = vector.load %arg2[%c0_45, %c0_46, %c0_47] : memref<1x8x128xf32, #tpu.memory_space<vmem>>, vector<1x8x128xf32>
    tpu.vector_store %arg2[%c0_45, %c0_46, %c0_47], %91 {strides = array<i32>} : memref<1x8x128xf32, #tpu.memory_space<vmem>>, vector<1x8x128xf32>,
    return
  }
  func.func @transform_0(%arg0: i32) -> (i32, i32, i32) {
    %c0_i32 = arith.constant 0 : i32
    %c0_i32_0 = arith.constant 0 : i32
    %c0_i32_1 = arith.constant 0 : i32
    return %arg0, %c0_i32, %c0_i32_0 : i32, i32, i32
  }
  func.func @transform_1(%arg0: i32) -> (i32, i32, i32) {
    %c0_i32 = arith.constant 0 : i32
    %c0_i32_0 = arith.constant 0 : i32
    %c0_i32_1 = arith.constant 0 : i32
    return %arg0, %c0_i32, %c0_i32_0 : i32, i32, i32
  }
}

</mosaic_0001>

<llo_original>
// kernel: tpu_custom_call.1
$region0: #{tpu_custom_call.1}
  #allocation0 [shape = 'u32[]', space=smem, size = 0x4, offset = 0x4, fixed_abs, tag = 'smem constant byte address 0x4 - core index']
  #allocation1 [shape = 'u32[144,128]{1,0:T(1,128)}', space=vmem, size = 0x12000, scoped, tag = 'internal scratch']
  %s0 = inlined_call_operand.hbm [shape: f32[2,8,128], index: 0, kind: input, shape index: {}]
  %s1 = inlined_call_operand.hbm [shape: f32[2,8,128], index: 1, kind: output, shape index: {}]
  %s2 = sld [smem:[#allocation0]]
  $region41: #{tpu_custom_call.1} parent=0
    _
  %s4 = ssub.s32 1, %s2
  %s5 = scalar_select 0, %s4, %s2
  $region1: #{tpu_custom_call.1} parent=0
    #allocation2 [shape = 'u8[8192]{0}', space=vmem, size = 0x2000, scoped, tag = 'input window, operand 0']
    #allocation3 [shape = 's32[2]{0}', space=sflag, size = 0x8, scoped, tag = 'scoped memory for tpu_custom_call.1']
    #allocation4 [shape = 's32[2]{0}', space=sflag, size = 0x8, scoped, tag = 'scoped memory for tpu_custom_call.1']
    #allocation5 [shape = 'u8[8192]{0}', space=vmem, size = 0x2000, scoped, tag = 'output window, operand 0']
    %6 = vsyncpa [#allocation3], 0
    %s7 = scalar_lea.sflag [#allocation3], 1
    %8 = vsyncpa %s7, 0
    %9 = vsyncpa [#allocation4], 0
    %s10 = scalar_lea.sflag [#allocation4], 1
    %11 = vsyncpa %s10, 0
    loop: start=0, step=1, limit=4
    $region2: #{tpu_custom_call.1} parent=1 // loop_pre_header
      _
    $region3: #{tpu_custom_call.1} parent=1 // loop_header
      %s13 = sphi 0, %s17
      %p14 = scmp.ge.s32.totalorder %s13, 4
      %s23 = sphi 0, %s25
      %s26 = sphi 0, %s23
      %s27 = sphi 0, %s26
      %s43 = sphi 0, %s27
      %s49 = sphi 0, %s51
      %s52 = sphi 0, %s49
      %s53 = sphi 0, %s52
      %s69 = sphi 0, %s53
    $region4: #{tpu_custom_call.1} parent=1 // loop_header_branch
      %16 = sbr.rel (%p14) target = $region8
    $region5: #{tpu_custom_call.1} parent=1 // loop_body
      %s18 = ssub.s32 %s13, 1
      %s19 = ssub.s32 %s13, 2
      %s20 = sadd.s32 %s13, 1
      %s21 = ssub.s32 %s13, %s20
      %p22 = scmp.eq.s32.totalorder %s21, 0
      %s24 = sadd.s32 %s23, 1
      %s25 = scalar_select %p22, %s23, %s24
      %p28 = pneg %p22
      %p29 = scmp.eq.s32.totalorder %s13, 1
      %p30 = por %p28, %p29
      %p31 = scmp.ne.s32.totalorder %s23, %s26
      %p32 = scmp.eq.s32.totalorder %s13, 0
      %p33 = por %p31, %p32
      %p34 = scmp.ne.s32.totalorder %s23, %s26
      %p35 = scmp.eq.s32.totalorder %s18, 1
      %p36 = por %p34, %p35
      %p37 = scmp.ne.s32.totalorder %s26, %s27
      %p38 = scmp.eq.s32.totalorder %s18, 0
      %p39 = por %p37, %p38
      %p40 = scmp.ne.s32.totalorder %s26, %s27
      %p41 = scmp.eq.s32.totalorder %s19, 1
      %p42 = por %p40, %p41
      %p44 = scmp.ne.s32.totalorder %s27, %s43
      %p45 = scmp.eq.s32.totalorder %s19, 0
      %p46 = por %p44, %p45
      %s47 = ssub.s32 %s13, %s20
      %p48 = scmp.eq.s32.totalorder %s47, 0
      %s50 = sadd.s32 %s49, 1
      %s51 = scalar_select %p48, %s49, %s50
      %p54 = pneg %p48
      %p55 = scmp.eq.s32.totalorder %s13, 1
      %p56 = por %p54, %p55
      %p57 = scmp.ne.s32.totalorder %s49, %s52
      %p58 = scmp.eq.s32.totalorder %s13, 0
      %p59 = por %p57, %p58
      %p60 = scmp.ne.s32.totalorder %s49, %s52
      %p61 = scmp.eq.s32.totalorder %s18, 1
      %p62 = por %p60, %p61
      %p63 = scmp.ne.s32.totalorder %s52, %s53
      %p64 = scmp.eq.s32.totalorder %s18, 0
      %p65 = por %p63, %p64
      %p66 = scmp.ne.s32.totalorder %s52, %s53
      %p67 = scmp.eq.s32.totalorder %s19, 1
      %p68 = por %p66, %p67
      %p70 = scmp.ne.s32.totalorder %s53, %s69
      %p71 = scmp.eq.s32.totalorder %s19, 0
      %p72 = por %p70, %p71
      %p73 = scmp.le.s32.totalorder 1, %s13
      %p74 = scmp.lt.s32.totalorder %s13, 3
      %p75 = pnand %p73, %p74
      %p76 = pneg %p75
      // Predicated region
      $region9: #{tpu_custom_call.1} parent=5 // pred_check
        _
      $region10: #{tpu_custom_call.1} parent=5 // pred_check_branch
        %78 = sbr.rel (%p75) target = $region12
      $region11: #{tpu_custom_call.1} parent=5 // pred_region
        %s79 = ssub.s32 %s13, 1
      $region12: #{tpu_custom_call.1} parent=5 // pred_fallthru
        _
      %p80 = scmp.lt.s32.totalorder %s13, 2
      // Predicated region
      $region13: #{tpu_custom_call.1} parent=5 // pred_check
        %p81 = pneg %p80
      $region14: #{tpu_custom_call.1} parent=5 // pred_check_branch
        %83 = sbr.rel (%p81) target = $region16
      $region15: #{tpu_custom_call.1} parent=5 // pred_region
        // Predicated region
        $region17: #{tpu_custom_call.1} parent=15 // pred_check
          %p84 = pneg %p33
        $region18: #{tpu_custom_call.1} parent=15 // pred_check_branch
          %86 = sbr.rel (%p84) target = $region20
        $region19: #{tpu_custom_call.1} parent=15 // pred_region
          %s87 = sand.u32 %s23, 1
          %s88 = scalar_lea.sflag [#allocation3], %s87
          %s89 = sand.u32 %s23, 1
          %s90 = smul.addr %s89, 8
          %s91 = scalar_lea.vmem [#allocation2], %s90
          %s93 = ssub.s32 128, 128
          %94 = vsyncadd %s88, %s93
          %s95 = smul.addr %s13, 128
          %s96 = scalar_lea.hbm %s0, %s95
          %s98 = sshll.u32 %s91, 4
          %s99 = int_to_ptr.vmem [resolvable:$true] %s98
          %101 = dma.hbm_to_vmem [thread:$0]  %s96, 128, %s99, %s88
        $region20: #{tpu_custom_call.1} parent=15 // pred_fallthru
          _
      $region16: #{tpu_custom_call.1} parent=5 // pred_fallthru
        _
      %p102 = scmp.le.s32.totalorder 1, %s13
      %p103 = scmp.lt.s32.totalorder %s13, 3
      %p104 = pnand %p102, %p103
      %p105 = pneg %p104
      // Predicated region
      $region21: #{tpu_custom_call.1} parent=5 // pred_check
        _
      $region22: #{tpu_custom_call.1} parent=5 // pred_check_branch
        %107 = sbr.rel (%p104) target = $region24
      $region23: #{tpu_custom_call.1} parent=5 // pred_region
        %s108 = ssub.s32 %s13, 1
        %s109 = sand.u32 %s26, 1
        %s110 = scalar_lea.sflag [#allocation3], %s109
        %s111 = sand.u32 %s26, 1
        %s112 = smul.addr %s111, 8
        %s113 = scalar_lea.vmem [#allocation2], %s112
        // Predicated region
        $region25: #{tpu_custom_call.1} parent=23 // pred_check
          %p114 = pneg %p39
        $region26: #{tpu_custom_call.1} parent=23 // pred_check_branch
          %116 = sbr.rel (%p114) target = $region28
        $region27: #{tpu_custom_call.1} parent=23 // pred_region
          %117 = dma.done %s110, 128
        $region28: #{tpu_custom_call.1} parent=23 // pred_fallthru
          _
        %s118 = sand.u32 %s26, 1
        %s119 = scalar_lea.sflag [#allocation3], %s118
        %s120 = sand.u32 %s26, 1
        %s121 = smul.addr %s120, 8
        %s122 = scalar_lea.vmem [#allocation2], %s121
        %p123 = pneg %p39
        %p124 = pneg %p36
        %p125 = pneg %p65
        %p126 = pneg %p62
        %s127 = sand.u32 %s52, 1
        %s128 = scalar_lea.sflag [#allocation4], %s127
        %s129 = sand.u32 %s52, 1
        %s130 = smul.addr %s129, 8
        %s131 = scalar_lea.vmem [#allocation5], %s130
        %v132 = vld [vmem:[%s113] sm:$0xff]
        %v133 = vlaneseq
        %v134 = vand.u32 %v133, 127
        %135 = vadd.xlane.f32.xlu0 %v132
        %v136 = vpop.xlane.xlu0 %135
        %v137 = vmul.f32 %v136, 0.027777778
        %vm138 = vcmp.lt.s32.totalorder %v134, 36
        %v139 = vsub.f32 %v132, %v137
        %v140 = vsel %vm138, %v139, 0.0
        %v141 = vlaneseq
        %v142 = vshrl.u32 %v141, 7
        %v143 = vadd.s32 %v142, 8
        %v144 = vadd.s32 %v142, 16
        %v145 = vadd.s32 %v142, 24
        %v146 = vadd.s32 %v142, 32
        %v147 = vadd.s32 %v142, 40
        %v148 = vadd.s32 %v142, 48
        %v149 = vadd.s32 %v142, 56
        %v150 = vadd.s32 %v142, 64
        %v151 = vadd.s32 %v142, 72
        %v152 = vadd.s32 %v142, 80
        %v153 = vadd.s32 %v142, 88
        %v154 = vadd.s32 %v142, 96
        %v155 = vadd.s32 %v142, 104
        %v156 = vadd.s32 %v142, 112
        %v157 = vadd.s32 %v142, 120
        %vm158 = vcmp.eq.s32.totalorder %v142, %v134
        %vm159 = vcmp.eq.s32.totalorder %v143, %v134
        %vm160 = vcmp.eq.s32.totalorder %v144, %v134
        %vm161 = vcmp.eq.s32.totalorder %v145, %v134
        %vm162 = vcmp.eq.s32.totalorder %v146, %v134
        %vm163 = vcmp.eq.s32.totalorder %v147, %v134
        %vm164 = vcmp.eq.s32.totalorder %v148, %v134
        %vm165 = vcmp.eq.s32.totalorder %v149, %v134
        %vm166 = vcmp.eq.s32.totalorder %v150, %v134
        %vm167 = vcmp.eq.s32.totalorder %v151, %v134
        %vm168 = vcmp.eq.s32.totalorder %v152, %v134
        %vm169 = vcmp.eq.s32.totalorder %v153, %v134
        %vm170 = vcmp.eq.s32.totalorder %v154, %v134
        %vm171 = vcmp.eq.s32.totalorder %v155, %v134
        %vm172 = vcmp.eq.s32.totalorder %v156, %v134
        %vm173 = vcmp.eq.s32.totalorder %v157, %v134
        %vm174 = vmand %vm158, %vm138
        %vm175 = vmand %vm159, %vm138
        %vm176 = vmand %vm160, %vm138
        %vm177 = vmand %vm161, %vm138
        %vm178 = vmand %vm162, %vm138
        %vm179 = vmand %vm163, %vm138
        %vm180 = vmand %vm164, %vm138
        %vm181 = vmand %vm165, %vm138
        %vm182 = vmand %vm166, %vm138
        %vm183 = vmand %vm167, %vm138
        %vm184 = vmand %vm168, %vm138
        %vm185 = vmand %vm169, %vm138
        %vm186 = vmand %vm170, %vm138
        %vm187 = vmand %vm171, %vm138
        %vm188 = vmand %vm172, %vm138
        %vm189 = vmand %vm173, %vm138
        %v190 = vsel %vm174, 1e-05, 0.0
        %v191 = vsel %vm175, 1e-05, 0.0
        %v192 = vsel %vm176, 1e-05, 0.0
        %v193 = vsel %vm177, 1e-05, 0.0
        %v194 = vsel %vm178, 1e-05, 0.0
        %v195 = vsel %vm179, 1e-05, 0.0
        %v196 = vsel %vm180, 1e-05, 0.0
        %v197 = vsel %vm181, 1e-05, 0.0
        %v198 = vsel %vm182, 1e-05, 0.0
        %v199 = vsel %vm183, 1e-05, 0.0
        %v200 = vsel %vm184, 1e-05, 0.0
        %v201 = vsel %vm185, 1e-05, 0.0
        %v202 = vsel %vm186, 1e-05, 0.0
        %v203 = vsel %vm187, 1e-05, 0.0
        %v204 = vsel %vm188, 1e-05, 0.0
        %v205 = vsel %vm189, 1e-05, 0.0
        %206 = vxpose.xlu0.b32.start [1/16] %v140, 128
        %207 = vxpose.xlu0.b32.cont [2/16] 0.0, 128
        %208 = vxpose.xlu0.b32.cont [3/16] 0.0, 128
        %209 = vxpose.xlu0.b32.cont [4/16] 0.0, 128
        %210 = vxpose.xlu0.b32.cont [5/16] 0.0, 128
        %211 = vxpose.xlu0.b32.cont [6/16] 0.0, 128
        %212 = vxpose.xlu0.b32.cont [7/16] 0.0, 128
        %213 = vxpose.xlu0.b32.cont [8/16] 0.0, 128
        %214 = vxpose.xlu0.b32.cont [9/16] 0.0, 128
        %215 = vxpose.xlu0.b32.cont [10/16] 0.0, 128
        %216 = vxpose.xlu0.b32.cont [11/16] 0.0, 128
        %217 = vxpose.xlu0.b32.cont [12/16] 0.0, 128
        %218 = vxpose.xlu0.b32.cont [13/16] 0.0, 128
        %219 = vxpose.xlu0.b32.cont [14/16] 0.0, 128
        %220 = vxpose.xlu0.b32.cont [15/16] 0.0, 128
        %221 = vxpose.xlu0.b32.end [16/16] 0.0, 128
        %v222 = vpop.trf.xlu0
        %v223 = vpop.trf.xlu0
        %v224 = vpop.trf.xlu0
        %v225 = vpop.trf.xlu0
        %v226 = vpop.trf.xlu0
        %v227 = vpop.trf.xlu0
        %v228 = vpop.trf.xlu0
        %v229 = vpop.trf.xlu0
        %v230 = vpop.trf.xlu0
        %v231 = vpop.trf.xlu0
        %v232 = vpop.trf.xlu0
        %v233 = vpop.trf.xlu0
        %v234 = vpop.trf.xlu0
        %v235 = vpop.trf.xlu0
        %v236 = vpop.trf.xlu0
        %v237 = vpop.trf.xlu0
        %vm238 = vcmask 64512
        %v240 = vsel %vm238, %v222, 0
        %v243 = vsel %vm238, %v223, 0
        %v246 = vsel %vm238, %v224, 0
        %v249 = vsel %vm238, %v225, 0
        %v252 = vsel %vm238, %v226, 0
        %v255 = vsel %vm238, %v227, 0
        %v258 = vsel %vm238, %v228, 0
        %v261 = vsel %vm238, %v229, 0
        %v264 = vsel %vm238, %v230, 0
        %v267 = vsel %vm238, %v231, 0
        %v270 = vsel %vm238, %v232, 0
        %v273 = vsel %vm238, %v233, 0
        %v276 = vsel %vm238, %v234, 0
        %v279 = vsel %vm238, %v235, 0
        %v282 = vsel %vm238, %v236, 0
        %v285 = vsel %vm238, %v237, 0
        %287 = vmatprep.subr.mxu0 0.0
        %288 = vmatpush1.msra.mxu0 %v140
        %289 = vmatprep.subr.mxu0 0.0
        %290 = vmatpush1.msra.mxu0 0.0
        %291 = vmatprep.subr.mxu0 0.0
        %292 = vmatpush1.msra.mxu0 0.0
        %293 = vmatprep.subr.mxu0 0.0
        %294 = vmatpush1.msra.mxu0 0.0
        %295 = vmatprep.subr.mxu0 0.0
        %296 = vmatpush1.msra.mxu0 0.0
        %297 = vmatprep.subr.mxu0 0.0
        %298 = vmatpush1.msra.mxu0 0.0
        %299 = vmatprep.subr.mxu0 0.0
        %300 = vmatpush1.msra.mxu0 0.0
        %301 = vmatprep.subr.mxu0 0.0
        %302 = vmatpush1.msra.mxu0 0.0
        %303 = vmatprep.subr.mxu0 0.0
        %304 = vmatpush1.msra.mxu0 0.0
        %305 = vmatprep.subr.mxu0 0.0
        %306 = vmatpush1.msra.mxu0 0.0
        %307 = vmatprep.subr.mxu0 0.0
        %308 = vmatpush1.msra.mxu0 0.0
        %309 = vmatprep.subr.mxu0 0.0
        %310 = vmatpush1.msra.mxu0 0.0
        %311 = vmatprep.subr.mxu0 0.0
        %312 = vmatpush1.msra.mxu0 0.0
        %313 = vmatprep.subr.mxu0 0.0
        %314 = vmatpush1.msra.mxu0 0.0
        %315 = vmatprep.subr.mxu0 0.0
        %316 = vmatpush1.msra.mxu0 0.0
        %317 = vmatprep.subr.mxu0 0.0
        %318 = vmatpush1.msra.mxu0 0.0
        %319 = vmatprep.subr.mxu0 0.0
        %320 = vmatpush1.msra.mxu0 0.0
        %321 = vmatprep.subr.mxu0 0.0
        %322 = vmatpush1.msra.mxu0 0.0
        %323 = vmatprep.subr.mxu0 0.0
        %324 = vmatpush1.msra.mxu0 0.0
        %325 = vmatprep.subr.mxu0 0.0
        %326 = vmatpush1.msra.mxu0 0.0
        %327 = vmatprep.subr.mxu0 0.0
        %328 = vmatpush1.msra.mxu0 0.0
        %329 = vmatprep.subr.mxu0 0.0
        %330 = vmatpush1.msra.mxu0 0.0
        %331 = vmatprep.subr.mxu0 0.0
        %332 = vmatpush1.msra.mxu0 0.0
        %333 = vmatprep.subr.mxu0 0.0
        %334 = vmatpush1.msra.mxu0 0.0
        %335 = vmatprep.subr.mxu0 0.0
        %336 = vmatpush1.msra.mxu0 0.0
        %337 = vmatprep.subr.mxu0 0.0
        %338 = vmatpush1.msra.mxu0 0.0
        %339 = vmatprep.subr.mxu0 0.0
        %340 = vmatpush1.msra.mxu0 0.0
        %341 = vmatprep.subr.mxu0 0.0
        %342 = vmatpush1.msra.mxu0 0.0
        %343 = vmatprep.subr.mxu0 0.0
        %344 = vmatpush1.msra.mxu0 0.0
        %345 = vmatprep.subr.mxu0 0.0
        %346 = vmatpush1.msra.mxu0 0.0
        %347 = vmatprep.subr.mxu0 0.0
        %348 = vmatpush1.msra.mxu0 0.0
        %349 = vmatprep.subr.mxu0 0.0
        %350 = vmatpush1.msra.mxu0 0.0
        %351 = vmatprep.mubr.f32.mxu0 0.0
        %352 = vmatmul.mubr.f32.gmra.mrb[0].mxu0 %v240
        %v353 = vpop.f32.mrb[0].mxu0
        %v354 = vadd.f32 %v190, %v353
        %v355 = vpop.f32.mrb[0].mxu0
        %356 = vmatprep.mubr.f32.mxu0 0.0
        %357 = vmatmul.mubr.f32.gmra.mrb[0].mxu0 %v243
        %v358 = vpop.f32.mrb[0].mxu0
        %v359 = vadd.f32 %v191, %v358
        %v360 = vpop.f32.mrb[0].mxu0
        %361 = vmatprep.mubr.f32.mxu0 0.0
        %362 = vmatmul.mubr.f32.gmra.mrb[0].mxu0 %v246
        %v363 = vpop.f32.mrb[0].mxu0
        %v364 = vadd.f32 %v192, %v363
        %v365 = vpop.f32.mrb[0].mxu0
        %366 = vmatprep.mubr.f32.mxu0 0.0
        %367 = vmatmul.mubr.f32.gmra.mrb[0].mxu0 %v249
        %v368 = vpop.f32.mrb[0].mxu0
        %v369 = vadd.f32 %v193, %v368
        %v370 = vpop.f32.mrb[0].mxu0
        %371 = vmatprep.mubr.f32.mxu0 0.0
        %372 = vmatmul.mubr.f32.gmra.mrb[0].mxu0 %v252
        %v373 = vpop.f32.mrb[0].mxu0
        %v374 = vadd.f32 %v194, %v373
        %v375 = vpop.f32.mrb[0].mxu0
        %376 = vmatprep.mubr.f32.mxu0 0.0
        %377 = vmatmul.mubr.f32.gmra.mrb[0].mxu0 %v255
        %v378 = vpop.f32.mrb[0].mxu0
        %v379 = vadd.f32 %v195, %v378
        %v380 = vpop.f32.mrb[0].mxu0
        %381 = vmatprep.mubr.f32.mxu0 0.0
        %382 = vmatmul.mubr.f32.gmra.mrb[0].mxu0 %v258
        %v383 = vpop.f32.mrb[0].mxu0
        %v384 = vadd.f32 %v196, %v383
        %v385 = vpop.f32.mrb[0].mxu0
        %386 = vmatprep.mubr.f32.mxu0 0.0
        %387 = vmatmul.mubr.f32.gmra.mrb[0].mxu0 %v261
        %v388 = vpop.f32.mrb[0].mxu0
        %v389 = vadd.f32 %v197, %v388
        %v390 = vpop.f32.mrb[0].mxu0
        %391 = vmatprep.mubr.f32.mxu0 0.0
        %392 = vmatmul.mubr.f32.gmra.mrb[0].mxu0 %v264
        %v393 = vpop.f32.mrb[0].mxu0
        %v394 = vadd.f32 %v198, %v393
        %v395 = vpop.f32.mrb[0].mxu0
        %396 = vmatprep.mubr.f32.mxu0 0.0
        %397 = vmatmul.mubr.f32.gmra.mrb[0].mxu0 %v267
        %v398 = vpop.f32.mrb[0].mxu0
        %v399 = vadd.f32 %v199, %v398
        %v400 = vpop.f32.mrb[0].mxu0
        %401 = vmatprep.mubr.f32.mxu0 0.0
        %402 = vmatmul.mubr.f32.gmra.mrb[0].mxu0 %v270
        %v403 = vpop.f32.mrb[0].mxu0
        %v404 = vadd.f32 %v200, %v403
        %v405 = vpop.f32.mrb[0].mxu0
        %406 = vmatprep.mubr.f32.mxu0 0.0
        %407 = vmatmul.mubr.f32.gmra.mrb[0].mxu0 %v273
        %v408 = vpop.f32.mrb[0].mxu0
        %v409 = vadd.f32 %v201, %v408
        %v410 = vpop.f32.mrb[0].mxu0
        %411 = vmatprep.mubr.f32.mxu0 0.0
        %412 = vmatmul.mubr.f32.gmra.mrb[0].mxu0 %v276
        %v413 = vpop.f32.mrb[0].mxu0
        %v414 = vadd.f32 %v202, %v413
        %v415 = vpop.f32.mrb[0].mxu0
        %416 = vmatprep.mubr.f32.mxu0 0.0
        %417 = vmatmul.mubr.f32.gmra.mrb[0].mxu0 %v279
        %v418 = vpop.f32.mrb[0].mxu0
        %v419 = vadd.f32 %v203, %v418
        %v420 = vpop.f32.mrb[0].mxu0
        %421 = vmatprep.mubr.f32.mxu0 0.0
        %422 = vmatmul.mubr.f32.gmra.mrb[0].mxu0 %v282
        %v423 = vpop.f32.mrb[0].mxu0
        %v424 = vadd.f32 %v204, %v423
        %v425 = vpop.f32.mrb[0].mxu0
        %426 = vmatprep.mubr.f32.mxu0 0.0
        %427 = vmatmul.mubr.f32.gmra.mrb[0].mxu0 %v285
        %v428 = vpop.f32.mrb[0].mxu0
        %v429 = vadd.f32 %v205, %v428
        %v430 = vpop.f32.mrb[0].mxu0
        %431 = vdwg.mxu0
        %v432 = vmul.f32 %v354, %v354
        %v433 = vmul.f32 %v359, %v359
        %v434 = vmul.f32 %v364, %v364
        %v435 = vmul.f32 %v369, %v369
        %v436 = vmul.f32 %v374, %v374
        %v437 = vmul.f32 %v379, %v379
        %v438 = vmul.f32 %v384, %v384
        %v439 = vmul.f32 %v389, %v389
        %v440 = vmul.f32 %v394, %v394
        %v441 = vmul.f32 %v399, %v399
        %v442 = vmul.f32 %v404, %v404
        %v443 = vmul.f32 %v409, %v409
        %v444 = vmul.f32 %v414, %v414
        %v445 = vmul.f32 %v419, %v419
        %v446 = vmul.f32 %v424, %v424
        %v447 = vmul.f32 %v429, %v429
        %v448 = vadd.f32 %v432, %v433
        %v449 = vadd.f32 %v448, %v434
        %v450 = vadd.f32 %v449, %v435
        %v451 = vadd.f32 %v450, %v436
        %v452 = vadd.f32 %v451, %v437
        %v453 = vadd.f32 %v452, %v438
        %v454 = vadd.f32 %v453, %v439
        %v455 = vadd.f32 %v454, %v440
        %v456 = vadd.f32 %v455, %v441
        %v457 = vadd.f32 %v456, %v442
        %v458 = vadd.f32 %v457, %v443
        %v459 = vadd.f32 %v458, %v444
        %v460 = vadd.f32 %v459, %v445
        %v461 = vadd.f32 %v460, %v446
        %v462 = vadd.f32 %v461, %v447
        %463 = vadd.xlane.f32.xlu0 %v462
        %v464 = vpop.xlane.xlu0 %463
        %v465 = vrot.slane %v464, 4
        %v466 = vadd.f32 %v464, %v465
        %v467 = vrot.slane %v466, 2
        %v468 = vadd.f32 %v466, %v467
        %v469 = vrot.slane %v468, 1
        %v470 = vadd.f32 %v468, %v469
        %v471 = vrsqrt.pop %v470
        %v472 = vmul.f32 %v470, %v471
        %vm473 = vcmp.eq.f32.partialorder %v470, inf
        %v474 = vsel %vm473, %v470, %v472
        %vm475 = vcmp.eq.f32.partialorder %v470, 0.0
        %v476 = vand.u32 %v470, 2147483648
        %v477 = vsel %vm475, %v476, %v474
        %v478 = vsel %vm174, 1.0, 0.0
        %v479 = vsel %vm175, 1.0, 0.0
        %v480 = vsel %vm176, 1.0, 0.0
        %v481 = vsel %vm177, 1.0, 0.0
        %v482 = vsel %vm178, 1.0, 0.0
        %v483 = vsel %vm179, 1.0, 0.0
        %v484 = vsel %vm180, 1.0, 0.0
        %v485 = vsel %vm181, 1.0, 0.0
        %v486 = vsel %vm182, 1.0, 0.0
        %v487 = vsel %vm183, 1.0, 0.0
        %v488 = vsel %vm184, 1.0, 0.0
        %v489 = vsel %vm185, 1.0, 0.0
        %v490 = vsel %vm186, 1.0, 0.0
        %v491 = vsel %vm187, 1.0, 0.0
        %v492 = vsel %vm188, 1.0, 0.0
        %v493 = vsel %vm189, 1.0, 0.0
        %494 = vmatprep.subr.mxu0 0.0
        %495 = vmatpush1.msra.mxu0 %v478
        %496 = vmatprep.subr.mxu0 0.0
        %497 = vmatpush1.msra.mxu0 %v479
        %498 = vmatprep.subr.mxu0 0.0
        %499 = vmatpush1.msra.mxu0 %v480
        %500 = vmatprep.subr.mxu0 0.0
        %501 = vmatpush1.msra.mxu0 %v481
        %502 = vmatprep.subr.mxu0 0.0
        %503 = vmatpush1.msra.mxu0 %v482
        %504 = vmatprep.subr.mxu0 0.0
        %505 = vmatpush1.msra.mxu0 %v483
        %506 = vmatprep.subr.mxu0 0.0
        %507 = vmatpush1.msra.mxu0 %v484
        %508 = vmatprep.subr.mxu0 0.0
        %509 = vmatpush1.msra.mxu0 %v485
        %510 = vmatprep.subr.mxu0 0.0
        %511 = vmatpush1.msra.mxu0 %v486
        %512 = vmatprep.subr.mxu0 0.0
        %513 = vmatpush1.msra.mxu0 %v487
        %514 = vmatprep.subr.mxu0 0.0
        %515 = vmatpush1.msra.mxu0 %v488
        %516 = vmatprep.subr.mxu0 0.0
        %517 = vmatpush1.msra.mxu0 %v489
        %518 = vmatprep.subr.mxu0 0.0
        %519 = vmatpush1.msra.mxu0 %v490
        %520 = vmatprep.subr.mxu0 0.0
        %521 = vmatpush1.msra.mxu0 %v491
        %522 = vmatprep.subr.mxu0 0.0
        %523 = vmatpush1.msra.mxu0 %v492
        %524 = vmatprep.subr.mxu0 0.0
        %525 = vmatpush1.msra.mxu0 %v493
        %526 = vmatprep.subr.mxu0 0.0
        %527 = vmatpush1.msra.mxu0 0.0
        %528 = vmatprep.subr.mxu0 0.0
        %529 = vmatpush1.msra.mxu0 0.0
        %530 = vmatprep.subr.mxu0 0.0
        %531 = vmatpush1.msra.mxu0 0.0
        %532 = vmatprep.subr.mxu0 0.0
        %533 = vmatpush1.msra.mxu0 0.0
        %534 = vmatprep.subr.mxu0 0.0
        %535 = vmatpush1.msra.mxu0 0.0
        %536 = vmatprep.subr.mxu0 0.0
        %537 = vmatpush1.msra.mxu0 0.0
        %538 = vmatprep.subr.mxu0 0.0
        %539 = vmatpush1.msra.mxu0 0.0
        %540 = vmatprep.subr.mxu0 0.0
        %541 = vmatpush1.msra.mxu0 0.0
        %542 = vmatprep.subr.mxu0 0.0
        %543 = vmatpush1.msra.mxu0 0.0
        %544 = vmatprep.subr.mxu0 0.0
        %545 = vmatpush1.msra.mxu0 0.0
        %546 = vmatprep.subr.mxu0 0.0
        %547 = vmatpush1.msra.mxu0 0.0
        %548 = vmatprep.subr.mxu0 0.0
        %549 = vmatpush1.msra.mxu0 0.0
        %550 = vmatprep.subr.mxu0 0.0
        %551 = vmatpush1.msra.mxu0 0.0
        %552 = vmatprep.subr.mxu0 0.0
        %553 = vmatpush1.msra.mxu0 0.0
        %554 = vmatprep.subr.mxu0 0.0
        %555 = vmatpush1.msra.mxu0 0.0
        %556 = vmatprep.subr.mxu0 0.0
        %557 = vmatpush1.msra.mxu0 0.0
        %558 = vmatprep.mubr.f32.mxu0 0.0
        %559 = vmatmul.mubr.f32.gmra.mrb[0].mxu0 %v478
        %v560 = vpop.f32.mrb[0].mxu0
        %v561 = vadd.f32 0.0, %v560
        %v562 = vpop.f32.mrb[0].mxu0
        %563 = vmatprep.mubr.f32.mxu0 0.0
        %564 = vmatmul.mubr.f32.gmra.mrb[0].mxu0 %v479
        %v565 = vpop.f32.mrb[0].mxu0
        %v566 = vadd.f32 0.0, %v565
        %v567 = vpop.f32.mrb[0].mxu0
        %568 = vmatprep.mubr.f32.mxu0 0.0
        %569 = vmatmul.mubr.f32.gmra.mrb[0].mxu0 %v480
        %v570 = vpop.f32.mrb[0].mxu0
        %v571 = vadd.f32 0.0, %v570
        %v572 = vpop.f32.mrb[0].mxu0
        %573 = vmatprep.mubr.f32.mxu0 0.0
        %574 = vmatmul.mubr.f32.gmra.mrb[0].mxu0 %v481
        %v575 = vpop.f32.mrb[0].mxu0
        %v576 = vadd.f32 0.0, %v575
        %v577 = vpop.f32.mrb[0].mxu0
        %578 = vmatprep.mubr.f32.mxu0 0.0
        %579 = vmatmul.mubr.f32.gmra.mrb[0].mxu0 %v482
        %v580 = vpop.f32.mrb[0].mxu0
        %v581 = vadd.f32 0.0, %v580
        %v582 = vpop.f32.mrb[0].mxu0
        %583 = vmatprep.mubr.f32.mxu0 0.0
        %584 = vmatmul.mubr.f32.gmra.mrb[0].mxu0 %v483
        %v585 = vpop.f32.mrb[0].mxu0
        %v586 = vadd.f32 0.0, %v585
        %v587 = vpop.f32.mrb[0].mxu0
        %588 = vmatprep.mubr.f32.mxu0 0.0
        %589 = vmatmul.mubr.f32.gmra.mrb[0].mxu0 %v484
        %v590 = vpop.f32.mrb[0].mxu0
        %v591 = vadd.f32 0.0, %v590
        %v592 = vpop.f32.mrb[0].mxu0
        %593 = vmatprep.mubr.f32.mxu0 0.0
        %594 = vmatmul.mubr.f32.gmra.mrb[0].mxu0 %v485
        %v595 = vpop.f32.mrb[0].mxu0
        %v596 = vadd.f32 0.0, %v595
        %v597 = vpop.f32.mrb[0].mxu0
        %598 = vmatprep.mubr.f32.mxu0 0.0
        %599 = vmatmul.mubr.f32.gmra.mrb[0].mxu0 %v486
        %v600 = vpop.f32.mrb[0].mxu0
        %v601 = vadd.f32 0.0, %v600
        %v602 = vpop.f32.mrb[0].mxu0
        %603 = vmatprep.mubr.f32.mxu0 0.0
        %604 = vmatmul.mubr.f32.gmra.mrb[0].mxu0 %v487
        %v605 = vpop.f32.mrb[0].mxu0
        %v606 = vadd.f32 0.0, %v605
        %v607 = vpop.f32.mrb[0].mxu0
        %608 = vmatprep.mubr.f32.mxu0 0.0
        %609 = vmatmul.mubr.f32.gmra.mrb[0].mxu0 %v488
        %v610 = vpop.f32.mrb[0].mxu0
        %v611 = vadd.f32 0.0, %v610
        %v612 = vpop.f32.mrb[0].mxu0
        %613 = vmatprep.mubr.f32.mxu0 0.0
        %614 = vmatmul.mubr.f32.gmra.mrb[0].mxu0 %v489
        %v615 = vpop.f32.mrb[0].mxu0
        %v616 = vadd.f32 0.0, %v615
        %v617 = vpop.f32.mrb[0].mxu0
        %618 = vmatprep.mubr.f32.mxu0 0.0
        %619 = vmatmul.mubr.f32.gmra.mrb[0].mxu0 %v490
        %v620 = vpop.f32.mrb[0].mxu0
        %v621 = vadd.f32 0.0, %v620
        %v622 = vpop.f32.mrb[0].mxu0
        %623 = vmatprep.mubr.f32.mxu0 0.0
        %624 = vmatmul.mubr.f32.gmra.mrb[0].mxu0 %v491
        %v625 = vpop.f32.mrb[0].mxu0
        %v626 = vadd.f32 0.0, %v625
        %v627 = vpop.f32.mrb[0].mxu0
        %628 = vmatprep.mubr.f32.mxu0 0.0
        %629 = vmatmul.mubr.f32.gmra.mrb[0].mxu0 %v492
        %v630 = vpop.f32.mrb[0].mxu0
        %v631 = vadd.f32 0.0, %v630
        %v632 = vpop.f32.mrb[0].mxu0
        %633 = vmatprep.mubr.f32.mxu0 0.0
        %634 = vmatmul.mubr.f32.gmra.mrb[0].mxu0 %v493
        %v635 = vpop.f32.mrb[0].mxu0
        %v636 = vadd.f32 0.0, %v635
        %v637 = vpop.f32.mrb[0].mxu0
        %638 = vdwg.mxu0
        %639 = vmatprep.subr.mxu0 0.0
        %640 = vmatpush1.msra.mxu0 %v478
        %641 = vmatprep.subr.mxu0 0.0
        %642 = vmatpush1.msra.mxu0 %v479
        %643 = vmatprep.subr.mxu0 0.0
        %644 = vmatpush1.msra.mxu0 %v480
        %645 = vmatprep.subr.mxu0 0.0
        %646 = vmatpush1.msra.mxu0 %v481
        %647 = vmatprep.subr.mxu0 0.0
        %648 = vmatpush1.msra.mxu0 %v482
        %649 = vmatprep.subr.mxu0 0.0
        %650 = vmatpush1.msra.mxu0 %v483
        %651 = vmatprep.subr.mxu0 0.0
        %652 = vmatpush1.msra.mxu0 %v484
        %653 = vmatprep.subr.mxu0 0.0
        %654 = vmatpush1.msra.mxu0 %v485
        %655 = vmatprep.subr.mxu0 0.0
        %656 = vmatpush1.msra.mxu0 %v486
        %657 = vmatprep.subr.mxu0 0.0
        %658 = vmatpush1.msra.mxu0 %v487
        %659 = vmatprep.subr.mxu0 0.0
        %660 = vmatpush1.msra.mxu0 %v488
        %661 = vmatprep.subr.mxu0 0.0
        %662 = vmatpush1.msra.mxu0 %v489
        %663 = vmatprep.subr.mxu0 0.0
        %664 = vmatpush1.msra.mxu0 %v490
        %665 = vmatprep.subr.mxu0 0.0
        %666 = vmatpush1.msra.mxu0 %v491
        %667 = vmatprep.subr.mxu0 0.0
        %668 = vmatpush1.msra.mxu0 %v492
        %669 = vmatprep.subr.mxu0 0.0
        %670 = vmatpush1.msra.mxu0 %v493
        %671 = vmatprep.subr.mxu0 0.0
        %672 = vmatpush1.msra.mxu0 0.0
        %673 = vmatprep.subr.mxu0 0.0
        %674 = vmatpush1.msra.mxu0 0.0
        %675 = vmatprep.subr.mxu0 0.0
        %676 = vmatpush1.msra.mxu0 0.0
        %677 = vmatprep.subr.mxu0 0.0
        %678 = vmatpush1.msra.mxu0 0.0
        %679 = vmatprep.subr.mxu0 0.0
        %680 = vmatpush1.msra.mxu0 0.0
        %681 = vmatprep.subr.mxu0 0.0
        %682 = vmatpush1.msra.mxu0 0.0
        %683 = vmatprep.subr.mxu0 0.0
        %684 = vmatpush1.msra.mxu0 0.0
        %685 = vmatprep.subr.mxu0 0.0
        %686 = vmatpush1.msra.mxu0 0.0
        %687 = vmatprep.subr.mxu0 0.0
        %688 = vmatpush1.msra.mxu0 0.0
        %689 = vmatprep.subr.mxu0 0.0
        %690 = vmatpush1.msra.mxu0 0.0
        %691 = vmatprep.subr.mxu0 0.0
        %692 = vmatpush1.msra.mxu0 0.0
        %693 = vmatprep.subr.mxu0 0.0
        %694 = vmatpush1.msra.mxu0 0.0
        %695 = vmatprep.subr.mxu0 0.0
        %696 = vmatpush1.msra.mxu0 0.0
        %697 = vmatprep.subr.mxu0 0.0
        %698 = vmatpush1.msra.mxu0 0.0
        %699 = vmatprep.subr.mxu0 0.0
        %700 = vmatpush1.msra.mxu0 0.0
        %701 = vmatprep.subr.mxu0 0.0
        %702 = vmatpush1.msra.mxu0 0.0
        %703 = vmatprep.mubr.f32.mxu0 0.0
        %704 = vmatmul.mubr.f32.gmra.mrb[0].mxu0 %v561
        %v705 = vpop.f32.mrb[0].mxu0
        %v706 = vadd.f32 0.0, %v705
        %v707 = vpop.f32.mrb[0].mxu0
        %708 = vmatprep.mubr.f32.mxu0 0.0
        %709 = vmatmul.mubr.f32.gmra.mrb[0].mxu0 %v566
        %v710 = vpop.f32.mrb[0].mxu0
        %v711 = vadd.f32 0.0, %v710
        %v712 = vpop.f32.mrb[0].mxu0
        %713 = vmatprep.mubr.f32.mxu0 0.0
        %714 = vmatmul.mubr.f32.gmra.mrb[0].mxu0 %v571
        %v715 = vpop.f32.mrb[0].mxu0
        %v716 = vadd.f32 0.0, %v715
        %v717 = vpop.f32.mrb[0].mxu0
        %718 = vmatprep.mubr.f32.mxu0 0.0
        %719 = vmatmul.mubr.f32.gmra.mrb[0].mxu0 %v576
        %v720 = vpop.f32.mrb[0].mxu0
        %v721 = vadd.f32 0.0, %v720
        %v722 = vpop.f32.mrb[0].mxu0
        %723 = vmatprep.mubr.f32.mxu0 0.0
        %724 = vmatmul.mubr.f32.gmra.mrb[0].mxu0 %v581
        %v725 = vpop.f32.mrb[0].mxu0
        %v726 = vadd.f32 0.0, %v725
        %v727 = vpop.f32.mrb[0].mxu0
        %728 = vmatprep.mubr.f32.mxu0 0.0
        %729 = vmatmul.mubr.f32.gmra.mrb[0].mxu0 %v586
        %v730 = vpop.f32.mrb[0].mxu0
        %v731 = vadd.f32 0.0, %v730
        %v732 = vpop.f32.mrb[0].mxu0
        %733 = vmatprep.mubr.f32.mxu0 0.0
        %734 = vmatmul.mubr.f32.gmra.mrb[0].mxu0 %v591
        %v735 = vpop.f32.mrb[0].mxu0
        %v736 = vadd.f32 0.0, %v735
        %v737 = vpop.f32.mrb[0].mxu0
        %738 = vmatprep.mubr.f32.mxu0 0.0
        %739 = vmatmul.mubr.f32.gmra.mrb[0].mxu0 %v596
        %v740 = vpop.f32.mrb[0].mxu0
        %v741 = vadd.f32 0.0, %v740
        %v742 = vpop.f32.mrb[0].mxu0
        %743 = vmatprep.mubr.f32.mxu0 0.0
        %744 = vmatmul.mubr.f32.gmra.mrb[0].mxu0 %v601
        %v745 = vpop.f32.mrb[0].mxu0
        %v746 = vadd.f32 0.0, %v745
        %v747 = vpop.f32.mrb[0].mxu0
        %748 = vmatprep.mubr.f32.mxu0 0.0
        %749 = vmatmul.mubr.f32.gmra.mrb[0].mxu0 %v606
        %v750 = vpop.f32.mrb[0].mxu0
        %v751 = vadd.f32 0.0, %v750
        %v752 = vpop.f32.mrb[0].mxu0
        %753 = vmatprep.mubr.f32.mxu0 0.0
        %754 = vmatmul.mubr.f32.gmra.mrb[0].mxu0 %v611
        %v755 = vpop.f32.mrb[0].mxu0
        %v756 = vadd.f32 0.0, %v755
        %v757 = vpop.f32.mrb[0].mxu0
        %758 = vmatprep.mubr.f32.mxu0 0.0
        %759 = vmatmul.mubr.f32.gmra.mrb[0].mxu0 %v616
        %v760 = vpop.f32.mrb[0].mxu0
        %v761 = vadd.f32 0.0, %v760
        %v762 = vpop.f32.mrb[0].mxu0
        %763 = vmatprep.mubr.f32.mxu0 0.0
        %764 = vmatmul.mubr.f32.gmra.mrb[0].mxu0 %v621
        %v765 = vpop.f32.mrb[0].mxu0
        %v766 = vadd.f32 0.0, %v765
        %v767 = vpop.f32.mrb[0].mxu0
        %768 = vmatprep.mubr.f32.mxu0 0.0
        %769 = vmatmul.mubr.f32.gmra.mrb[0].mxu0 %v626
        %v770 = vpop.f32.mrb[0].mxu0
        %v771 = vadd.f32 0.0, %v770
        %v772 = vpop.f32.mrb[0].mxu0
        %773 = vmatprep.mubr.f32.mxu0 0.0
        %774 = vmatmul.mubr.f32.gmra.mrb[0].mxu0 %v631
        %v775 = vpop.f32.mrb[0].mxu0
        %v776 = vadd.f32 0.0, %v775
        %v777 = vpop.f32.mrb[0].mxu0
        %778 = vmatprep.mubr.f32.mxu0 0.0
        %779 = vmatmul.mubr.f32.gmra.mrb[0].mxu0 %v636
        %v780 = vpop.f32.mrb[0].mxu0
        %v781 = vadd.f32 0.0, %v780
        %v782 = vpop.f32.mrb[0].mxu0
        %783 = vdwg.mxu0
        %v784 = vmul.f32 %v478, 1.5
        %v785 = vmul.f32 %v479, 1.5
        %v786 = vmul.f32 %v480, 1.5
        %v787 = vmul.f32 %v481, 1.5
        %v788 = vmul.f32 %v482, 1.5
        %v789 = vmul.f32 %v483, 1.5
        %v790 = vmul.f32 %v484, 1.5
        %v791 = vmul.f32 %v485, 1.5
        %v792 = vmul.f32 %v486, 1.5
        %v793 = vmul.f32 %v487, 1.5
        %v794 = vmul.f32 %v488, 1.5
        %v795 = vmul.f32 %v489, 1.5
        %v796 = vmul.f32 %v490, 1.5
        %v797 = vmul.f32 %v491, 1.5
        %v798 = vmul.f32 %v492, 1.5
        %v799 = vmul.f32 %v493, 1.5
        %800 = vmatprep.subr.mxu0 0.0
        %801 = vmatpush1.msra.mxu0 %v354
        %802 = vmatprep.subr.mxu0 0.0
        %803 = vmatpush1.msra.mxu0 %v359
        %804 = vmatprep.subr.mxu0 0.0
        %805 = vmatpush1.msra.mxu0 %v364
        %806 = vmatprep.subr.mxu0 0.0
        %807 = vmatpush1.msra.mxu0 %v369
        %808 = vmatprep.subr.mxu0 0.0
        %809 = vmatpush1.msra.mxu0 %v374
        %810 = vmatprep.subr.mxu0 0.0
        %811 = vmatpush1.msra.mxu0 %v379
        %812 = vmatprep.subr.mxu0 0.0
        %813 = vmatpush1.msra.mxu0 %v384
        %814 = vmatprep.subr.mxu0 0.0
        %815 = vmatpush1.msra.mxu0 %v389
        %816 = vmatprep.subr.mxu0 0.0
        %817 = vmatpush1.msra.mxu0 %v394
        %818 = vmatprep.subr.mxu0 0.0
        %819 = vmatpush1.msra.mxu0 %v399
        %820 = vmatprep.subr.mxu0 0.0
        %821 = vmatpush1.msra.mxu0 %v404
        %822 = vmatprep.subr.mxu0 0.0
        %823 = vmatpush1.msra.mxu0 %v409
        %824 = vmatprep.subr.mxu0 0.0
        %825 = vmatpush1.msra.mxu0 %v414
        %826 = vmatprep.subr.mxu0 0.0
        %827 = vmatpush1.msra.mxu0 %v419
        %828 = vmatprep.subr.mxu0 0.0
        %829 = vmatpush1.msra.mxu0 %v424
        %830 = vmatprep.subr.mxu0 0.0
        %831 = vmatpush1.msra.mxu0 %v429
        %832 = vmatprep.subr.mxu0 0.0
        %833 = vmatpush1.msra.mxu0 0.0
        %834 = vmatprep.subr.mxu0 0.0
        %835 = vmatpush1.msra.mxu0 0.0
        %836 = vmatprep.subr.mxu0 0.0
        %837 = vmatpush1.msra.mxu0 0.0
        %838 = vmatprep.subr.mxu0 0.0
        %839 = vmatpush1.msra.mxu0 0.0
        %840 = vmatprep.subr.mxu0 0.0
        %841 = vmatpush1.msra.mxu0 0.0
        %842 = vmatprep.subr.mxu0 0.0
        %843 = vmatpush1.msra.mxu0 0.0
        %844 = vmatprep.subr.mxu0 0.0
        %845 = vmatpush1.msra.mxu0 0.0
        %846 = vmatprep.subr.mxu0 0.0
        %847 = vmatpush1.msra.mxu0 0.0
        %848 = vmatprep.subr.mxu0 0.0
        %849 = vmatpush1.msra.mxu0 0.0
        %850 = vmatprep.subr.mxu0 0.0
        %851 = vmatpush1.msra.mxu0 0.0
        %852 = vmatprep.subr.mxu0 0.0
        %853 = vmatpush1.msra.mxu0 0.0
        %854 = vmatprep.subr.mxu0 0.0
        %855 = vmatpush1.msra.mxu0 0.0
        %856 = vmatprep.subr.mxu0 0.0
        %857 = vmatpush1.msra.mxu0 0.0
        %858 = vmatprep.subr.mxu0 0.0
        %859 = vmatpush1.msra.mxu0 0.0
        %860 = vmatprep.subr.mxu0 0.0
        %861 = vmatpush1.msra.mxu0 0.0
        %862 = vmatprep.subr.mxu0 0.0
        %863 = vmatpush1.msra.mxu0 0.0
        %864 = vmatprep.mubr.f32.mxu0 0.0
        %865 = vmatmul.mubr.f32.gmra.mrb[0].mxu0 %v706
        %v866 = vpop.f32.mrb[0].mxu0
        %v867 = vadd.f32 0.0, %v866
        %v868 = vpop.f32.mrb[0].mxu0
        %869 = vmatprep.mubr.f32.mxu0 0.0
        %870 = vmatmul.mubr.f32.gmra.mrb[0].mxu0 %v711
        %v871 = vpop.f32.mrb[0].mxu0
        %v872 = vadd.f32 0.0, %v871
        %v873 = vpop.f32.mrb[0].mxu0
        %874 = vmatprep.mubr.f32.mxu0 0.0
        %875 = vmatmul.mubr.f32.gmra.mrb[0].mxu0 %v716
        %v876 = vpop.f32.mrb[0].mxu0
        %v877 = vadd.f32 0.0, %v876
        %v878 = vpop.f32.mrb[0].mxu0
        %879 = vmatprep.mubr.f32.mxu0 0.0
        %880 = vmatmul.mubr.f32.gmra.mrb[0].mxu0 %v721
        %v881 = vpop.f32.mrb[0].mxu0
        %v882 = vadd.f32 0.0, %v881
        %v883 = vpop.f32.mrb[0].mxu0
        %884 = vmatprep.mubr.f32.mxu0 0.0
        %885 = vmatmul.mubr.f32.gmra.mrb[0].mxu0 %v726
        %v886 = vpop.f32.mrb[0].mxu0
        %v887 = vadd.f32 0.0, %v886
        %v888 = vpop.f32.mrb[0].mxu0
        %889 = vmatprep.mubr.f32.mxu0 0.0
        %890 = vmatmul.mubr.f32.gmra.mrb[0].mxu0 %v731
        %v891 = vpop.f32.mrb[0].mxu0
        %v892 = vadd.f32 0.0, %v891
        %v893 = vpop.f32.mrb[0].mxu0
        %894 = vmatprep.mubr.f32.mxu0 0.0
        %895 = vmatmul.mubr.f32.gmra.mrb[0].mxu0 %v736
        %v896 = vpop.f32.mrb[0].mxu0
        %v897 = vadd.f32 0.0, %v896
        %v898 = vpop.f32.mrb[0].mxu0
        %899 = vmatprep.mubr.f32.mxu0 0.0
        %900 = vmatmul.mubr.f32.gmra.mrb[0].mxu0 %v741
        %v901 = vpop.f32.mrb[0].mxu0
        %v902 = vadd.f32 0.0, %v901
        %v903 = vpop.f32.mrb[0].mxu0
        %904 = vmatprep.mubr.f32.mxu0 0.0
        %905 = vmatmul.mubr.f32.gmra.mrb[0].mxu0 %v746
        %v906 = vpop.f32.mrb[0].mxu0
        %v907 = vadd.f32 0.0, %v906
        %v908 = vpop.f32.mrb[0].mxu0
        %909 = vmatprep.mubr.f32.mxu0 0.0
        %910 = vmatmul.mubr.f32.gmra.mrb[0].mxu0 %v751
        %v911 = vpop.f32.mrb[0].mxu0
        %v912 = vadd.f32 0.0, %v911
        %v913 = vpop.f32.mrb[0].mxu0
        %914 = vmatprep.mubr.f32.mxu0 0.0
        %915 = vmatmul.mubr.f32.gmra.mrb[0].mxu0 %v756
        %v916 = vpop.f32.mrb[0].mxu0
        %v917 = vadd.f32 0.0, %v916
        %v918 = vpop.f32.mrb[0].mxu0
        %919 = vmatprep.mubr.f32.mxu0 0.0
        %920 = vmatmul.mubr.f32.gmra.mrb[0].mxu0 %v761
        %v921 = vpop.f32.mrb[0].mxu0
        %v922 = vadd.f32 0.0, %v921
        %v923 = vpop.f32.mrb[0].mxu0
        %924 = vmatprep.mubr.f32.mxu0 0.0
        %925 = vmatmul.mubr.f32.gmra.mrb[0].mxu0 %v766
        %v926 = vpop.f32.mrb[0].mxu0
        %v927 = vadd.f32 0.0, %v926
        %v928 = vpop.f32.mrb[0].mxu0
        %929 = vmatprep.mubr.f32.mxu0 0.0
        %930 = vmatmul.mubr.f32.gmra.mrb[0].mxu0 %v771
        %v931 = vpop.f32.mrb[0].mxu0
        %v932 = vadd.f32 0.0, %v931
        %v933 = vpop.f32.mrb[0].mxu0
        %934 = vmatprep.mubr.f32.mxu0 0.0
        %935 = vmatmul.mubr.f32.gmra.mrb[0].mxu0 %v776
        %v936 = vpop.f32.mrb[0].mxu0
        %v937 = vadd.f32 0.0, %v936
        %v938 = vpop.f32.mrb[0].mxu0
        %939 = vmatprep.mubr.f32.mxu0 0.0
        %940 = vmatmul.mubr.f32.gmra.mrb[0].mxu0 %v781
        %v941 = vpop.f32.mrb[0].mxu0
        %v942 = vadd.f32 0.0, %v941
        %v943 = vpop.f32.mrb[0].mxu0
        %944 = vdwg.mxu0
        %v945 = vmul.f32 %v867, 0.5
        %v946 = vmul.f32 %v872, 0.5
        %v947 = vmul.f32 %v877, 0.5
        %v948 = vmul.f32 %v882, 0.5
        %v949 = vmul.f32 %v887, 0.5
        %v950 = vmul.f32 %v892, 0.5
        %v951 = vmul.f32 %v897, 0.5
        %v952 = vmul.f32 %v902, 0.5
        %v953 = vmul.f32 %v907, 0.5
        %v954 = vmul.f32 %v912, 0.5
        %v955 = vmul.f32 %v917, 0.5
        %v956 = vmul.f32 %v922, 0.5
        %v957 = vmul.f32 %v927, 0.5
        %v958 = vmul.f32 %v932, 0.5
        %v959 = vmul.f32 %v937, 0.5
        %v960 = vmul.f32 %v942, 0.5
        %v961 = vsub.f32 %v784, %v945
        %v962 = vsub.f32 %v785, %v946
        %v963 = vsub.f32 %v786, %v947
        %v964 = vsub.f32 %v787, %v948
        %v965 = vsub.f32 %v788, %v949
        %v966 = vsub.f32 %v789, %v950
        %v967 = vsub.f32 %v790, %v951
        %v968 = vsub.f32 %v791, %v952
        %v969 = vsub.f32 %v792, %v953
        %v970 = vsub.f32 %v793, %v954
        %v971 = vsub.f32 %v794, %v955
        %v972 = vsub.f32 %v795, %v956
        %v973 = vsub.f32 %v796, %v957
        %v974 = vsub.f32 %v797, %v958
        %v975 = vsub.f32 %v798, %v959
        %v976 = vsub.f32 %v799, %v960
        %977 = vmatprep.subr.mxu0 0.0
        %978 = vmatpush1.msra.mxu0 %v961
        %979 = vmatprep.subr.mxu0 0.0
        %980 = vmatpush1.msra.mxu0 %v962
        %981 = vmatprep.subr.mxu0 0.0
        %982 = vmatpush1.msra.mxu0 %v963
        %983 = vmatprep.subr.mxu0 0.0
        %984 = vmatpush1.msra.mxu0 %v964
        %985 = vmatprep.subr.mxu0 0.0
        %986 = vmatpush1.msra.mxu0 %v965
        %987 = vmatprep.subr.mxu0 0.0
        %988 = vmatpush1.msra.mxu0 %v966
        %989 = vmatprep.subr.mxu0 0.0
        %990 = vmatpush1.msra.mxu0 %v967
        %991 = vmatprep.subr.mxu0 0.0
        %992 = vmatpush1.msra.mxu0 %v968
        %993 = vmatprep.subr.mxu0 0.0
        %994 = vmatpush1.msra.mxu0 %v969
        %995 = vmatprep.subr.mxu0 0.0
        %996 = vmatpush1.msra.mxu0 %v970
        %997 = vmatprep.subr.mxu0 0.0
        %998 = vmatpush1.msra.mxu0 %v971
        %999 = vmatprep.subr.mxu0 0.0
        %1000 = vmatpush1.msra.mxu0 %v972
        %1001 = vmatprep.subr.mxu0 0.0
        %1002 = vmatpush1.msra.mxu0 %v973
        %1003 = vmatprep.subr.mxu0 0.0
        %1004 = vmatpush1.msra.mxu0 %v974
        %1005 = vmatprep.subr.mxu0 0.0
        %1006 = vmatpush1.msra.mxu0 %v975
        %1007 = vmatprep.subr.mxu0 0.0
        %1008 = vmatpush1.msra.mxu0 %v976
        %1009 = vmatprep.subr.mxu0 0.0
        %1010 = vmatpush1.msra.mxu0 0.0
        %1011 = vmatprep.subr.mxu0 0.0
        %1012 = vmatpush1.msra.mxu0 0.0
        %1013 = vmatprep.subr.mxu0 0.0
        %1014 = vmatpush1.msra.mxu0 0.0
        %1015 = vmatprep.subr.mxu0 0.0
        %1016 = vmatpush1.msra.mxu0 0.0
        %1017 = vmatprep.subr.mxu0 0.0
        %1018 = vmatpush1.msra.mxu0 0.0
        %1019 = vmatprep.subr.mxu0 0.0
        %1020 = vmatpush1.msra.mxu0 0.0
        %1021 = vmatprep.subr.mxu0 0.0
        %1022 = vmatpush1.msra.mxu0 0.0
        %1023 = vmatprep.subr.mxu0 0.0
        %1024 = vmatpush1.msra.mxu0 0.0
        %1025 = vmatprep.subr.mxu0 0.0
        %1026 = vmatpush1.msra.mxu0 0.0
        %1027 = vmatprep.subr.mxu0 0.0
        %1028 = vmatpush1.msra.mxu0 0.0
        %1029 = vmatprep.subr.mxu0 0.0
        %1030 = vmatpush1.msra.mxu0 0.0
        %1031 = vmatprep.subr.mxu0 0.0
        %1032 = vmatpush1.msra.mxu0 0.0
        %1033 = vmatprep.subr.mxu0 0.0
        %1034 = vmatpush1.msra.mxu0 0.0
        %1035 = vmatprep.subr.mxu0 0.0
        %1036 = vmatpush1.msra.mxu0 0.0
        %1037 = vmatprep.subr.mxu0 0.0
        %1038 = vmatpush1.msra.mxu0 0.0
        %1039 = vmatprep.subr.mxu0 0.0
        %1040 = vmatpush1.msra.mxu0 0.0
        %1041 = vmatprep.mubr.f32.mxu0 0.0
        %1042 = vmatmul.mubr.f32.gmra.mrb[0].mxu0 %v961
        %v1043 = vpop.f32.mrb[0].mxu0
        %v1044 = vadd.f32 0.0, %v1043
        %v1045 = vpop.f32.mrb[0].mxu0
        %1046 = vmatprep.mubr.f32.mxu0 0.0
        %1047 = vmatmul.mubr.f32.gmra.mrb[0].mxu0 %v962
        %v1048 = vpop.f32.mrb[0].mxu0
        %v1049 = vadd.f32 0.0, %v1048
        %v1050 = vpop.f32.mrb[0].mxu0
        %1051 = vmatprep.mubr.f32.mxu0 0.0
        %1052 = vmatmul.mubr.f32.gmra.mrb[0].mxu0 %v963
        %v1053 = vpop.f32.mrb[0].mxu0
        %v1054 = vadd.f32 0.0, %v1053
        %v1055 = vpop.f32.mrb[0].mxu0
        %1056 = vmatprep.mubr.f32.mxu0 0.0
        %1057 = vmatmul.mubr.f32.gmra.mrb[0].mxu0 %v964
        %v1058 = vpop.f32.mrb[0].mxu0
        %v1059 = vadd.f32 0.0, %v1058
        %v1060 = vpop.f32.mrb[0].mxu0
        %1061 = vmatprep.mubr.f32.mxu0 0.0
        %1062 = vmatmul.mubr.f32.gmra.mrb[0].mxu0 %v965
        %v1063 = vpop.f32.mrb[0].mxu0
        %v1064 = vadd.f32 0.0, %v1063
        %v1065 = vpop.f32.mrb[0].mxu0
        %1066 = vmatprep.mubr.f32.mxu0 0.0
        %1067 = vmatmul.mubr.f32.gmra.mrb[0].mxu0 %v966
        %v1068 = vpop.f32.mrb[0].mxu0
        %v1069 = vadd.f32 0.0, %v1068
        %v1070 = vpop.f32.mrb[0].mxu0
        %1071 = vmatprep.mubr.f32.mxu0 0.0
        %1072 = vmatmul.mubr.f32.gmra.mrb[0].mxu0 %v967
        %v1073 = vpop.f32.mrb[0].mxu0
        %v1074 = vadd.f32 0.0, %v1073
        %v1075 = vpop.f32.mrb[0].mxu0
        %1076 = vmatprep.mubr.f32.mxu0 0.0
        %1077 = vmatmul.mubr.f32.gmra.mrb[0].mxu0 %v968
        %v1078 = vpop.f32.mrb[0].mxu0
        %v1079 = vadd.f32 0.0, %v1078
        %v1080 = vpop.f32.mrb[0].mxu0
        %1081 = vmatprep.mubr.f32.mxu0 0.0
        %1082 = vmatmul.mubr.f32.gmra.mrb[0].mxu0 %v969
        %v1083 = vpop.f32.mrb[0].mxu0
        %v1084 = vadd.f32 0.0, %v1083
        %v1085 = vpop.f32.mrb[0].mxu0
        %1086 = vmatprep.mubr.f32.mxu0 0.0
        %1087 = vmatmul.mubr.f32.gmra.mrb[0].mxu0 %v970
        %v1088 = vpop.f32.mrb[0].mxu0
        %v1089 = vadd.f32 0.0, %v1088
        %v1090 = vpop.f32.mrb[0].mxu0
        %1091 = vmatprep.mubr.f32.mxu0 0.0
        %1092 = vmatmul.mubr.f32.gmra.mrb[0].mxu0 %v971
        %v1093 = vpop.f32.mrb[0].mxu0
        %v1094 = vadd.f32 0.0, %v1093
        %v1095 = vpop.f32.mrb[0].mxu0
        %1096 = vmatprep.mubr.f32.mxu0 0.0
        %1097 = vmatmul.mubr.f32.gmra.mrb[0].mxu0 %v972
        %v1098 = vpop.f32.mrb[0].mxu0
        %v1099 = vadd.f32 0.0, %v1098
        %v1100 = vpop.f32.mrb[0].mxu0
        %1101 = vmatprep.mubr.f32.mxu0 0.0
        %1102 = vmatmul.mubr.f32.gmra.mrb[0].mxu0 %v973
        %v1103 = vpop.f32.mrb[0].mxu0
        %v1104 = vadd.f32 0.0, %v1103
        %v1105 = vpop.f32.mrb[0].mxu0
        %1106 = vmatprep.mubr.f32.mxu0 0.0
        %1107 = vmatmul.mubr.f32.gmra.mrb[0].mxu0 %v974
        %v1108 = vpop.f32.mrb[0].mxu0
        %v1109 = vadd.f32 0.0, %v1108
        %v1110 = vpop.f32.mrb[0].mxu0
        %1111 = vmatprep.mubr.f32.mxu0 0.0
        %1112 = vmatmul.mubr.f32.gmra.mrb[0].mxu0 %v975
        %v1113 = vpop.f32.mrb[0].mxu0
        %v1114 = vadd.f32 0.0, %v1113
        %v1115 = vpop.f32.mrb[0].mxu0
        %1116 = vmatprep.mubr.f32.mxu0 0.0
        %1117 = vmatmul.mubr.f32.gmra.mrb[0].mxu0 %v976
        %v1118 = vpop.f32.mrb[0].mxu0
        %v1119 = vadd.f32 0.0, %v1118
        %v1120 = vpop.f32.mrb[0].mxu0
        %1121 = vdwg.mxu0
        %1122 = vmatprep.subr.mxu0 0.0
        %1123 = vmatpush1.msra.mxu0 %v961
        %1124 = vmatprep.subr.mxu0 0.0
        %1125 = vmatpush1.msra.mxu0 %v962
        %1126 = vmatprep.subr.mxu0 0.0
        %1127 = vmatpush1.msra.mxu0 %v963
        %1128 = vmatprep.subr.mxu0 0.0
        %1129 = vmatpush1.msra.mxu0 %v964
        %1130 = vmatprep.subr.mxu0 0.0
        %1131 = vmatpush1.msra.mxu0 %v965
        %1132 = vmatprep.subr.mxu0 0.0
        %1133 = vmatpush1.msra.mxu0 %v966
        %1134 = vmatprep.subr.mxu0 0.0
        %1135 = vmatpush1.msra.mxu0 %v967
        %1136 = vmatprep.subr.mxu0 0.0
        %1137 = vmatpush1.msra.mxu0 %v968
        %1138 = vmatprep.subr.mxu0 0.0
        %1139 = vmatpush1.msra.mxu0 %v969
        %1140 = vmatprep.subr.mxu0 0.0
        %1141 = vmatpush1.msra.mxu0 %v970
        %1142 = vmatprep.subr.mxu0 0.0
        %1143 = vmatpush1.msra.mxu0 %v971
        %1144 = vmatprep.subr.mxu0 0.0
        %1145 = vmatpush1.msra.mxu0 %v972
        %1146 = vmatprep.subr.mxu0 0.0
        %1147 = vmatpush1.msra.mxu0 %v973
        %1148 = vmatprep.subr.mxu0 0.0
        %1149 = vmatpush1.msra.mxu0 %v974
        %1150 = vmatprep.subr.mxu0 0.0
        %1151 = vmatpush1.msra.mxu0 %v975
        %1152 = vmatprep.subr.mxu0 0.0
        %1153 = vmatpush1.msra.mxu0 %v976
        %1154 = vmatprep.subr.mxu0 0.0
        %1155 = vmatpush1.msra.mxu0 0.0
        %1156 = vmatprep.subr.mxu0 0.0
        %1157 = vmatpush1.msra.mxu0 0.0
        %1158 = vmatprep.subr.mxu0 0.0
        %1159 = vmatpush1.msra.mxu0 0.0
        %1160 = vmatprep.subr.mxu0 0.0
        %1161 = vmatpush1.msra.mxu0 0.0
        %1162 = vmatprep.subr.mxu0 0.0
        %1163 = vmatpush1.msra.mxu0 0.0
        %1164 = vmatprep.subr.mxu0 0.0
        %1165 = vmatpush1.msra.mxu0 0.0
        %1166 = vmatprep.subr.mxu0 0.0
        %1167 = vmatpush1.msra.mxu0 0.0
        %1168 = vmatprep.subr.mxu0 0.0
        %1169 = vmatpush1.msra.mxu0 0.0
        %1170 = vmatprep.subr.mxu0 0.0
        %1171 = vmatpush1.msra.mxu0 0.0
        %1172 = vmatprep.subr.mxu0 0.0
        %1173 = vmatpush1.msra.mxu0 0.0
        %1174 = vmatprep.subr.mxu0 0.0
        %1175 = vmatpush1.msra.mxu0 0.0
        %1176 = vmatprep.subr.mxu0 0.0
        %1177 = vmatpush1.msra.mxu0 0.0
        %1178 = vmatprep.subr.mxu0 0.0
        %1179 = vmatpush1.msra.mxu0 0.0
        %1180 = vmatprep.subr.mxu0 0.0
        %1181 = vmatpush1.msra.mxu0 0.0
        %1182 = vmatprep.subr.mxu0 0.0
        %1183 = vmatpush1.msra.mxu0 0.0
        %1184 = vmatprep.subr.mxu0 0.0
        %1185 = vmatpush1.msra.mxu0 0.0
        %1186 = vmatprep.mubr.f32.mxu0 0.0
        %1187 = vmatmul.mubr.f32.gmra.mrb[0].mxu0 %v1044
        %v1188 = vpop.f32.mrb[0].mxu0
        %v1189 = vadd.f32 0.0, %v1188
        %v1190 = vpop.f32.mrb[0].mxu0
        %1191 = vmatprep.mubr.f32.mxu0 0.0
        %1192 = vmatmul.mubr.f32.gmra.mrb[0].mxu0 %v1049
        %v1193 = vpop.f32.mrb[0].mxu0
        %v1194 = vadd.f32 0.0, %v1193
        %v1195 = vpop.f32.mrb[0].mxu0
        %1196 = vmatprep.mubr.f32.mxu0 0.0
        %1197 = vmatmul.mubr.f32.gmra.mrb[0].mxu0 %v1054
        %v1198 = vpop.f32.mrb[0].mxu0
        %v1199 = vadd.f32 0.0, %v1198
        %v1200 = vpop.f32.mrb[0].mxu0
        %1201 = vmatprep.mubr.f32.mxu0 0.0
        %1202 = vmatmul.mubr.f32.gmra.mrb[0].mxu0 %v1059
        %v1203 = vpop.f32.mrb[0].mxu0
        %v1204 = vadd.f32 0.0, %v1203
        %v1205 = vpop.f32.mrb[0].mxu0
        %1206 = vmatprep.mubr.f32.mxu0 0.0
        %1207 = vmatmul.mubr.f32.gmra.mrb[0].mxu0 %v1064
        %v1208 = vpop.f32.mrb[0].mxu0
        %v1209 = vadd.f32 0.0, %v1208
        %v1210 = vpop.f32.mrb[0].mxu0
        %1211 = vmatprep.mubr.f32.mxu0 0.0
        %1212 = vmatmul.mubr.f32.gmra.mrb[0].mxu0 %v1069
        %v1213 = vpop.f32.mrb[0].mxu0
        %v1214 = vadd.f32 0.0, %v1213
        %v1215 = vpop.f32.mrb[0].mxu0
        %1216 = vmatprep.mubr.f32.mxu0 0.0
        %1217 = vmatmul.mubr.f32.gmra.mrb[0].mxu0 %v1074
        %v1218 = vpop.f32.mrb[0].mxu0
        %v1219 = vadd.f32 0.0, %v1218
        %v1220 = vpop.f32.mrb[0].mxu0
        %1221 = vmatprep.mubr.f32.mxu0 0.0
        %1222 = vmatmul.mubr.f32.gmra.mrb[0].mxu0 %v1079
        %v1223 = vpop.f32.mrb[0].mxu0
        %v1224 = vadd.f32 0.0, %v1223
        %v1225 = vpop.f32.mrb[0].mxu0
        %1226 = vmatprep.mubr.f32.mxu0 0.0
        %1227 = vmatmul.mubr.f32.gmra.mrb[0].mxu0 %v1084
        %v1228 = vpop.f32.mrb[0].mxu0
        %v1229 = vadd.f32 0.0, %v1228
        %v1230 = vpop.f32.mrb[0].mxu0
        %1231 = vmatprep.mubr.f32.mxu0 0.0
        %1232 = vmatmul.mubr.f32.gmra.mrb[0].mxu0 %v1089
        %v1233 = vpop.f32.mrb[0].mxu0
        %v1234 = vadd.f32 0.0, %v1233
        %v1235 = vpop.f32.mrb[0].mxu0
        %1236 = vmatprep.mubr.f32.mxu0 0.0
        %1237 = vmatmul.mubr.f32.gmra.mrb[0].mxu0 %v1094
        %v1238 = vpop.f32.mrb[0].mxu0
        %v1239 = vadd.f32 0.0, %v1238
        %v1240 = vpop.f32.mrb[0].mxu0
        %1241 = vmatprep.mubr.f32.mxu0 0.0
        %1242 = vmatmul.mubr.f32.gmra.mrb[0].mxu0 %v1099
        %v1243 = vpop.f32.mrb[0].mxu0
        %v1244 = vadd.f32 0.0, %v1243
        %v1245 = vpop.f32.mrb[0].mxu0
        %1246 = vmatprep.mubr.f32.mxu0 0.0
        %1247 = vmatmul.mubr.f32.gmra.mrb[0].mxu0 %v1104
        %v1248 = vpop.f32.mrb[0].mxu0
        %v1249 = vadd.f32 0.0, %v1248
        %v1250 = vpop.f32.mrb[0].mxu0
        %1251 = vmatprep.mubr.f32.mxu0 0.0
        %1252 = vmatmul.mubr.f32.gmra.mrb[0].mxu0 %v1109
        %v1253 = vpop.f32.mrb[0].mxu0
        %v1254 = vadd.f32 0.0, %v1253
        %v1255 = vpop.f32.mrb[0].mxu0
        %1256 = vmatprep.mubr.f32.mxu0 0.0
        %1257 = vmatmul.mubr.f32.gmra.mrb[0].mxu0 %v1114
        %v1258 = vpop.f32.mrb[0].mxu0
        %v1259 = vadd.f32 0.0, %v1258
        %v1260 = vpop.f32.mrb[0].mxu0
        %1261 = vmatprep.mubr.f32.mxu0 0.0
        %1262 = vmatmul.mubr.f32.gmra.mrb[0].mxu0 %v1119
        %v1263 = vpop.f32.mrb[0].mxu0
        %v1264 = vadd.f32 0.0, %v1263
        %v1265 = vpop.f32.mrb[0].mxu0
        %1266 = vdwg.mxu0
        %v1267 = vmul.f32 %v961, 1.5
        %v1268 = vmul.f32 %v962, 1.5
        %v1269 = vmul.f32 %v963, 1.5
        %v1270 = vmul.f32 %v964, 1.5
        %v1271 = vmul.f32 %v965, 1.5
        %v1272 = vmul.f32 %v966, 1.5
        %v1273 = vmul.f32 %v967, 1.5
        %v1274 = vmul.f32 %v968, 1.5
        %v1275 = vmul.f32 %v969, 1.5
        %v1276 = vmul.f32 %v970, 1.5
        %v1277 = vmul.f32 %v971, 1.5
        %v1278 = vmul.f32 %v972, 1.5
        %v1279 = vmul.f32 %v973, 1.5
        %v1280 = vmul.f32 %v974, 1.5
        %v1281 = vmul.f32 %v975, 1.5
        %v1282 = vmul.f32 %v976, 1.5
        %1283 = vmatprep.subr.mxu0 0.0
        %1284 = vmatpush1.msra.mxu0 %v354
        %1285 = vmatprep.subr.mxu0 0.0
        %1286 = vmatpush1.msra.mxu0 %v359
        %1287 = vmatprep.subr.mxu0 0.0
        %1288 = vmatpush1.msra.mxu0 %v364
        %1289 = vmatprep.subr.mxu0 0.0
        %1290 = vmatpush1.msra.mxu0 %v369
        %1291 = vmatprep.subr.mxu0 0.0
        %1292 = vmatpush1.msra.mxu0 %v374
        %1293 = vmatprep.subr.mxu0 0.0
        %1294 = vmatpush1.msra.mxu0 %v379
        %1295 = vmatprep.subr.mxu0 0.0
        %1296 = vmatpush1.msra.mxu0 %v384
        %1297 = vmatprep.subr.mxu0 0.0
        %1298 = vmatpush1.msra.mxu0 %v389
        %1299 = vmatprep.subr.mxu0 0.0
        %1300 = vmatpush1.msra.mxu0 %v394
        %1301 = vmatprep.subr.mxu0 0.0
        %1302 = vmatpush1.msra.mxu0 %v399
        %1303 = vmatprep.subr.mxu0 0.0
        %1304 = vmatpush1.msra.mxu0 %v404
        %1305 = vmatprep.subr.mxu0 0.0
        %1306 = vmatpush1.msra.mxu0 %v409
        %1307 = vmatprep.subr.mxu0 0.0
        %1308 = vmatpush1.msra.mxu0 %v414
        %1309 = vmatprep.subr.mxu0 0.0
        %1310 = vmatpush1.msra.mxu0 %v419
        %1311 = vmatprep.subr.mxu0 0.0
        %1312 = vmatpush1.msra.mxu0 %v424
        %1313 = vmatprep.subr.mxu0 0.0
        %1314 = vmatpush1.msra.mxu0 %v429
        %1315 = vmatprep.subr.mxu0 0.0
        %1316 = vmatpush1.msra.mxu0 0.0
        %1317 = vmatprep.subr.mxu0 0.0
        %1318 = vmatpush1.msra.mxu0 0.0
        %1319 = vmatprep.subr.mxu0 0.0
        %1320 = vmatpush1.msra.mxu0 0.0
        %1321 = vmatprep.subr.mxu0 0.0
        %1322 = vmatpush1.msra.mxu0 0.0
        %1323 = vmatprep.subr.mxu0 0.0
        %1324 = vmatpush1.msra.mxu0 0.0
        %1325 = vmatprep.subr.mxu0 0.0
        %1326 = vmatpush1.msra.mxu0 0.0
        %1327 = vmatprep.subr.mxu0 0.0
        %1328 = vmatpush1.msra.mxu0 0.0
        %1329 = vmatprep.subr.mxu0 0.0
        %1330 = vmatpush1.msra.mxu0 0.0
        %1331 = vmatprep.subr.mxu0 0.0
        %1332 = vmatpush1.msra.mxu0 0.0
        %1333 = vmatprep.subr.mxu0 0.0
        %1334 = vmatpush1.msra.mxu0 0.0
        %1335 = vmatprep.subr.mxu0 0.0
        %1336 = vmatpush1.msra.mxu0 0.0
        %1337 = vmatprep.subr.mxu0 0.0
        %1338 = vmatpush1.msra.mxu0 0.0
        %1339 = vmatprep.subr.mxu0 0.0
        %1340 = vmatpush1.msra.mxu0 0.0
        %1341 = vmatprep.subr.mxu0 0.0
        %1342 = vmatpush1.msra.mxu0 0.0
        %1343 = vmatprep.subr.mxu0 0.0
        %1344 = vmatpush1.msra.mxu0 0.0
        %1345 = vmatprep.subr.mxu0 0.0
        %1346 = vmatpush1.msra.mxu0 0.0
        %1347 = vmatprep.mubr.f32.mxu0 0.0
        %1348 = vmatmul.mubr.f32.gmra.mrb[0].mxu0 %v1189
        %v1349 = vpop.f32.mrb[0].mxu0
        %v1350 = vadd.f32 0.0, %v1349
        %v1351 = vpop.f32.mrb[0].mxu0
        %1352 = vmatprep.mubr.f32.mxu0 0.0
        %1353 = vmatmul.mubr.f32.gmra.mrb[0].mxu0 %v1194
        %v1354 = vpop.f32.mrb[0].mxu0
        %v1355 = vadd.f32 0.0, %v1354
        %v1356 = vpop.f32.mrb[0].mxu0
        %1357 = vmatprep.mubr.f32.mxu0 0.0
        %1358 = vmatmul.mubr.f32.gmra.mrb[0].mxu0 %v1199
        %v1359 = vpop.f32.mrb[0].mxu0
        %v1360 = vadd.f32 0.0, %v1359
        %v1361 = vpop.f32.mrb[0].mxu0
        %1362 = vmatprep.mubr.f32.mxu0 0.0
        %1363 = vmatmul.mubr.f32.gmra.mrb[0].mxu0 %v1204
        %v1364 = vpop.f32.mrb[0].mxu0
        %v1365 = vadd.f32 0.0, %v1364
        %v1366 = vpop.f32.mrb[0].mxu0
        %1367 = vmatprep.mubr.f32.mxu0 0.0
        %1368 = vmatmul.mubr.f32.gmra.mrb[0].mxu0 %v1209
        %v1369 = vpop.f32.mrb[0].mxu0
        %v1370 = vadd.f32 0.0, %v1369
        %v1371 = vpop.f32.mrb[0].mxu0
        %1372 = vmatprep.mubr.f32.mxu0 0.0
        %1373 = vmatmul.mubr.f32.gmra.mrb[0].mxu0 %v1214
        %v1374 = vpop.f32.mrb[0].mxu0
        %v1375 = vadd.f32 0.0, %v1374
        %v1376 = vpop.f32.mrb[0].mxu0
        %1377 = vmatprep.mubr.f32.mxu0 0.0
        %1378 = vmatmul.mubr.f32.gmra.mrb[0].mxu0 %v1219
        %v1379 = vpop.f32.mrb[0].mxu0
        %v1380 = vadd.f32 0.0, %v1379
        %v1381 = vpop.f32.mrb[0].mxu0
        %1382 = vmatprep.mubr.f32.mxu0 0.0
        %1383 = vmatmul.mubr.f32.gmra.mrb[0].mxu0 %v1224
        %v1384 = vpop.f32.mrb[0].mxu0
        %v1385 = vadd.f32 0.0, %v1384
        %v1386 = vpop.f32.mrb[0].mxu0
        %1387 = vmatprep.mubr.f32.mxu0 0.0
        %1388 = vmatmul.mubr.f32.gmra.mrb[0].mxu0 %v1229
        %v1389 = vpop.f32.mrb[0].mxu0
        %v1390 = vadd.f32 0.0, %v1389
        %v1391 = vpop.f32.mrb[0].mxu0
        %1392 = vmatprep.mubr.f32.mxu0 0.0
        %1393 = vmatmul.mubr.f32.gmra.mrb[0].mxu0 %v1234
        %v1394 = vpop.f32.mrb[0].mxu0
        %v1395 = vadd.f32 0.0, %v1394
        %v1396 = vpop.f32.mrb[0].mxu0
        %1397 = vmatprep.mubr.f32.mxu0 0.0
        %1398 = vmatmul.mubr.f32.gmra.mrb[0].mxu0 %v1239
        %v1399 = vpop.f32.mrb[0].mxu0
        %v1400 = vadd.f32 0.0, %v1399
        %v1401 = vpop.f32.mrb[0].mxu0
        %1402 = vmatprep.mubr.f32.mxu0 0.0
        %1403 = vmatmul.mubr.f32.gmra.mrb[0].mxu0 %v1244
        %v1404 = vpop.f32.mrb[0].mxu0
        %v1405 = vadd.f32 0.0, %v1404
        %v1406 = vpop.f32.mrb[0].mxu0
        %1407 = vmatprep.mubr.f32.mxu0 0.0
        %1408 = vmatmul.mubr.f32.gmra.mrb[0].mxu0 %v1249
        %v1409 = vpop.f32.mrb[0].mxu0
        %v1410 = vadd.f32 0.0, %v1409
        %v1411 = vpop.f32.mrb[0].mxu0
        %1412 = vmatprep.mubr.f32.mxu0 0.0
        %1413 = vmatmul.mubr.f32.gmra.mrb[0].mxu0 %v1254
        %v1414 = vpop.f32.mrb[0].mxu0
        %v1415 = vadd.f32 0.0, %v1414
        %v1416 = vpop.f32.mrb[0].mxu0
        %1417 = vmatprep.mubr.f32.mxu0 0.0
        %1418 = vmatmul.mubr.f32.gmra.mrb[0].mxu0 %v1259
        %v1419 = vpop.f32.mrb[0].mxu0
        %v1420 = vadd.f32 0.0, %v1419
        %v1421 = vpop.f32.mrb[0].mxu0
        %1422 = vmatprep.mubr.f32.mxu0 0.0
        %1423 = vmatmul.mubr.f32.gmra.mrb[0].mxu0 %v1264
        %v1424 = vpop.f32.mrb[0].mxu0
        %v1425 = vadd.f32 0.0, %v1424
        %v1426 = vpop.f32.mrb[0].mxu0
        %1427 = vdwg.mxu0
        %v1428 = vmul.f32 %v1350, 0.5
        %v1429 = vmul.f32 %v1355, 0.5
        %v1430 = vmul.f32 %v1360, 0.5
        %v1431 = vmul.f32 %v1365, 0.5
        %v1432 = vmul.f32 %v1370, 0.5
        %v1433 = vmul.f32 %v1375, 0.5
        %v1434 = vmul.f32 %v1380, 0.5
        %v1435 = vmul.f32 %v1385, 0.5
        %v1436 = vmul.f32 %v1390, 0.5
        %v1437 = vmul.f32 %v1395, 0.5
        %v1438 = vmul.f32 %v1400, 0.5
        %v1439 = vmul.f32 %v1405, 0.5
        %v1440 = vmul.f32 %v1410, 0.5
        %v1441 = vmul.f32 %v1415, 0.5
        %v1442 = vmul.f32 %v1420, 0.5
        %v1443 = vmul.f32 %v1425, 0.5
        %v1444 = vsub.f32 %v1267, %v1428
        %v1445 = vsub.f32 %v1268, %v1429
        %v1446 = vsub.f32 %v1269, %v1430
        %v1447 = vsub.f32 %v1270, %v1431
        %v1448 = vsub.f32 %v1271, %v1432
        %v1449 = vsub.f32 %v1272, %v1433
        %v1450 = vsub.f32 %v1273, %v1434
        %v1451 = vsub.f32 %v1274, %v1435
        %v1452 = vsub.f32 %v1275, %v1436
        %v1453 = vsub.f32 %v1276, %v1437
        %v1454 = vsub.f32 %v1277, %v1438
        %v1455 = vsub.f32 %v1278, %v1439
        %v1456 = vsub.f32 %v1279, %v1440
        %v1457 = vsub.f32 %v1280, %v1441
        %v1458 = vsub.f32 %v1281, %v1442
        %v1459 = vsub.f32 %v1282, %v1443
        %1460 = vmatprep.subr.mxu0 0.0
        %1461 = vmatpush1.msra.mxu0 %v1444
        %1462 = vmatprep.subr.mxu0 0.0
        %1463 = vmatpush1.msra.mxu0 %v1445
        %1464 = vmatprep.subr.mxu0 0.0
        %1465 = vmatpush1.msra.mxu0 %v1446
        %1466 = vmatprep.subr.mxu0 0.0
        %1467 = vmatpush1.msra.mxu0 %v1447
        %1468 = vmatprep.subr.mxu0 0.0
        %1469 = vmatpush1.msra.mxu0 %v1448
        %1470 = vmatprep.subr.mxu0 0.0
        %1471 = vmatpush1.msra.mxu0 %v1449
        %1472 = vmatprep.subr.mxu0 0.0
        %1473 = vmatpush1.msra.mxu0 %v1450
        %1474 = vmatprep.subr.mxu0 0.0
        %1475 = vmatpush1.msra.mxu0 %v1451
        %1476 = vmatprep.subr.mxu0 0.0
        %1477 = vmatpush1.msra.mxu0 %v1452
        %1478 = vmatprep.subr.mxu0 0.0
        %1479 = vmatpush1.msra.mxu0 %v1453
        %1480 = vmatprep.subr.mxu0 0.0
        %1481 = vmatpush1.msra.mxu0 %v1454
        %1482 = vmatprep.subr.mxu0 0.0
        %1483 = vmatpush1.msra.mxu0 %v1455
        %1484 = vmatprep.subr.mxu0 0.0
        %1485 = vmatpush1.msra.mxu0 %v1456
        %1486 = vmatprep.subr.mxu0 0.0
        %1487 = vmatpush1.msra.mxu0 %v1457
        %1488 = vmatprep.subr.mxu0 0.0
        %1489 = vmatpush1.msra.mxu0 %v1458
        %1490 = vmatprep.subr.mxu0 0.0
        %1491 = vmatpush1.msra.mxu0 %v1459
        %1492 = vmatprep.subr.mxu0 0.0
        %1493 = vmatpush1.msra.mxu0 0.0
        %1494 = vmatprep.subr.mxu0 0.0
        %1495 = vmatpush1.msra.mxu0 0.0
        %1496 = vmatprep.subr.mxu0 0.0
        %1497 = vmatpush1.msra.mxu0 0.0
        %1498 = vmatprep.subr.mxu0 0.0
        %1499 = vmatpush1.msra.mxu0 0.0
        %1500 = vmatprep.subr.mxu0 0.0
        %1501 = vmatpush1.msra.mxu0 0.0
        %1502 = vmatprep.subr.mxu0 0.0
        %1503 = vmatpush1.msra.mxu0 0.0
        %1504 = vmatprep.subr.mxu0 0.0
        %1505 = vmatpush1.msra.mxu0 0.0
        %1506 = vmatprep.subr.mxu0 0.0
        %1507 = vmatpush1.msra.mxu0 0.0
        %1508 = vmatprep.subr.mxu0 0.0
        %1509 = vmatpush1.msra.mxu0 0.0
        %1510 = vmatprep.subr.mxu0 0.0
        %1511 = vmatpush1.msra.mxu0 0.0
        %1512 = vmatprep.subr.mxu0 0.0
        %1513 = vmatpush1.msra.mxu0 0.0
        %1514 = vmatprep.subr.mxu0 0.0
        %1515 = vmatpush1.msra.mxu0 0.0
        %1516 = vmatprep.subr.mxu0 0.0
        %1517 = vmatpush1.msra.mxu0 0.0
        %1518 = vmatprep.subr.mxu0 0.0
        %1519 = vmatpush1.msra.mxu0 0.0
        %1520 = vmatprep.subr.mxu0 0.0
        %1521 = vmatpush1.msra.mxu0 0.0
        %1522 = vmatprep.subr.mxu0 0.0
        %1523 = vmatpush1.msra.mxu0 0.0
        %1524 = vmatprep.mubr.f32.mxu0 0.0
        %1525 = vmatmul.mubr.f32.gmra.mrb[0].mxu0 %v1444
        %v1526 = vpop.f32.mrb[0].mxu0
        %v1527 = vadd.f32 0.0, %v1526
        %v1528 = vpop.f32.mrb[0].mxu0
        %1529 = vmatprep.mubr.f32.mxu0 0.0
        %1530 = vmatmul.mubr.f32.gmra.mrb[0].mxu0 %v1445
        %v1531 = vpop.f32.mrb[0].mxu0
        %v1532 = vadd.f32 0.0, %v1531
        %v1533 = vpop.f32.mrb[0].mxu0
        %1534 = vmatprep.mubr.f32.mxu0 0.0
        %1535 = vmatmul.mubr.f32.gmra.mrb[0].mxu0 %v1446
        %v1536 = vpop.f32.mrb[0].mxu0
        %v1537 = vadd.f32 0.0, %v1536
        %v1538 = vpop.f32.mrb[0].mxu0
        %1539 = vmatprep.mubr.f32.mxu0 0.0
        %1540 = vmatmul.mubr.f32.gmra.mrb[0].mxu0 %v1447
        %v1541 = vpop.f32.mrb[0].mxu0
        %v1542 = vadd.f32 0.0, %v1541
        %v1543 = vpop.f32.mrb[0].mxu0
        %1544 = vmatprep.mubr.f32.mxu0 0.0
        %1545 = vmatmul.mubr.f32.gmra.mrb[0].mxu0 %v1448
        %v1546 = vpop.f32.mrb[0].mxu0
        %v1547 = vadd.f32 0.0, %v1546
        %v1548 = vpop.f32.mrb[0].mxu0
        %1549 = vmatprep.mubr.f32.mxu0 0.0
        %1550 = vmatmul.mubr.f32.gmra.mrb[0].mxu0 %v1449
        %v1551 = vpop.f32.mrb[0].mxu0
        %v1552 = vadd.f32 0.0, %v1551
        %v1553 = vpop.f32.mrb[0].mxu0
        %1554 = vmatprep.mubr.f32.mxu0 0.0
        %1555 = vmatmul.mubr.f32.gmra.mrb[0].mxu0 %v1450
        %v1556 = vpop.f32.mrb[0].mxu0
        %v1557 = vadd.f32 0.0, %v1556
        %v1558 = vpop.f32.mrb[0].mxu0
        %1559 = vmatprep.mubr.f32.mxu0 0.0
        %1560 = vmatmul.mubr.f32.gmra.mrb[0].mxu0 %v1451
        %v1561 = vpop.f32.mrb[0].mxu0
        %v1562 = vadd.f32 0.0, %v1561
        %v1563 = vpop.f32.mrb[0].mxu0
        %1564 = vmatprep.mubr.f32.mxu0 0.0
        %1565 = vmatmul.mubr.f32.gmra.mrb[0].mxu0 %v1452
        %v1566 = vpop.f32.mrb[0].mxu0
        %v1567 = vadd.f32 0.0, %v1566
        %v1568 = vpop.f32.mrb[0].mxu0
        %1569 = vmatprep.mubr.f32.mxu0 0.0
        %1570 = vmatmul.mubr.f32.gmra.mrb[0].mxu0 %v1453
        %v1571 = vpop.f32.mrb[0].mxu0
        %v1572 = vadd.f32 0.0, %v1571
        %v1573 = vpop.f32.mrb[0].mxu0
        %1574 = vmatprep.mubr.f32.mxu0 0.0
        %1575 = vmatmul.mubr.f32.gmra.mrb[0].mxu0 %v1454
        %v1576 = vpop.f32.mrb[0].mxu0
        %v1577 = vadd.f32 0.0, %v1576
        %v1578 = vpop.f32.mrb[0].mxu0
        %1579 = vmatprep.mubr.f32.mxu0 0.0
        %1580 = vmatmul.mubr.f32.gmra.mrb[0].mxu0 %v1455
        %v1581 = vpop.f32.mrb[0].mxu0
        %v1582 = vadd.f32 0.0, %v1581
        %v1583 = vpop.f32.mrb[0].mxu0
        %1584 = vmatprep.mubr.f32.mxu0 0.0
        %1585 = vmatmul.mubr.f32.gmra.mrb[0].mxu0 %v1456
        %v1586 = vpop.f32.mrb[0].mxu0
        %v1587 = vadd.f32 0.0, %v1586
        %v1588 = vpop.f32.mrb[0].mxu0
        %1589 = vmatprep.mubr.f32.mxu0 0.0
        %1590 = vmatmul.mubr.f32.gmra.mrb[0].mxu0 %v1457
        %v1591 = vpop.f32.mrb[0].mxu0
        %v1592 = vadd.f32 0.0, %v1591
        %v1593 = vpop.f32.mrb[0].mxu0
        %1594 = vmatprep.mubr.f32.mxu0 0.0
        %1595 = vmatmul.mubr.f32.gmra.mrb[0].mxu0 %v1458
        %v1596 = vpop.f32.mrb[0].mxu0
        %v1597 = vadd.f32 0.0, %v1596
        %v1598 = vpop.f32.mrb[0].mxu0
        %1599 = vmatprep.mubr.f32.mxu0 0.0
        %1600 = vmatmul.mubr.f32.gmra.mrb[0].mxu0 %v1459
        %v1601 = vpop.f32.mrb[0].mxu0
        %v1602 = vadd.f32 0.0, %v1601
        %v1603 = vpop.f32.mrb[0].mxu0
        %1604 = vdwg.mxu0
        %1605 = vmatprep.subr.mxu0 0.0
        %1606 = vmatpush1.msra.mxu0 %v1444
        %1607 = vmatprep.subr.mxu0 0.0
        %1608 = vmatpush1.msra.mxu0 %v1445
        %1609 = vmatprep.subr.mxu0 0.0
        %1610 = vmatpush1.msra.mxu0 %v1446
        %1611 = vmatprep.subr.mxu0 0.0
        %1612 = vmatpush1.msra.mxu0 %v1447
        %1613 = vmatprep.subr.mxu0 0.0
        %1614 = vmatpush1.msra.mxu0 %v1448
        %1615 = vmatprep.subr.mxu0 0.0
        %1616 = vmatpush1.msra.mxu0 %v1449
        %1617 = vmatprep.subr.mxu0 0.0
        %1618 = vmatpush1.msra.mxu0 %v1450
        %1619 = vmatprep.subr.mxu0 0.0
        %1620 = vmatpush1.msra.mxu0 %v1451
        %1621 = vmatprep.subr.mxu0 0.0
        %1622 = vmatpush1.msra.mxu0 %v1452
        %1623 = vmatprep.subr.mxu0 0.0
        %1624 = vmatpush1.msra.mxu0 %v1453
        %1625 = vmatprep.subr.mxu0 0.0
        %1626 = vmatpush1.msra.mxu0 %v1454
        %1627 = vmatprep.subr.mxu0 0.0
        %1628 = vmatpush1.msra.mxu0 %v1455
        %1629 = vmatprep.subr.mxu0 0.0
        %1630 = vmatpush1.msra.mxu0 %v1456
        %1631 = vmatprep.subr.mxu0 0.0
        %1632 = vmatpush1.msra.mxu0 %v1457
        %1633 = vmatprep.subr.mxu0 0.0
        %1634 = vmatpush1.msra.mxu0 %v1458
        %1635 = vmatprep.subr.mxu0 0.0
        %1636 = vmatpush1.msra.mxu0 %v1459
        %1637 = vmatprep.subr.mxu0 0.0
        %1638 = vmatpush1.msra.mxu0 0.0
        %1639 = vmatprep.subr.mxu0 0.0
        %1640 = vmatpush1.msra.mxu0 0.0
        %1641 = vmatprep.subr.mxu0 0.0
        %1642 = vmatpush1.msra.mxu0 0.0
        %1643 = vmatprep.subr.mxu0 0.0
        %1644 = vmatpush1.msra.mxu0 0.0
        %1645 = vmatprep.subr.mxu0 0.0
        %1646 = vmatpush1.msra.mxu0 0.0
        %1647 = vmatprep.subr.mxu0 0.0
        %1648 = vmatpush1.msra.mxu0 0.0
        %1649 = vmatprep.subr.mxu0 0.0
        %1650 = vmatpush1.msra.mxu0 0.0
        %1651 = vmatprep.subr.mxu0 0.0
        %1652 = vmatpush1.msra.mxu0 0.0
        %1653 = vmatprep.subr.mxu0 0.0
        %1654 = vmatpush1.msra.mxu0 0.0
        %1655 = vmatprep.subr.mxu0 0.0
        %1656 = vmatpush1.msra.mxu0 0.0
        %1657 = vmatprep.subr.mxu0 0.0
        %1658 = vmatpush1.msra.mxu0 0.0
        %1659 = vmatprep.subr.mxu0 0.0
        %1660 = vmatpush1.msra.mxu0 0.0
        %1661 = vmatprep.subr.mxu0 0.0
        %1662 = vmatpush1.msra.mxu0 0.0
        %1663 = vmatprep.subr.mxu0 0.0
        %1664 = vmatpush1.msra.mxu0 0.0
        %1665 = vmatprep.subr.mxu0 0.0
        %1666 = vmatpush1.msra.mxu0 0.0
        %1667 = vmatprep.subr.mxu0 0.0
        %1668 = vmatpush1.msra.mxu0 0.0
        %1669 = vmatprep.mubr.f32.mxu0 0.0
        %1670 = vmatmul.mubr.f32.gmra.mrb[0].mxu0 %v1527
        %v1671 = vpop.f32.mrb[0].mxu0
        %v1672 = vadd.f32 0.0, %v1671
        %v1673 = vpop.f32.mrb[0].mxu0
        %1674 = vmatprep.mubr.f32.mxu0 0.0
        %1675 = vmatmul.mubr.f32.gmra.mrb[0].mxu0 %v1532
        %v1676 = vpop.f32.mrb[0].mxu0
        %v1677 = vadd.f32 0.0, %v1676
        %v1678 = vpop.f32.mrb[0].mxu0
        %1679 = vmatprep.mubr.f32.mxu0 0.0
        %1680 = vmatmul.mubr.f32.gmra.mrb[0].mxu0 %v1537
        %v1681 = vpop.f32.mrb[0].mxu0
        %v1682 = vadd.f32 0.0, %v1681
        %v1683 = vpop.f32.mrb[0].mxu0
        %1684 = vmatprep.mubr.f32.mxu0 0.0
        %1685 = vmatmul.mubr.f32.gmra.mrb[0].mxu0 %v1542
        %v1686 = vpop.f32.mrb[0].mxu0
        %v1687 = vadd.f32 0.0, %v1686
        %v1688 = vpop.f32.mrb[0].mxu0
        %1689 = vmatprep.mubr.f32.mxu0 0.0
        %1690 = vmatmul.mubr.f32.gmra.mrb[0].mxu0 %v1547
        %v1691 = vpop.f32.mrb[0].mxu0
        %v1692 = vadd.f32 0.0, %v1691
        %v1693 = vpop.f32.mrb[0].mxu0
        %1694 = vmatprep.mubr.f32.mxu0 0.0
        %1695 = vmatmul.mubr.f32.gmra.mrb[0].mxu0 %v1552
        %v1696 = vpop.f32.mrb[0].mxu0
        %v1697 = vadd.f32 0.0, %v1696
        %v1698 = vpop.f32.mrb[0].mxu0
        %1699 = vmatprep.mubr.f32.mxu0 0.0
        %1700 = vmatmul.mubr.f32.gmra.mrb[0].mxu0 %v1557
        %v1701 = vpop.f32.mrb[0].mxu0
        %v1702 = vadd.f32 0.0, %v1701
        %v1703 = vpop.f32.mrb[0].mxu0
        %1704 = vmatprep.mubr.f32.mxu0 0.0
        %1705 = vmatmul.mubr.f32.gmra.mrb[0].mxu0 %v1562
        %v1706 = vpop.f32.mrb[0].mxu0
        %v1707 = vadd.f32 0.0, %v1706
        %v1708 = vpop.f32.mrb[0].mxu0
        %1709 = vmatprep.mubr.f32.mxu0 0.0
        %1710 = vmatmul.mubr.f32.gmra.mrb[0].mxu0 %v1567
        %v1711 = vpop.f32.mrb[0].mxu0
        %v1712 = vadd.f32 0.0, %v1711
        %v1713 = vpop.f32.mrb[0].mxu0
        %1714 = vmatprep.mubr.f32.mxu0 0.0
        %1715 = vmatmul.mubr.f32.gmra.mrb[0].mxu0 %v1572
        %v1716 = vpop.f32.mrb[0].mxu0
        %v1717 = vadd.f32 0.0, %v1716
        %v1718 = vpop.f32.mrb[0].mxu0
        %1719 = vmatprep.mubr.f32.mxu0 0.0
        %1720 = vmatmul.mubr.f32.gmra.mrb[0].mxu0 %v1577
        %v1721 = vpop.f32.mrb[0].mxu0
        %v1722 = vadd.f32 0.0, %v1721
        %v1723 = vpop.f32.mrb[0].mxu0
        %1724 = vmatprep.mubr.f32.mxu0 0.0
        %1725 = vmatmul.mubr.f32.gmra.mrb[0].mxu0 %v1582
        %v1726 = vpop.f32.mrb[0].mxu0
        %v1727 = vadd.f32 0.0, %v1726
        %v1728 = vpop.f32.mrb[0].mxu0
        %1729 = vmatprep.mubr.f32.mxu0 0.0
        %1730 = vmatmul.mubr.f32.gmra.mrb[0].mxu0 %v1587
        %v1731 = vpop.f32.mrb[0].mxu0
        %v1732 = vadd.f32 0.0, %v1731
        %v1733 = vpop.f32.mrb[0].mxu0
        %1734 = vmatprep.mubr.f32.mxu0 0.0
        %1735 = vmatmul.mubr.f32.gmra.mrb[0].mxu0 %v1592
        %v1736 = vpop.f32.mrb[0].mxu0
        %v1737 = vadd.f32 0.0, %v1736
        %v1738 = vpop.f32.mrb[0].mxu0
        %1739 = vmatprep.mubr.f32.mxu0 0.0
        %1740 = vmatmul.mubr.f32.gmra.mrb[0].mxu0 %v1597
        %v1741 = vpop.f32.mrb[0].mxu0
        %v1742 = vadd.f32 0.0, %v1741
        %v1743 = vpop.f32.mrb[0].mxu0
        %1744 = vmatprep.mubr.f32.mxu0 0.0
        %1745 = vmatmul.mubr.f32.gmra.mrb[0].mxu0 %v1602
        %v1746 = vpop.f32.mrb[0].mxu0
        %v1747 = vadd.f32 0.0, %v1746
        %v1748 = vpop.f32.mrb[0].mxu0
        %1749 = vdwg.mxu0
        %v1750 = vmul.f32 %v1444, 1.5
        %v1751 = vmul.f32 %v1445, 1.5
        %v1752 = vmul.f32 %v1446, 1.5
        %v1753 = vmul.f32 %v1447, 1.5
        %v1754 = vmul.f32 %v1448, 1.5
        %v1755 = vmul.f32 %v1449, 1.5
        %v1756 = vmul.f32 %v1450, 1.5
        %v1757 = vmul.f32 %v1451, 1.5
        %v1758 = vmul.f32 %v1452, 1.5
        %v1759 = vmul.f32 %v1453, 1.5
        %v1760 = vmul.f32 %v1454, 1.5
        %v1761 = vmul.f32 %v1455, 1.5
        %v1762 = vmul.f32 %v1456, 1.5
        %v1763 = vmul.f32 %v1457, 1.5
        %v1764 = vmul.f32 %v1458, 1.5
        %v1765 = vmul.f32 %v1459, 1.5
        %1766 = vmatprep.subr.mxu0 0.0
        %1767 = vmatpush1.msra.mxu0 %v354
        %1768 = vmatprep.subr.mxu0 0.0
        %1769 = vmatpush1.msra.mxu0 %v359
        %1770 = vmatprep.subr.mxu0 0.0
        %1771 = vmatpush1.msra.mxu0 %v364
        %1772 = vmatprep.subr.mxu0 0.0
        %1773 = vmatpush1.msra.mxu0 %v369
        %1774 = vmatprep.subr.mxu0 0.0
        %1775 = vmatpush1.msra.mxu0 %v374
        %1776 = vmatprep.subr.mxu0 0.0
        %1777 = vmatpush1.msra.mxu0 %v379
        %1778 = vmatprep.subr.mxu0 0.0
        %1779 = vmatpush1.msra.mxu0 %v384
        %1780 = vmatprep.subr.mxu0 0.0
        %1781 = vmatpush1.msra.mxu0 %v389
        %1782 = vmatprep.subr.mxu0 0.0
        %1783 = vmatpush1.msra.mxu0 %v394
        %1784 = vmatprep.subr.mxu0 0.0
        %1785 = vmatpush1.msra.mxu0 %v399
        %1786 = vmatprep.subr.mxu0 0.0
        %1787 = vmatpush1.msra.mxu0 %v404
        %1788 = vmatprep.subr.mxu0 0.0
        %1789 = vmatpush1.msra.mxu0 %v409
        %1790 = vmatprep.subr.mxu0 0.0
        %1791 = vmatpush1.msra.mxu0 %v414
        %1792 = vmatprep.subr.mxu0 0.0
        %1793 = vmatpush1.msra.mxu0 %v419
        %1794 = vmatprep.subr.mxu0 0.0
        %1795 = vmatpush1.msra.mxu0 %v424
        %1796 = vmatprep.subr.mxu0 0.0
        %1797 = vmatpush1.msra.mxu0 %v429
        %1798 = vmatprep.subr.mxu0 0.0
        %1799 = vmatpush1.msra.mxu0 0.0
        %1800 = vmatprep.subr.mxu0 0.0
        %1801 = vmatpush1.msra.mxu0 0.0
        %1802 = vmatprep.subr.mxu0 0.0
        %1803 = vmatpush1.msra.mxu0 0.0
        %1804 = vmatprep.subr.mxu0 0.0
        %1805 = vmatpush1.msra.mxu0 0.0
        %1806 = vmatprep.subr.mxu0 0.0
        %1807 = vmatpush1.msra.mxu0 0.0
        %1808 = vmatprep.subr.mxu0 0.0
        %1809 = vmatpush1.msra.mxu0 0.0
        %1810 = vmatprep.subr.mxu0 0.0
        %1811 = vmatpush1.msra.mxu0 0.0
        %1812 = vmatprep.subr.mxu0 0.0
        %1813 = vmatpush1.msra.mxu0 0.0
        %1814 = vmatprep.subr.mxu0 0.0
        %1815 = vmatpush1.msra.mxu0 0.0
        %1816 = vmatprep.subr.mxu0 0.0
        %1817 = vmatpush1.msra.mxu0 0.0
        %1818 = vmatprep.subr.mxu0 0.0
        %1819 = vmatpush1.msra.mxu0 0.0
        %1820 = vmatprep.subr.mxu0 0.0
        %1821 = vmatpush1.msra.mxu0 0.0
        %1822 = vmatprep.subr.mxu0 0.0
        %1823 = vmatpush1.msra.mxu0 0.0
        %1824 = vmatprep.subr.mxu0 0.0
        %1825 = vmatpush1.msra.mxu0 0.0
        %1826 = vmatprep.subr.mxu0 0.0
        %1827 = vmatpush1.msra.mxu0 0.0
        %1828 = vmatprep.subr.mxu0 0.0
        %1829 = vmatpush1.msra.mxu0 0.0
        %1830 = vmatprep.mubr.f32.mxu0 0.0
        %1831 = vmatmul.mubr.f32.gmra.mrb[0].mxu0 %v1672
        %v1832 = vpop.f32.mrb[0].mxu0
        %v1833 = vadd.f32 0.0, %v1832
        %v1834 = vpop.f32.mrb[0].mxu0
        %1835 = vmatprep.mubr.f32.mxu0 0.0
        %1836 = vmatmul.mubr.f32.gmra.mrb[0].mxu0 %v1677
        %v1837 = vpop.f32.mrb[0].mxu0
        %v1838 = vadd.f32 0.0, %v1837
        %v1839 = vpop.f32.mrb[0].mxu0
        %1840 = vmatprep.mubr.f32.mxu0 0.0
        %1841 = vmatmul.mubr.f32.gmra.mrb[0].mxu0 %v1682
        %v1842 = vpop.f32.mrb[0].mxu0
        %v1843 = vadd.f32 0.0, %v1842
        %v1844 = vpop.f32.mrb[0].mxu0
        %1845 = vmatprep.mubr.f32.mxu0 0.0
        %1846 = vmatmul.mubr.f32.gmra.mrb[0].mxu0 %v1687
        %v1847 = vpop.f32.mrb[0].mxu0
        %v1848 = vadd.f32 0.0, %v1847
        %v1849 = vpop.f32.mrb[0].mxu0
        %1850 = vmatprep.mubr.f32.mxu0 0.0
        %1851 = vmatmul.mubr.f32.gmra.mrb[0].mxu0 %v1692
        %v1852 = vpop.f32.mrb[0].mxu0
        %v1853 = vadd.f32 0.0, %v1852
        %v1854 = vpop.f32.mrb[0].mxu0
        %1855 = vmatprep.mubr.f32.mxu0 0.0
        %1856 = vmatmul.mubr.f32.gmra.mrb[0].mxu0 %v1697
        %v1857 = vpop.f32.mrb[0].mxu0
        %v1858 = vadd.f32 0.0, %v1857
        %v1859 = vpop.f32.mrb[0].mxu0
        %1860 = vmatprep.mubr.f32.mxu0 0.0
        %1861 = vmatmul.mubr.f32.gmra.mrb[0].mxu0 %v1702
        %v1862 = vpop.f32.mrb[0].mxu0
        %v1863 = vadd.f32 0.0, %v1862
        %v1864 = vpop.f32.mrb[0].mxu0
        %1865 = vmatprep.mubr.f32.mxu0 0.0
        %1866 = vmatmul.mubr.f32.gmra.mrb[0].mxu0 %v1707
        %v1867 = vpop.f32.mrb[0].mxu0
        %v1868 = vadd.f32 0.0, %v1867
        %v1869 = vpop.f32.mrb[0].mxu0
        %1870 = vmatprep.mubr.f32.mxu0 0.0
        %1871 = vmatmul.mubr.f32.gmra.mrb[0].mxu0 %v1712
        %v1872 = vpop.f32.mrb[0].mxu0
        %v1873 = vadd.f32 0.0, %v1872
        %v1874 = vpop.f32.mrb[0].mxu0
        %1875 = vmatprep.mubr.f32.mxu0 0.0
        %1876 = vmatmul.mubr.f32.gmra.mrb[0].mxu0 %v1717
        %v1877 = vpop.f32.mrb[0].mxu0
        %v1878 = vadd.f32 0.0, %v1877
        %v1879 = vpop.f32.mrb[0].mxu0
        %1880 = vmatprep.mubr.f32.mxu0 0.0
        %1881 = vmatmul.mubr.f32.gmra.mrb[0].mxu0 %v1722
        %v1882 = vpop.f32.mrb[0].mxu0
        %v1883 = vadd.f32 0.0, %v1882
        %v1884 = vpop.f32.mrb[0].mxu0
        %1885 = vmatprep.mubr.f32.mxu0 0.0
        %1886 = vmatmul.mubr.f32.gmra.mrb[0].mxu0 %v1727
        %v1887 = vpop.f32.mrb[0].mxu0
        %v1888 = vadd.f32 0.0, %v1887
        %v1889 = vpop.f32.mrb[0].mxu0
        %1890 = vmatprep.mubr.f32.mxu0 0.0
        %1891 = vmatmul.mubr.f32.gmra.mrb[0].mxu0 %v1732
        %v1892 = vpop.f32.mrb[0].mxu0
        %v1893 = vadd.f32 0.0, %v1892
        %v1894 = vpop.f32.mrb[0].mxu0
        %1895 = vmatprep.mubr.f32.mxu0 0.0
        %1896 = vmatmul.mubr.f32.gmra.mrb[0].mxu0 %v1737
        %v1897 = vpop.f32.mrb[0].mxu0
        %v1898 = vadd.f32 0.0, %v1897
        %v1899 = vpop.f32.mrb[0].mxu0
        %1900 = vmatprep.mubr.f32.mxu0 0.0
        %1901 = vmatmul.mubr.f32.gmra.mrb[0].mxu0 %v1742
        %v1902 = vpop.f32.mrb[0].mxu0
        %v1903 = vadd.f32 0.0, %v1902
        %v1904 = vpop.f32.mrb[0].mxu0
        %1905 = vmatprep.mubr.f32.mxu0 0.0
        %1906 = vmatmul.mubr.f32.gmra.mrb[0].mxu0 %v1747
        %v1907 = vpop.f32.mrb[0].mxu0
        %v1908 = vadd.f32 0.0, %v1907
        %v1909 = vpop.f32.mrb[0].mxu0
        %1910 = vdwg.mxu0
        %v1911 = vmul.f32 %v1833, 0.5
        %v1912 = vmul.f32 %v1838, 0.5
        %v1913 = vmul.f32 %v1843, 0.5
        %v1914 = vmul.f32 %v1848, 0.5
        %v1915 = vmul.f32 %v1853, 0.5
        %v1916 = vmul.f32 %v1858, 0.5
        %v1917 = vmul.f32 %v1863, 0.5
        %v1918 = vmul.f32 %v1868, 0.5
        %v1919 = vmul.f32 %v1873, 0.5
        %v1920 = vmul.f32 %v1878, 0.5
        %v1921 = vmul.f32 %v1883, 0.5
        %v1922 = vmul.f32 %v1888, 0.5
        %v1923 = vmul.f32 %v1893, 0.5
        %v1924 = vmul.f32 %v1898, 0.5
        %v1925 = vmul.f32 %v1903, 0.5
        %v1926 = vmul.f32 %v1908, 0.5
        %v1927 = vsub.f32 %v1750, %v1911
        %v1928 = vsub.f32 %v1751, %v1912
        %v1929 = vsub.f32 %v1752, %v1913
        %v1930 = vsub.f32 %v1753, %v1914
        %v1931 = vsub.f32 %v1754, %v1915
        %v1932 = vsub.f32 %v1755, %v1916
        %v1933 = vsub.f32 %v1756, %v1917
        %v1934 = vsub.f32 %v1757, %v1918
        %v1935 = vsub.f32 %v1758, %v1919
        %v1936 = vsub.f32 %v1759, %v1920
        %v1937 = vsub.f32 %v1760, %v1921
        %v1938 = vsub.f32 %v1761, %v1922
        %v1939 = vsub.f32 %v1762, %v1923
        %v1940 = vsub.f32 %v1763, %v1924
        %v1941 = vsub.f32 %v1764, %v1925
        %v1942 = vsub.f32 %v1765, %v1926
        %1943 = vmatprep.subr.mxu0 0.0
        %1944 = vmatpush1.msra.mxu0 %v1927
        %1945 = vmatprep.subr.mxu0 0.0
        %1946 = vmatpush1.msra.mxu0 %v1928
        %1947 = vmatprep.subr.mxu0 0.0
        %1948 = vmatpush1.msra.mxu0 %v1929
        %1949 = vmatprep.subr.mxu0 0.0
        %1950 = vmatpush1.msra.mxu0 %v1930
        %1951 = vmatprep.subr.mxu0 0.0
        %1952 = vmatpush1.msra.mxu0 %v1931
        %1953 = vmatprep.subr.mxu0 0.0
        %1954 = vmatpush1.msra.mxu0 %v1932
        %1955 = vmatprep.subr.mxu0 0.0
        %1956 = vmatpush1.msra.mxu0 %v1933
        %1957 = vmatprep.subr.mxu0 0.0
        %1958 = vmatpush1.msra.mxu0 %v1934
        %1959 = vmatprep.subr.mxu0 0.0
        %1960 = vmatpush1.msra.mxu0 %v1935
        %1961 = vmatprep.subr.mxu0 0.0
        %1962 = vmatpush1.msra.mxu0 %v1936
        %1963 = vmatprep.subr.mxu0 0.0
        %1964 = vmatpush1.msra.mxu0 %v1937
        %1965 = vmatprep.subr.mxu0 0.0
        %1966 = vmatpush1.msra.mxu0 %v1938
        %1967 = vmatprep.subr.mxu0 0.0
        %1968 = vmatpush1.msra.mxu0 %v1939
        %1969 = vmatprep.subr.mxu0 0.0
        %1970 = vmatpush1.msra.mxu0 %v1940
        %1971 = vmatprep.subr.mxu0 0.0
        %1972 = vmatpush1.msra.mxu0 %v1941
        %1973 = vmatprep.subr.mxu0 0.0
        %1974 = vmatpush1.msra.mxu0 %v1942
        %1975 = vmatprep.subr.mxu0 0.0
        %1976 = vmatpush1.msra.mxu0 0.0
        %1977 = vmatprep.subr.mxu0 0.0
        %1978 = vmatpush1.msra.mxu0 0.0
        %1979 = vmatprep.subr.mxu0 0.0
        %1980 = vmatpush1.msra.mxu0 0.0
        %1981 = vmatprep.subr.mxu0 0.0
        %1982 = vmatpush1.msra.mxu0 0.0
        %1983 = vmatprep.subr.mxu0 0.0
        %1984 = vmatpush1.msra.mxu0 0.0
        %1985 = vmatprep.subr.mxu0 0.0
        %1986 = vmatpush1.msra.mxu0 0.0
        %1987 = vmatprep.subr.mxu0 0.0
        %1988 = vmatpush1.msra.mxu0 0.0
        %1989 = vmatprep.subr.mxu0 0.0
        %1990 = vmatpush1.msra.mxu0 0.0
        %1991 = vmatprep.subr.mxu0 0.0
        %1992 = vmatpush1.msra.mxu0 0.0
        %1993 = vmatprep.subr.mxu0 0.0
        %1994 = vmatpush1.msra.mxu0 0.0
        %1995 = vmatprep.subr.mxu0 0.0
        %1996 = vmatpush1.msra.mxu0 0.0
        %1997 = vmatprep.subr.mxu0 0.0
        %1998 = vmatpush1.msra.mxu0 0.0
        %1999 = vmatprep.subr.mxu0 0.0
        %2000 = vmatpush1.msra.mxu0 0.0
        %2001 = vmatprep.subr.mxu0 0.0
        %2002 = vmatpush1.msra.mxu0 0.0
        %2003 = vmatprep.subr.mxu0 0.0
        %2004 = vmatpush1.msra.mxu0 0.0
        %2005 = vmatprep.subr.mxu0 0.0
        %2006 = vmatpush1.msra.mxu0 0.0
        %2007 = vmatprep.mubr.f32.mxu0 0.0
        %2008 = vmatmul.mubr.f32.gmra.mrb[0].mxu0 %v1927
        %v2009 = vpop.f32.mrb[0].mxu0
        %v2010 = vadd.f32 0.0, %v2009
        %v2011 = vpop.f32.mrb[0].mxu0
        %2012 = vmatprep.mubr.f32.mxu0 0.0
        %2013 = vmatmul.mubr.f32.gmra.mrb[0].mxu0 %v1928
        %v2014 = vpop.f32.mrb[0].mxu0
        %v2015 = vadd.f32 0.0, %v2014
        %v2016 = vpop.f32.mrb[0].mxu0
        %2017 = vmatprep.mubr.f32.mxu0 0.0
        %2018 = vmatmul.mubr.f32.gmra.mrb[0].mxu0 %v1929
        %v2019 = vpop.f32.mrb[0].mxu0
        %v2020 = vadd.f32 0.0, %v2019
        %v2021 = vpop.f32.mrb[0].mxu0
        %2022 = vmatprep.mubr.f32.mxu0 0.0
        %2023 = vmatmul.mubr.f32.gmra.mrb[0].mxu0 %v1930
        %v2024 = vpop.f32.mrb[0].mxu0
        %v2025 = vadd.f32 0.0, %v2024
        %v2026 = vpop.f32.mrb[0].mxu0
        %2027 = vmatprep.mubr.f32.mxu0 0.0
        %2028 = vmatmul.mubr.f32.gmra.mrb[0].mxu0 %v1931
        %v2029 = vpop.f32.mrb[0].mxu0
        %v2030 = vadd.f32 0.0, %v2029
        %v2031 = vpop.f32.mrb[0].mxu0
        %2032 = vmatprep.mubr.f32.mxu0 0.0
        %2033 = vmatmul.mubr.f32.gmra.mrb[0].mxu0 %v1932
        %v2034 = vpop.f32.mrb[0].mxu0
        %v2035 = vadd.f32 0.0, %v2034
        %v2036 = vpop.f32.mrb[0].mxu0
        %2037 = vmatprep.mubr.f32.mxu0 0.0
        %2038 = vmatmul.mubr.f32.gmra.mrb[0].mxu0 %v1933
        %v2039 = vpop.f32.mrb[0].mxu0
        %v2040 = vadd.f32 0.0, %v2039
        %v2041 = vpop.f32.mrb[0].mxu0
        %2042 = vmatprep.mubr.f32.mxu0 0.0
        %2043 = vmatmul.mubr.f32.gmra.mrb[0].mxu0 %v1934
        %v2044 = vpop.f32.mrb[0].mxu0
        %v2045 = vadd.f32 0.0, %v2044
        %v2046 = vpop.f32.mrb[0].mxu0
        %2047 = vmatprep.mubr.f32.mxu0 0.0
        %2048 = vmatmul.mubr.f32.gmra.mrb[0].mxu0 %v1935
        %v2049 = vpop.f32.mrb[0].mxu0
        %v2050 = vadd.f32 0.0, %v2049
        %v2051 = vpop.f32.mrb[0].mxu0
        %2052 = vmatprep.mubr.f32.mxu0 0.0
        %2053 = vmatmul.mubr.f32.gmra.mrb[0].mxu0 %v1936
        %v2054 = vpop.f32.mrb[0].mxu0
        %v2055 = vadd.f32 0.0, %v2054
        %v2056 = vpop.f32.mrb[0].mxu0
        %2057 = vmatprep.mubr.f32.mxu0 0.0
        %2058 = vmatmul.mubr.f32.gmra.mrb[0].mxu0 %v1937
        %v2059 = vpop.f32.mrb[0].mxu0
        %v2060 = vadd.f32 0.0, %v2059
        %v2061 = vpop.f32.mrb[0].mxu0
        %2062 = vmatprep.mubr.f32.mxu0 0.0
        %2063 = vmatmul.mubr.f32.gmra.mrb[0].mxu0 %v1938
        %v2064 = vpop.f32.mrb[0].mxu0
        %v2065 = vadd.f32 0.0, %v2064
        %v2066 = vpop.f32.mrb[0].mxu0
        %2067 = vmatprep.mubr.f32.mxu0 0.0
        %2068 = vmatmul.mubr.f32.gmra.mrb[0].mxu0 %v1939
        %v2069 = vpop.f32.mrb[0].mxu0
        %v2070 = vadd.f32 0.0, %v2069
        %v2071 = vpop.f32.mrb[0].mxu0
        %2072 = vmatprep.mubr.f32.mxu0 0.0
        %2073 = vmatmul.mubr.f32.gmra.mrb[0].mxu0 %v1940
        %v2074 = vpop.f32.mrb[0].mxu0
        %v2075 = vadd.f32 0.0, %v2074
        %v2076 = vpop.f32.mrb[0].mxu0
        %2077 = vmatprep.mubr.f32.mxu0 0.0
        %2078 = vmatmul.mubr.f32.gmra.mrb[0].mxu0 %v1941
        %v2079 = vpop.f32.mrb[0].mxu0
        %v2080 = vadd.f32 0.0, %v2079
        %v2081 = vpop.f32.mrb[0].mxu0
        %2082 = vmatprep.mubr.f32.mxu0 0.0
        %2083 = vmatmul.mubr.f32.gmra.mrb[0].mxu0 %v1942
        %v2084 = vpop.f32.mrb[0].mxu0
        %v2085 = vadd.f32 0.0, %v2084
        %v2086 = vpop.f32.mrb[0].mxu0
        %2087 = vdwg.mxu0
        %2088 = vmatprep.subr.mxu0 0.0
        %2089 = vmatpush1.msra.mxu0 %v1927
        %2090 = vmatprep.subr.mxu0 0.0
        %2091 = vmatpush1.msra.mxu0 %v1928
        %2092 = vmatprep.subr.mxu0 0.0
        %2093 = vmatpush1.msra.mxu0 %v1929
        %2094 = vmatprep.subr.mxu0 0.0
        %2095 = vmatpush1.msra.mxu0 %v1930
        %2096 = vmatprep.subr.mxu0 0.0
        %2097 = vmatpush1.msra.mxu0 %v1931
        %2098 = vmatprep.subr.mxu0 0.0
        %2099 = vmatpush1.msra.mxu0 %v1932
        %2100 = vmatprep.subr.mxu0 0.0
        %2101 = vmatpush1.msra.mxu0 %v1933
        %2102 = vmatprep.subr.mxu0 0.0
        %2103 = vmatpush1.msra.mxu0 %v1934
        %2104 = vmatprep.subr.mxu0 0.0
        %2105 = vmatpush1.msra.mxu0 %v1935
        %2106 = vmatprep.subr.mxu0 0.0
        %2107 = vmatpush1.msra.mxu0 %v1936
        %2108 = vmatprep.subr.mxu0 0.0
        %2109 = vmatpush1.msra.mxu0 %v1937
        %2110 = vmatprep.subr.mxu0 0.0
        %2111 = vmatpush1.msra.mxu0 %v1938
        %2112 = vmatprep.subr.mxu0 0.0
        %2113 = vmatpush1.msra.mxu0 %v1939
        %2114 = vmatprep.subr.mxu0 0.0
        %2115 = vmatpush1.msra.mxu0 %v1940
        %2116 = vmatprep.subr.mxu0 0.0
        %2117 = vmatpush1.msra.mxu0 %v1941
        %2118 = vmatprep.subr.mxu0 0.0
        %2119 = vmatpush1.msra.mxu0 %v1942
        %2120 = vmatprep.subr.mxu0 0.0
        %2121 = vmatpush1.msra.mxu0 0.0
        %2122 = vmatprep.subr.mxu0 0.0
        %2123 = vmatpush1.msra.mxu0 0.0
        %2124 = vmatprep.subr.mxu0 0.0
        %2125 = vmatpush1.msra.mxu0 0.0
        %2126 = vmatprep.subr.mxu0 0.0
        %2127 = vmatpush1.msra.mxu0 0.0
        %2128 = vmatprep.subr.mxu0 0.0
        %2129 = vmatpush1.msra.mxu0 0.0
        %2130 = vmatprep.subr.mxu0 0.0
        %2131 = vmatpush1.msra.mxu0 0.0
        %2132 = vmatprep.subr.mxu0 0.0
        %2133 = vmatpush1.msra.mxu0 0.0
        %2134 = vmatprep.subr.mxu0 0.0
        %2135 = vmatpush1.msra.mxu0 0.0
        %2136 = vmatprep.subr.mxu0 0.0
        %2137 = vmatpush1.msra.mxu0 0.0
        %2138 = vmatprep.subr.mxu0 0.0
        %2139 = vmatpush1.msra.mxu0 0.0
        %2140 = vmatprep.subr.mxu0 0.0
        %2141 = vmatpush1.msra.mxu0 0.0
        %2142 = vmatprep.subr.mxu0 0.0
        %2143 = vmatpush1.msra.mxu0 0.0
        %2144 = vmatprep.subr.mxu0 0.0
        %2145 = vmatpush1.msra.mxu0 0.0
        %2146 = vmatprep.subr.mxu0 0.0
        %2147 = vmatpush1.msra.mxu0 0.0
        %2148 = vmatprep.subr.mxu0 0.0
        %2149 = vmatpush1.msra.mxu0 0.0
        %2150 = vmatprep.subr.mxu0 0.0
        %2151 = vmatpush1.msra.mxu0 0.0
        %2152 = vmatprep.mubr.f32.mxu0 0.0
        %2153 = vmatmul.mubr.f32.gmra.mrb[0].mxu0 %v2010
        %v2154 = vpop.f32.mrb[0].mxu0
        %v2155 = vadd.f32 0.0, %v2154
        %v2156 = vpop.f32.mrb[0].mxu0
        %2157 = vmatprep.mubr.f32.mxu0 0.0
        %2158 = vmatmul.mubr.f32.gmra.mrb[0].mxu0 %v2015
        %v2159 = vpop.f32.mrb[0].mxu0
        %v2160 = vadd.f32 0.0, %v2159
        %v2161 = vpop.f32.mrb[0].mxu0
        %2162 = vmatprep.mubr.f32.mxu0 0.0
        %2163 = vmatmul.mubr.f32.gmra.mrb[0].mxu0 %v2020
        %v2164 = vpop.f32.mrb[0].mxu0
        %v2165 = vadd.f32 0.0, %v2164
        %v2166 = vpop.f32.mrb[0].mxu0
        %2167 = vmatprep.mubr.f32.mxu0 0.0
        %2168 = vmatmul.mubr.f32.gmra.mrb[0].mxu0 %v2025
        %v2169 = vpop.f32.mrb[0].mxu0
        %v2170 = vadd.f32 0.0, %v2169
        %v2171 = vpop.f32.mrb[0].mxu0
        %2172 = vmatprep.mubr.f32.mxu0 0.0
        %2173 = vmatmul.mubr.f32.gmra.mrb[0].mxu0 %v2030
        %v2174 = vpop.f32.mrb[0].mxu0
        %v2175 = vadd.f32 0.0, %v2174
        %v2176 = vpop.f32.mrb[0].mxu0
        %2177 = vmatprep.mubr.f32.mxu0 0.0
        %2178 = vmatmul.mubr.f32.gmra.mrb[0].mxu0 %v2035
        %v2179 = vpop.f32.mrb[0].mxu0
        %v2180 = vadd.f32 0.0, %v2179
        %v2181 = vpop.f32.mrb[0].mxu0
        %2182 = vmatprep.mubr.f32.mxu0 0.0
        %2183 = vmatmul.mubr.f32.gmra.mrb[0].mxu0 %v2040
        %v2184 = vpop.f32.mrb[0].mxu0
        %v2185 = vadd.f32 0.0, %v2184
        %v2186 = vpop.f32.mrb[0].mxu0
        %2187 = vmatprep.mubr.f32.mxu0 0.0
        %2188 = vmatmul.mubr.f32.gmra.mrb[0].mxu0 %v2045
        %v2189 = vpop.f32.mrb[0].mxu0
        %v2190 = vadd.f32 0.0, %v2189
        %v2191 = vpop.f32.mrb[0].mxu0
        %2192 = vmatprep.mubr.f32.mxu0 0.0
        %2193 = vmatmul.mubr.f32.gmra.mrb[0].mxu0 %v2050
        %v2194 = vpop.f32.mrb[0].mxu0
        %v2195 = vadd.f32 0.0, %v2194
        %v2196 = vpop.f32.mrb[0].mxu0
        %2197 = vmatprep.mubr.f32.mxu0 0.0
        %2198 = vmatmul.mubr.f32.gmra.mrb[0].mxu0 %v2055
        %v2199 = vpop.f32.mrb[0].mxu0
        %v2200 = vadd.f32 0.0, %v2199
        %v2201 = vpop.f32.mrb[0].mxu0
        %2202 = vmatprep.mubr.f32.mxu0 0.0
        %2203 = vmatmul.mubr.f32.gmra.mrb[0].mxu0 %v2060
        %v2204 = vpop.f32.mrb[0].mxu0
        %v2205 = vadd.f32 0.0, %v2204
        %v2206 = vpop.f32.mrb[0].mxu0
        %2207 = vmatprep.mubr.f32.mxu0 0.0
        %2208 = vmatmul.mubr.f32.gmra.mrb[0].mxu0 %v2065
        %v2209 = vpop.f32.mrb[0].mxu0
        %v2210 = vadd.f32 0.0, %v2209
        %v2211 = vpop.f32.mrb[0].mxu0
        %2212 = vmatprep.mubr.f32.mxu0 0.0
        %2213 = vmatmul.mubr.f32.gmra.mrb[0].mxu0 %v2070
        %v2214 = vpop.f32.mrb[0].mxu0
        %v2215 = vadd.f32 0.0, %v2214
        %v2216 = vpop.f32.mrb[0].mxu0
        %2217 = vmatprep.mubr.f32.mxu0 0.0
        %2218 = vmatmul.mubr.f32.gmra.mrb[0].mxu0 %v2075
        %v2219 = vpop.f32.mrb[0].mxu0
        %v2220 = vadd.f32 0.0, %v2219
        %v2221 = vpop.f32.mrb[0].mxu0
        %2222 = vmatprep.mubr.f32.mxu0 0.0
        %2223 = vmatmul.mubr.f32.gmra.mrb[0].mxu0 %v2080
        %v2224 = vpop.f32.mrb[0].mxu0
        %v2225 = vadd.f32 0.0, %v2224
        %v2226 = vpop.f32.mrb[0].mxu0
        %2227 = vmatprep.mubr.f32.mxu0 0.0
        %2228 = vmatmul.mubr.f32.gmra.mrb[0].mxu0 %v2085
        %v2229 = vpop.f32.mrb[0].mxu0
        %v2230 = vadd.f32 0.0, %v2229
        %v2231 = vpop.f32.mrb[0].mxu0
        %2232 = vdwg.mxu0
        %v2233 = vmul.f32 %v1927, 1.5
        %v2234 = vmul.f32 %v1928, 1.5
        %v2235 = vmul.f32 %v1929, 1.5
        %v2236 = vmul.f32 %v1930, 1.5
        %v2237 = vmul.f32 %v1931, 1.5
        %v2238 = vmul.f32 %v1932, 1.5
        %v2239 = vmul.f32 %v1933, 1.5
        %v2240 = vmul.f32 %v1934, 1.5
        %v2241 = vmul.f32 %v1935, 1.5
        %v2242 = vmul.f32 %v1936, 1.5
        %v2243 = vmul.f32 %v1937, 1.5
        %v2244 = vmul.f32 %v1938, 1.5
        %v2245 = vmul.f32 %v1939, 1.5
        %v2246 = vmul.f32 %v1940, 1.5
        %v2247 = vmul.f32 %v1941, 1.5
        %v2248 = vmul.f32 %v1942, 1.5
        %2249 = vmatprep.subr.mxu0 0.0
        %2250 = vmatpush1.msra.mxu0 %v354
        %2251 = vmatprep.subr.mxu0 0.0
        %2252 = vmatpush1.msra.mxu0 %v359
        %2253 = vmatprep.subr.mxu0 0.0
        %2254 = vmatpush1.msra.mxu0 %v364
        %2255 = vmatprep.subr.mxu0 0.0
        %2256 = vmatpush1.msra.mxu0 %v369
        %2257 = vmatprep.subr.mxu0 0.0
        %2258 = vmatpush1.msra.mxu0 %v374
        %2259 = vmatprep.subr.mxu0 0.0
        %2260 = vmatpush1.msra.mxu0 %v379
        %2261 = vmatprep.subr.mxu0 0.0
        %2262 = vmatpush1.msra.mxu0 %v384
        %2263 = vmatprep.subr.mxu0 0.0
        %2264 = vmatpush1.msra.mxu0 %v389
        %2265 = vmatprep.subr.mxu0 0.0
        %2266 = vmatpush1.msra.mxu0 %v394
        %2267 = vmatprep.subr.mxu0 0.0
        %2268 = vmatpush1.msra.mxu0 %v399
        %2269 = vmatprep.subr.mxu0 0.0
        %2270 = vmatpush1.msra.mxu0 %v404
        %2271 = vmatprep.subr.mxu0 0.0
        %2272 = vmatpush1.msra.mxu0 %v409
        %2273 = vmatprep.subr.mxu0 0.0
        %2274 = vmatpush1.msra.mxu0 %v414
        %2275 = vmatprep.subr.mxu0 0.0
        %2276 = vmatpush1.msra.mxu0 %v419
        %2277 = vmatprep.subr.mxu0 0.0
        %2278 = vmatpush1.msra.mxu0 %v424
        %2279 = vmatprep.subr.mxu0 0.0
        %2280 = vmatpush1.msra.mxu0 %v429
        %2281 = vmatprep.subr.mxu0 0.0
        %2282 = vmatpush1.msra.mxu0 0.0
        %2283 = vmatprep.subr.mxu0 0.0
        %2284 = vmatpush1.msra.mxu0 0.0
        %2285 = vmatprep.subr.mxu0 0.0
        %2286 = vmatpush1.msra.mxu0 0.0
        %2287 = vmatprep.subr.mxu0 0.0
        %2288 = vmatpush1.msra.mxu0 0.0
        %2289 = vmatprep.subr.mxu0 0.0
        %2290 = vmatpush1.msra.mxu0 0.0
        %2291 = vmatprep.subr.mxu0 0.0
        %2292 = vmatpush1.msra.mxu0 0.0
        %2293 = vmatprep.subr.mxu0 0.0
        %2294 = vmatpush1.msra.mxu0 0.0
        %2295 = vmatprep.subr.mxu0 0.0
        %2296 = vmatpush1.msra.mxu0 0.0
        %2297 = vmatprep.subr.mxu0 0.0
        %2298 = vmatpush1.msra.mxu0 0.0
        %2299 = vmatprep.subr.mxu0 0.0
        %2300 = vmatpush1.msra.mxu0 0.0
        %2301 = vmatprep.subr.mxu0 0.0
        %2302 = vmatpush1.msra.mxu0 0.0
        %2303 = vmatprep.subr.mxu0 0.0
        %2304 = vmatpush1.msra.mxu0 0.0
        %2305 = vmatprep.subr.mxu0 0.0
        %2306 = vmatpush1.msra.mxu0 0.0
        %2307 = vmatprep.subr.mxu0 0.0
        %2308 = vmatpush1.msra.mxu0 0.0
        %2309 = vmatprep.subr.mxu0 0.0
        %2310 = vmatpush1.msra.mxu0 0.0
        %2311 = vmatprep.subr.mxu0 0.0
        %2312 = vmatpush1.msra.mxu0 0.0
        %2313 = vmatprep.mubr.f32.mxu0 0.0
        %2314 = vmatmul.mubr.f32.gmra.mrb[0].mxu0 %v2155
        %v2315 = vpop.f32.mrb[0].mxu0
        %v2316 = vadd.f32 0.0, %v2315
        %v2317 = vpop.f32.mrb[0].mxu0
        %2318 = vmatprep.mubr.f32.mxu0 0.0
        %2319 = vmatmul.mubr.f32.gmra.mrb[0].mxu0 %v2160
        %v2320 = vpop.f32.mrb[0].mxu0
        %v2321 = vadd.f32 0.0, %v2320
        %v2322 = vpop.f32.mrb[0].mxu0
        %2323 = vmatprep.mubr.f32.mxu0 0.0
        %2324 = vmatmul.mubr.f32.gmra.mrb[0].mxu0 %v2165
        %v2325 = vpop.f32.mrb[0].mxu0
        %v2326 = vadd.f32 0.0, %v2325
        %v2327 = vpop.f32.mrb[0].mxu0
        %2328 = vmatprep.mubr.f32.mxu0 0.0
        %2329 = vmatmul.mubr.f32.gmra.mrb[0].mxu0 %v2170
        %v2330 = vpop.f32.mrb[0].mxu0
        %v2331 = vadd.f32 0.0, %v2330
        %v2332 = vpop.f32.mrb[0].mxu0
        %2333 = vmatprep.mubr.f32.mxu0 0.0
        %2334 = vmatmul.mubr.f32.gmra.mrb[0].mxu0 %v2175
        %v2335 = vpop.f32.mrb[0].mxu0
        %v2336 = vadd.f32 0.0, %v2335
        %v2337 = vpop.f32.mrb[0].mxu0
        %2338 = vmatprep.mubr.f32.mxu0 0.0
        %2339 = vmatmul.mubr.f32.gmra.mrb[0].mxu0 %v2180
        %v2340 = vpop.f32.mrb[0].mxu0
        %v2341 = vadd.f32 0.0, %v2340
        %v2342 = vpop.f32.mrb[0].mxu0
        %2343 = vmatprep.mubr.f32.mxu0 0.0
        %2344 = vmatmul.mubr.f32.gmra.mrb[0].mxu0 %v2185
        %v2345 = vpop.f32.mrb[0].mxu0
        %v2346 = vadd.f32 0.0, %v2345
        %v2347 = vpop.f32.mrb[0].mxu0
        %2348 = vmatprep.mubr.f32.mxu0 0.0
        %2349 = vmatmul.mubr.f32.gmra.mrb[0].mxu0 %v2190
        %v2350 = vpop.f32.mrb[0].mxu0
        %v2351 = vadd.f32 0.0, %v2350
        %v2352 = vpop.f32.mrb[0].mxu0
        %2353 = vmatprep.mubr.f32.mxu0 0.0
        %2354 = vmatmul.mubr.f32.gmra.mrb[0].mxu0 %v2195
        %v2355 = vpop.f32.mrb[0].mxu0
        %v2356 = vadd.f32 0.0, %v2355
        %v2357 = vpop.f32.mrb[0].mxu0
        %2358 = vmatprep.mubr.f32.mxu0 0.0
        %2359 = vmatmul.mubr.f32.gmra.mrb[0].mxu0 %v2200
        %v2360 = vpop.f32.mrb[0].mxu0
        %v2361 = vadd.f32 0.0, %v2360
        %v2362 = vpop.f32.mrb[0].mxu0
        %2363 = vmatprep.mubr.f32.mxu0 0.0
        %2364 = vmatmul.mubr.f32.gmra.mrb[0].mxu0 %v2205
        %v2365 = vpop.f32.mrb[0].mxu0
        %v2366 = vadd.f32 0.0, %v2365
        %v2367 = vpop.f32.mrb[0].mxu0
        %2368 = vmatprep.mubr.f32.mxu0 0.0
        %2369 = vmatmul.mubr.f32.gmra.mrb[0].mxu0 %v2210
        %v2370 = vpop.f32.mrb[0].mxu0
        %v2371 = vadd.f32 0.0, %v2370
        %v2372 = vpop.f32.mrb[0].mxu0
        %2373 = vmatprep.mubr.f32.mxu0 0.0
        %2374 = vmatmul.mubr.f32.gmra.mrb[0].mxu0 %v2215
        %v2375 = vpop.f32.mrb[0].mxu0
        %v2376 = vadd.f32 0.0, %v2375
        %v2377 = vpop.f32.mrb[0].mxu0
        %2378 = vmatprep.mubr.f32.mxu0 0.0
        %2379 = vmatmul.mubr.f32.gmra.mrb[0].mxu0 %v2220
        %v2380 = vpop.f32.mrb[0].mxu0
        %v2381 = vadd.f32 0.0, %v2380
        %v2382 = vpop.f32.mrb[0].mxu0
        %2383 = vmatprep.mubr.f32.mxu0 0.0
        %2384 = vmatmul.mubr.f32.gmra.mrb[0].mxu0 %v2225
        %v2385 = vpop.f32.mrb[0].mxu0
        %v2386 = vadd.f32 0.0, %v2385
        %v2387 = vpop.f32.mrb[0].mxu0
        %2388 = vmatprep.mubr.f32.mxu0 0.0
        %2389 = vmatmul.mubr.f32.gmra.mrb[0].mxu0 %v2230
        %v2390 = vpop.f32.mrb[0].mxu0
        %v2391 = vadd.f32 0.0, %v2390
        %v2392 = vpop.f32.mrb[0].mxu0
        %2393 = vdwg.mxu0
        %v2394 = vmul.f32 %v2316, 0.5
        %v2395 = vmul.f32 %v2321, 0.5
        %v2396 = vmul.f32 %v2326, 0.5
        %v2397 = vmul.f32 %v2331, 0.5
        %v2398 = vmul.f32 %v2336, 0.5
        %v2399 = vmul.f32 %v2341, 0.5
        %v2400 = vmul.f32 %v2346, 0.5
        %v2401 = vmul.f32 %v2351, 0.5
        %v2402 = vmul.f32 %v2356, 0.5
        %v2403 = vmul.f32 %v2361, 0.5
        %v2404 = vmul.f32 %v2366, 0.5
        %v2405 = vmul.f32 %v2371, 0.5
        %v2406 = vmul.f32 %v2376, 0.5
        %v2407 = vmul.f32 %v2381, 0.5
        %v2408 = vmul.f32 %v2386, 0.5
        %v2409 = vmul.f32 %v2391, 0.5
        %v2410 = vsub.f32 %v2233, %v2394
        %v2411 = vsub.f32 %v2234, %v2395
        %v2412 = vsub.f32 %v2235, %v2396
        %v2413 = vsub.f32 %v2236, %v2397
        %v2414 = vsub.f32 %v2237, %v2398
        %v2415 = vsub.f32 %v2238, %v2399
        %v2416 = vsub.f32 %v2239, %v2400
        %v2417 = vsub.f32 %v2240, %v2401
        %v2418 = vsub.f32 %v2241, %v2402
        %v2419 = vsub.f32 %v2242, %v2403
        %v2420 = vsub.f32 %v2243, %v2404
        %v2421 = vsub.f32 %v2244, %v2405
        %v2422 = vsub.f32 %v2245, %v2406
        %v2423 = vsub.f32 %v2246, %v2407
        %v2424 = vsub.f32 %v2247, %v2408
        %v2425 = vsub.f32 %v2248, %v2409
        %2426 = vmatprep.subr.mxu0 0.0
        %2427 = vmatpush1.msra.mxu0 %v2410
        %2428 = vmatprep.subr.mxu0 0.0
        %2429 = vmatpush1.msra.mxu0 %v2411
        %2430 = vmatprep.subr.mxu0 0.0
        %2431 = vmatpush1.msra.mxu0 %v2412
        %2432 = vmatprep.subr.mxu0 0.0
        %2433 = vmatpush1.msra.mxu0 %v2413
        %2434 = vmatprep.subr.mxu0 0.0
        %2435 = vmatpush1.msra.mxu0 %v2414
        %2436 = vmatprep.subr.mxu0 0.0
        %2437 = vmatpush1.msra.mxu0 %v2415
        %2438 = vmatprep.subr.mxu0 0.0
        %2439 = vmatpush1.msra.mxu0 %v2416
        %2440 = vmatprep.subr.mxu0 0.0
        %2441 = vmatpush1.msra.mxu0 %v2417
        %2442 = vmatprep.subr.mxu0 0.0
        %2443 = vmatpush1.msra.mxu0 %v2418
        %2444 = vmatprep.subr.mxu0 0.0
        %2445 = vmatpush1.msra.mxu0 %v2419
        %2446 = vmatprep.subr.mxu0 0.0
        %2447 = vmatpush1.msra.mxu0 %v2420
        %2448 = vmatprep.subr.mxu0 0.0
        %2449 = vmatpush1.msra.mxu0 %v2421
        %2450 = vmatprep.subr.mxu0 0.0
        %2451 = vmatpush1.msra.mxu0 %v2422
        %2452 = vmatprep.subr.mxu0 0.0
        %2453 = vmatpush1.msra.mxu0 %v2423
        %2454 = vmatprep.subr.mxu0 0.0
        %2455 = vmatpush1.msra.mxu0 %v2424
        %2456 = vmatprep.subr.mxu0 0.0
        %2457 = vmatpush1.msra.mxu0 %v2425
        %2458 = vmatprep.subr.mxu0 0.0
        %2459 = vmatpush1.msra.mxu0 0.0
        %2460 = vmatprep.subr.mxu0 0.0
        %2461 = vmatpush1.msra.mxu0 0.0
        %2462 = vmatprep.subr.mxu0 0.0
        %2463 = vmatpush1.msra.mxu0 0.0
        %2464 = vmatprep.subr.mxu0 0.0
        %2465 = vmatpush1.msra.mxu0 0.0
        %2466 = vmatprep.subr.mxu0 0.0
        %2467 = vmatpush1.msra.mxu0 0.0
        %2468 = vmatprep.subr.mxu0 0.0
        %2469 = vmatpush1.msra.mxu0 0.0
        %2470 = vmatprep.subr.mxu0 0.0
        %2471 = vmatpush1.msra.mxu0 0.0
        %2472 = vmatprep.subr.mxu0 0.0
        %2473 = vmatpush1.msra.mxu0 0.0
        %2474 = vmatprep.subr.mxu0 0.0
        %2475 = vmatpush1.msra.mxu0 0.0
        %2476 = vmatprep.subr.mxu0 0.0
        %2477 = vmatpush1.msra.mxu0 0.0
        %2478 = vmatprep.subr.mxu0 0.0
        %2479 = vmatpush1.msra.mxu0 0.0
        %2480 = vmatprep.subr.mxu0 0.0
        %2481 = vmatpush1.msra.mxu0 0.0
        %2482 = vmatprep.subr.mxu0 0.0
        %2483 = vmatpush1.msra.mxu0 0.0
        %2484 = vmatprep.subr.mxu0 0.0
        %2485 = vmatpush1.msra.mxu0 0.0
        %2486 = vmatprep.subr.mxu0 0.0
        %2487 = vmatpush1.msra.mxu0 0.0
        %2488 = vmatprep.subr.mxu0 0.0
        %2489 = vmatpush1.msra.mxu0 0.0
        %2490 = vmatprep.mubr.f32.mxu0 0.0
        %2491 = vmatmul.mubr.f32.gmra.mrb[0].mxu0 %v2410
        %v2492 = vpop.f32.mrb[0].mxu0
        %v2493 = vadd.f32 0.0, %v2492
        %v2494 = vpop.f32.mrb[0].mxu0
        %2495 = vmatprep.mubr.f32.mxu0 0.0
        %2496 = vmatmul.mubr.f32.gmra.mrb[0].mxu0 %v2411
        %v2497 = vpop.f32.mrb[0].mxu0
        %v2498 = vadd.f32 0.0, %v2497
        %v2499 = vpop.f32.mrb[0].mxu0
        %2500 = vmatprep.mubr.f32.mxu0 0.0
        %2501 = vmatmul.mubr.f32.gmra.mrb[0].mxu0 %v2412
        %v2502 = vpop.f32.mrb[0].mxu0
        %v2503 = vadd.f32 0.0, %v2502
        %v2504 = vpop.f32.mrb[0].mxu0
        %2505 = vmatprep.mubr.f32.mxu0 0.0
        %2506 = vmatmul.mubr.f32.gmra.mrb[0].mxu0 %v2413
        %v2507 = vpop.f32.mrb[0].mxu0
        %v2508 = vadd.f32 0.0, %v2507
        %v2509 = vpop.f32.mrb[0].mxu0
        %2510 = vmatprep.mubr.f32.mxu0 0.0
        %2511 = vmatmul.mubr.f32.gmra.mrb[0].mxu0 %v2414
        %v2512 = vpop.f32.mrb[0].mxu0
        %v2513 = vadd.f32 0.0, %v2512
        %v2514 = vpop.f32.mrb[0].mxu0
        %2515 = vmatprep.mubr.f32.mxu0 0.0
        %2516 = vmatmul.mubr.f32.gmra.mrb[0].mxu0 %v2415
        %v2517 = vpop.f32.mrb[0].mxu0
        %v2518 = vadd.f32 0.0, %v2517
        %v2519 = vpop.f32.mrb[0].mxu0
        %2520 = vmatprep.mubr.f32.mxu0 0.0
        %2521 = vmatmul.mubr.f32.gmra.mrb[0].mxu0 %v2416
        %v2522 = vpop.f32.mrb[0].mxu0
        %v2523 = vadd.f32 0.0, %v2522
        %v2524 = vpop.f32.mrb[0].mxu0
        %2525 = vmatprep.mubr.f32.mxu0 0.0
        %2526 = vmatmul.mubr.f32.gmra.mrb[0].mxu0 %v2417
        %v2527 = vpop.f32.mrb[0].mxu0
        %v2528 = vadd.f32 0.0, %v2527
        %v2529 = vpop.f32.mrb[0].mxu0
        %2530 = vmatprep.mubr.f32.mxu0 0.0
        %2531 = vmatmul.mubr.f32.gmra.mrb[0].mxu0 %v2418
        %v2532 = vpop.f32.mrb[0].mxu0
        %v2533 = vadd.f32 0.0, %v2532
        %v2534 = vpop.f32.mrb[0].mxu0
        %2535 = vmatprep.mubr.f32.mxu0 0.0
        %2536 = vmatmul.mubr.f32.gmra.mrb[0].mxu0 %v2419
        %v2537 = vpop.f32.mrb[0].mxu0
        %v2538 = vadd.f32 0.0, %v2537
        %v2539 = vpop.f32.mrb[0].mxu0
        %2540 = vmatprep.mubr.f32.mxu0 0.0
        %2541 = vmatmul.mubr.f32.gmra.mrb[0].mxu0 %v2420
        %v2542 = vpop.f32.mrb[0].mxu0
        %v2543 = vadd.f32 0.0, %v2542
        %v2544 = vpop.f32.mrb[0].mxu0
        %2545 = vmatprep.mubr.f32.mxu0 0.0
        %2546 = vmatmul.mubr.f32.gmra.mrb[0].mxu0 %v2421
        %v2547 = vpop.f32.mrb[0].mxu0
        %v2548 = vadd.f32 0.0, %v2547
        %v2549 = vpop.f32.mrb[0].mxu0
        %2550 = vmatprep.mubr.f32.mxu0 0.0
        %2551 = vmatmul.mubr.f32.gmra.mrb[0].mxu0 %v2422
        %v2552 = vpop.f32.mrb[0].mxu0
        %v2553 = vadd.f32 0.0, %v2552
        %v2554 = vpop.f32.mrb[0].mxu0
        %2555 = vmatprep.mubr.f32.mxu0 0.0
        %2556 = vmatmul.mubr.f32.gmra.mrb[0].mxu0 %v2423
        %v2557 = vpop.f32.mrb[0].mxu0
        %v2558 = vadd.f32 0.0, %v2557
        %v2559 = vpop.f32.mrb[0].mxu0
        %2560 = vmatprep.mubr.f32.mxu0 0.0
        %2561 = vmatmul.mubr.f32.gmra.mrb[0].mxu0 %v2424
        %v2562 = vpop.f32.mrb[0].mxu0
        %v2563 = vadd.f32 0.0, %v2562
        %v2564 = vpop.f32.mrb[0].mxu0
        %2565 = vmatprep.mubr.f32.mxu0 0.0
        %2566 = vmatmul.mubr.f32.gmra.mrb[0].mxu0 %v2425
        %v2567 = vpop.f32.mrb[0].mxu0
        %v2568 = vadd.f32 0.0, %v2567
        %v2569 = vpop.f32.mrb[0].mxu0
        %2570 = vdwg.mxu0
        %2571 = vmatprep.subr.mxu0 0.0
        %2572 = vmatpush1.msra.mxu0 %v2410
        %2573 = vmatprep.subr.mxu0 0.0
        %2574 = vmatpush1.msra.mxu0 %v2411
        %2575 = vmatprep.subr.mxu0 0.0
        %2576 = vmatpush1.msra.mxu0 %v2412
        %2577 = vmatprep.subr.mxu0 0.0
        %2578 = vmatpush1.msra.mxu0 %v2413
        %2579 = vmatprep.subr.mxu0 0.0
        %2580 = vmatpush1.msra.mxu0 %v2414
        %2581 = vmatprep.subr.mxu0 0.0
        %2582 = vmatpush1.msra.mxu0 %v2415
        %2583 = vmatprep.subr.mxu0 0.0
        %2584 = vmatpush1.msra.mxu0 %v2416
        %2585 = vmatprep.subr.mxu0 0.0
        %2586 = vmatpush1.msra.mxu0 %v2417
        %2587 = vmatprep.subr.mxu0 0.0
        %2588 = vmatpush1.msra.mxu0 %v2418
        %2589 = vmatprep.subr.mxu0 0.0
        %2590 = vmatpush1.msra.mxu0 %v2419
        %2591 = vmatprep.subr.mxu0 0.0
        %2592 = vmatpush1.msra.mxu0 %v2420
        %2593 = vmatprep.subr.mxu0 0.0
        %2594 = vmatpush1.msra.mxu0 %v2421
        %2595 = vmatprep.subr.mxu0 0.0
        %2596 = vmatpush1.msra.mxu0 %v2422
        %2597 = vmatprep.subr.mxu0 0.0
        %2598 = vmatpush1.msra.mxu0 %v2423
        %2599 = vmatprep.subr.mxu0 0.0
        %2600 = vmatpush1.msra.mxu0 %v2424
        %2601 = vmatprep.subr.mxu0 0.0
        %2602 = vmatpush1.msra.mxu0 %v2425
        %2603 = vmatprep.subr.mxu0 0.0
        %2604 = vmatpush1.msra.mxu0 0.0
        %2605 = vmatprep.subr.mxu0 0.0
        %2606 = vmatpush1.msra.mxu0 0.0
        %2607 = vmatprep.subr.mxu0 0.0
        %2608 = vmatpush1.msra.mxu0 0.0
        %2609 = vmatprep.subr.mxu0 0.0
        %2610 = vmatpush1.msra.mxu0 0.0
        %2611 = vmatprep.subr.mxu0 0.0
        %2612 = vmatpush1.msra.mxu0 0.0
        %2613 = vmatprep.subr.mxu0 0.0
        %2614 = vmatpush1.msra.mxu0 0.0
        %2615 = vmatprep.subr.mxu0 0.0
        %2616 = vmatpush1.msra.mxu0 0.0
        %2617 = vmatprep.subr.mxu0 0.0
        %2618 = vmatpush1.msra.mxu0 0.0
        %2619 = vmatprep.subr.mxu0 0.0
        %2620 = vmatpush1.msra.mxu0 0.0
        %2621 = vmatprep.subr.mxu0 0.0
        %2622 = vmatpush1.msra.mxu0 0.0
        %2623 = vmatprep.subr.mxu0 0.0
        %2624 = vmatpush1.msra.mxu0 0.0
        %2625 = vmatprep.subr.mxu0 0.0
        %2626 = vmatpush1.msra.mxu0 0.0
        %2627 = vmatprep.subr.mxu0 0.0
        %2628 = vmatpush1.msra.mxu0 0.0
        %2629 = vmatprep.subr.mxu0 0.0
        %2630 = vmatpush1.msra.mxu0 0.0
        %2631 = vmatprep.subr.mxu0 0.0
        %2632 = vmatpush1.msra.mxu0 0.0
        %2633 = vmatprep.subr.mxu0 0.0
        %2634 = vmatpush1.msra.mxu0 0.0
        %2635 = vmatprep.mubr.f32.mxu0 0.0
        %2636 = vmatmul.mubr.f32.gmra.mrb[0].mxu0 %v2493
        %v2637 = vpop.f32.mrb[0].mxu0
        %v2638 = vadd.f32 0.0, %v2637
        %v2639 = vpop.f32.mrb[0].mxu0
        %2640 = vmatprep.mubr.f32.mxu0 0.0
        %2641 = vmatmul.mubr.f32.gmra.mrb[0].mxu0 %v2498
        %v2642 = vpop.f32.mrb[0].mxu0
        %v2643 = vadd.f32 0.0, %v2642
        %v2644 = vpop.f32.mrb[0].mxu0
        %2645 = vmatprep.mubr.f32.mxu0 0.0
        %2646 = vmatmul.mubr.f32.gmra.mrb[0].mxu0 %v2503
        %v2647 = vpop.f32.mrb[0].mxu0
        %v2648 = vadd.f32 0.0, %v2647
        %v2649 = vpop.f32.mrb[0].mxu0
        %2650 = vmatprep.mubr.f32.mxu0 0.0
        %2651 = vmatmul.mubr.f32.gmra.mrb[0].mxu0 %v2508
        %v2652 = vpop.f32.mrb[0].mxu0
        %v2653 = vadd.f32 0.0, %v2652
        %v2654 = vpop.f32.mrb[0].mxu0
        %2655 = vmatprep.mubr.f32.mxu0 0.0
        %2656 = vmatmul.mubr.f32.gmra.mrb[0].mxu0 %v2513
        %v2657 = vpop.f32.mrb[0].mxu0
        %v2658 = vadd.f32 0.0, %v2657
        %v2659 = vpop.f32.mrb[0].mxu0
        %2660 = vmatprep.mubr.f32.mxu0 0.0
        %2661 = vmatmul.mubr.f32.gmra.mrb[0].mxu0 %v2518
        %v2662 = vpop.f32.mrb[0].mxu0
        %v2663 = vadd.f32 0.0, %v2662
        %v2664 = vpop.f32.mrb[0].mxu0
        %2665 = vmatprep.mubr.f32.mxu0 0.0
        %2666 = vmatmul.mubr.f32.gmra.mrb[0].mxu0 %v2523
        %v2667 = vpop.f32.mrb[0].mxu0
        %v2668 = vadd.f32 0.0, %v2667
        %v2669 = vpop.f32.mrb[0].mxu0
        %2670 = vmatprep.mubr.f32.mxu0 0.0
        %2671 = vmatmul.mubr.f32.gmra.mrb[0].mxu0 %v2528
        %v2672 = vpop.f32.mrb[0].mxu0
        %v2673 = vadd.f32 0.0, %v2672
        %v2674 = vpop.f32.mrb[0].mxu0
        %2675 = vmatprep.mubr.f32.mxu0 0.0
        %2676 = vmatmul.mubr.f32.gmra.mrb[0].mxu0 %v2533
        %v2677 = vpop.f32.mrb[0].mxu0
        %v2678 = vadd.f32 0.0, %v2677
        %v2679 = vpop.f32.mrb[0].mxu0
        %2680 = vmatprep.mubr.f32.mxu0 0.0
        %2681 = vmatmul.mubr.f32.gmra.mrb[0].mxu0 %v2538
        %v2682 = vpop.f32.mrb[0].mxu0
        %v2683 = vadd.f32 0.0, %v2682
        %v2684 = vpop.f32.mrb[0].mxu0
        %2685 = vmatprep.mubr.f32.mxu0 0.0
        %2686 = vmatmul.mubr.f32.gmra.mrb[0].mxu0 %v2543
        %v2687 = vpop.f32.mrb[0].mxu0
        %v2688 = vadd.f32 0.0, %v2687
        %v2689 = vpop.f32.mrb[0].mxu0
        %2690 = vmatprep.mubr.f32.mxu0 0.0
        %2691 = vmatmul.mubr.f32.gmra.mrb[0].mxu0 %v2548
        %v2692 = vpop.f32.mrb[0].mxu0
        %v2693 = vadd.f32 0.0, %v2692
        %v2694 = vpop.f32.mrb[0].mxu0
        %2695 = vmatprep.mubr.f32.mxu0 0.0
        %2696 = vmatmul.mubr.f32.gmra.mrb[0].mxu0 %v2553
        %v2697 = vpop.f32.mrb[0].mxu0
        %v2698 = vadd.f32 0.0, %v2697
        %v2699 = vpop.f32.mrb[0].mxu0
        %2700 = vmatprep.mubr.f32.mxu0 0.0
        %2701 = vmatmul.mubr.f32.gmra.mrb[0].mxu0 %v2558
        %v2702 = vpop.f32.mrb[0].mxu0
        %v2703 = vadd.f32 0.0, %v2702
        %v2704 = vpop.f32.mrb[0].mxu0
        %2705 = vmatprep.mubr.f32.mxu0 0.0
        %2706 = vmatmul.mubr.f32.gmra.mrb[0].mxu0 %v2563
        %v2707 = vpop.f32.mrb[0].mxu0
        %v2708 = vadd.f32 0.0, %v2707
        %v2709 = vpop.f32.mrb[0].mxu0
        %2710 = vmatprep.mubr.f32.mxu0 0.0
        %2711 = vmatmul.mubr.f32.gmra.mrb[0].mxu0 %v2568
        %v2712 = vpop.f32.mrb[0].mxu0
        %v2713 = vadd.f32 0.0, %v2712
        %v2714 = vpop.f32.mrb[0].mxu0
        %2715 = vdwg.mxu0
        %v2716 = vmul.f32 %v2410, 1.5
        %v2717 = vmul.f32 %v2411, 1.5
        %v2718 = vmul.f32 %v2412, 1.5
        %v2719 = vmul.f32 %v2413, 1.5
        %v2720 = vmul.f32 %v2414, 1.5
        %v2721 = vmul.f32 %v2415, 1.5
        %v2722 = vmul.f32 %v2416, 1.5
        %v2723 = vmul.f32 %v2417, 1.5
        %v2724 = vmul.f32 %v2418, 1.5
        %v2725 = vmul.f32 %v2419, 1.5
        %v2726 = vmul.f32 %v2420, 1.5
        %v2727 = vmul.f32 %v2421, 1.5
        %v2728 = vmul.f32 %v2422, 1.5
        %v2729 = vmul.f32 %v2423, 1.5
        %v2730 = vmul.f32 %v2424, 1.5
        %v2731 = vmul.f32 %v2425, 1.5
        %2732 = vmatprep.subr.mxu0 0.0
        %2733 = vmatpush1.msra.mxu0 %v354
        %2734 = vmatprep.subr.mxu0 0.0
        %2735 = vmatpush1.msra.mxu0 %v359
        %2736 = vmatprep.subr.mxu0 0.0
        %2737 = vmatpush1.msra.mxu0 %v364
        %2738 = vmatprep.subr.mxu0 0.0
        %2739 = vmatpush1.msra.mxu0 %v369
        %2740 = vmatprep.subr.mxu0 0.0
        %2741 = vmatpush1.msra.mxu0 %v374
        %2742 = vmatprep.subr.mxu0 0.0
        %2743 = vmatpush1.msra.mxu0 %v379
        %2744 = vmatprep.subr.mxu0 0.0
        %2745 = vmatpush1.msra.mxu0 %v384
        %2746 = vmatprep.subr.mxu0 0.0
        %2747 = vmatpush1.msra.mxu0 %v389
        %2748 = vmatprep.subr.mxu0 0.0
        %2749 = vmatpush1.msra.mxu0 %v394
        %2750 = vmatprep.subr.mxu0 0.0
        %2751 = vmatpush1.msra.mxu0 %v399
        %2752 = vmatprep.subr.mxu0 0.0
        %2753 = vmatpush1.msra.mxu0 %v404
        %2754 = vmatprep.subr.mxu0 0.0
        %2755 = vmatpush1.msra.mxu0 %v409
        %2756 = vmatprep.subr.mxu0 0.0
        %2757 = vmatpush1.msra.mxu0 %v414
        %2758 = vmatprep.subr.mxu0 0.0
        %2759 = vmatpush1.msra.mxu0 %v419
        %2760 = vmatprep.subr.mxu0 0.0
        %2761 = vmatpush1.msra.mxu0 %v424
        %2762 = vmatprep.subr.mxu0 0.0
        %2763 = vmatpush1.msra.mxu0 %v429
        %2764 = vmatprep.subr.mxu0 0.0
        %2765 = vmatpush1.msra.mxu0 0.0
        %2766 = vmatprep.subr.mxu0 0.0
        %2767 = vmatpush1.msra.mxu0 0.0
        %2768 = vmatprep.subr.mxu0 0.0
        %2769 = vmatpush1.msra.mxu0 0.0
        %2770 = vmatprep.subr.mxu0 0.0
        %2771 = vmatpush1.msra.mxu0 0.0
        %2772 = vmatprep.subr.mxu0 0.0
        %2773 = vmatpush1.msra.mxu0 0.0
        %2774 = vmatprep.subr.mxu0 0.0
        %2775 = vmatpush1.msra.mxu0 0.0
        %2776 = vmatprep.subr.mxu0 0.0
        %2777 = vmatpush1.msra.mxu0 0.0
        %2778 = vmatprep.subr.mxu0 0.0
        %2779 = vmatpush1.msra.mxu0 0.0
        %2780 = vmatprep.subr.mxu0 0.0
        %2781 = vmatpush1.msra.mxu0 0.0
        %2782 = vmatprep.subr.mxu0 0.0
        %2783 = vmatpush1.msra.mxu0 0.0
        %2784 = vmatprep.subr.mxu0 0.0
        %2785 = vmatpush1.msra.mxu0 0.0
        %2786 = vmatprep.subr.mxu0 0.0
        %2787 = vmatpush1.msra.mxu0 0.0
        %2788 = vmatprep.subr.mxu0 0.0
        %2789 = vmatpush1.msra.mxu0 0.0
        %2790 = vmatprep.subr.mxu0 0.0
        %2791 = vmatpush1.msra.mxu0 0.0
        %2792 = vmatprep.subr.mxu0 0.0
        %2793 = vmatpush1.msra.mxu0 0.0
        %2794 = vmatprep.subr.mxu0 0.0
        %2795 = vmatpush1.msra.mxu0 0.0
        %2796 = vmatprep.mubr.f32.mxu0 0.0
        %2797 = vmatmul.mubr.f32.gmra.mrb[0].mxu0 %v2638
        %v2798 = vpop.f32.mrb[0].mxu0
        %v2799 = vadd.f32 0.0, %v2798
        %v2800 = vpop.f32.mrb[0].mxu0
        %2801 = vmatprep.mubr.f32.mxu0 0.0
        %2802 = vmatmul.mubr.f32.gmra.mrb[0].mxu0 %v2643
        %v2803 = vpop.f32.mrb[0].mxu0
        %v2804 = vadd.f32 0.0, %v2803
        %v2805 = vpop.f32.mrb[0].mxu0
        %2806 = vmatprep.mubr.f32.mxu0 0.0
        %2807 = vmatmul.mubr.f32.gmra.mrb[0].mxu0 %v2648
        %v2808 = vpop.f32.mrb[0].mxu0
        %v2809 = vadd.f32 0.0, %v2808
        %v2810 = vpop.f32.mrb[0].mxu0
        %2811 = vmatprep.mubr.f32.mxu0 0.0
        %2812 = vmatmul.mubr.f32.gmra.mrb[0].mxu0 %v2653
        %v2813 = vpop.f32.mrb[0].mxu0
        %v2814 = vadd.f32 0.0, %v2813
        %v2815 = vpop.f32.mrb[0].mxu0
        %2816 = vmatprep.mubr.f32.mxu0 0.0
        %2817 = vmatmul.mubr.f32.gmra.mrb[0].mxu0 %v2658
        %v2818 = vpop.f32.mrb[0].mxu0
        %v2819 = vadd.f32 0.0, %v2818
        %v2820 = vpop.f32.mrb[0].mxu0
        %2821 = vmatprep.mubr.f32.mxu0 0.0
        %2822 = vmatmul.mubr.f32.gmra.mrb[0].mxu0 %v2663
        %v2823 = vpop.f32.mrb[0].mxu0
        %v2824 = vadd.f32 0.0, %v2823
        %v2825 = vpop.f32.mrb[0].mxu0
        %2826 = vmatprep.mubr.f32.mxu0 0.0
        %2827 = vmatmul.mubr.f32.gmra.mrb[0].mxu0 %v2668
        %v2828 = vpop.f32.mrb[0].mxu0
        %v2829 = vadd.f32 0.0, %v2828
        %v2830 = vpop.f32.mrb[0].mxu0
        %2831 = vmatprep.mubr.f32.mxu0 0.0
        %2832 = vmatmul.mubr.f32.gmra.mrb[0].mxu0 %v2673
        %v2833 = vpop.f32.mrb[0].mxu0
        %v2834 = vadd.f32 0.0, %v2833
        %v2835 = vpop.f32.mrb[0].mxu0
        %2836 = vmatprep.mubr.f32.mxu0 0.0
        %2837 = vmatmul.mubr.f32.gmra.mrb[0].mxu0 %v2678
        %v2838 = vpop.f32.mrb[0].mxu0
        %v2839 = vadd.f32 0.0, %v2838
        %v2840 = vpop.f32.mrb[0].mxu0
        %2841 = vmatprep.mubr.f32.mxu0 0.0
        %2842 = vmatmul.mubr.f32.gmra.mrb[0].mxu0 %v2683
        %v2843 = vpop.f32.mrb[0].mxu0
        %v2844 = vadd.f32 0.0, %v2843
        %v2845 = vpop.f32.mrb[0].mxu0
        %2846 = vmatprep.mubr.f32.mxu0 0.0
        %2847 = vmatmul.mubr.f32.gmra.mrb[0].mxu0 %v2688
        %v2848 = vpop.f32.mrb[0].mxu0
        %v2849 = vadd.f32 0.0, %v2848
        %v2850 = vpop.f32.mrb[0].mxu0
        %2851 = vmatprep.mubr.f32.mxu0 0.0
        %2852 = vmatmul.mubr.f32.gmra.mrb[0].mxu0 %v2693
        %v2853 = vpop.f32.mrb[0].mxu0
        %v2854 = vadd.f32 0.0, %v2853
        %v2855 = vpop.f32.mrb[0].mxu0
        %2856 = vmatprep.mubr.f32.mxu0 0.0
        %2857 = vmatmul.mubr.f32.gmra.mrb[0].mxu0 %v2698
        %v2858 = vpop.f32.mrb[0].mxu0
        %v2859 = vadd.f32 0.0, %v2858
        %v2860 = vpop.f32.mrb[0].mxu0
        %2861 = vmatprep.mubr.f32.mxu0 0.0
        %2862 = vmatmul.mubr.f32.gmra.mrb[0].mxu0 %v2703
        %v2863 = vpop.f32.mrb[0].mxu0
        %v2864 = vadd.f32 0.0, %v2863
        %v2865 = vpop.f32.mrb[0].mxu0
        %2866 = vmatprep.mubr.f32.mxu0 0.0
        %2867 = vmatmul.mubr.f32.gmra.mrb[0].mxu0 %v2708
        %v2868 = vpop.f32.mrb[0].mxu0
        %v2869 = vadd.f32 0.0, %v2868
        %v2870 = vpop.f32.mrb[0].mxu0
        %2871 = vmatprep.mubr.f32.mxu0 0.0
        %2872 = vmatmul.mubr.f32.gmra.mrb[0].mxu0 %v2713
        %v2873 = vpop.f32.mrb[0].mxu0
        %v2874 = vadd.f32 0.0, %v2873
        %v2875 = vpop.f32.mrb[0].mxu0
        %2876 = vdwg.mxu0
        %v2877 = vmul.f32 %v2799, 0.5
        %v2878 = vmul.f32 %v2804, 0.5
        %v2879 = vmul.f32 %v2809, 0.5
        %v2880 = vmul.f32 %v2814, 0.5
        %v2881 = vmul.f32 %v2819, 0.5
        %v2882 = vmul.f32 %v2824, 0.5
        %v2883 = vmul.f32 %v2829, 0.5
        %v2884 = vmul.f32 %v2834, 0.5
        %v2885 = vmul.f32 %v2839, 0.5
        %v2886 = vmul.f32 %v2844, 0.5
        %v2887 = vmul.f32 %v2849, 0.5
        %v2888 = vmul.f32 %v2854, 0.5
        %v2889 = vmul.f32 %v2859, 0.5
        %v2890 = vmul.f32 %v2864, 0.5
        %v2891 = vmul.f32 %v2869, 0.5
        %v2892 = vmul.f32 %v2874, 0.5
        %v2893 = vsub.f32 %v2716, %v2877
        %v2894 = vsub.f32 %v2717, %v2878
        %v2895 = vsub.f32 %v2718, %v2879
        %v2896 = vsub.f32 %v2719, %v2880
        %v2897 = vsub.f32 %v2720, %v2881
        %v2898 = vsub.f32 %v2721, %v2882
        %v2899 = vsub.f32 %v2722, %v2883
        %v2900 = vsub.f32 %v2723, %v2884
        %v2901 = vsub.f32 %v2724, %v2885
        %v2902 = vsub.f32 %v2725, %v2886
        %v2903 = vsub.f32 %v2726, %v2887
        %v2904 = vsub.f32 %v2727, %v2888
        %v2905 = vsub.f32 %v2728, %v2889
        %v2906 = vsub.f32 %v2729, %v2890
        %v2907 = vsub.f32 %v2730, %v2891
        %v2908 = vsub.f32 %v2731, %v2892
        %v2909 = vld [vmem:[%s113] sm:$0xff]
        %2910 = vadd.xlane.f32.xlu0 %v2909
        %v2911 = vpop.xlane.xlu0 %2910
        %v2912 = vmul.f32 %v2911, 0.027777778
        %v2913 = vsub.f32 %v2909, %v2912
        %v2914 = vsel %vm138, %v2913, 0.0
        %v2915 = vrsqrt.pop %v477
        %2916 = vmatprep.subr.mxu0 0.0
        %2917 = vmatpush1.msra.mxu0 %v2893
        %2918 = vmatprep.subr.mxu0 0.0
        %2919 = vmatpush1.msra.mxu0 %v2894
        %2920 = vmatprep.subr.mxu0 0.0
        %2921 = vmatpush1.msra.mxu0 %v2895
        %2922 = vmatprep.subr.mxu0 0.0
        %2923 = vmatpush1.msra.mxu0 %v2896
        %2924 = vmatprep.subr.mxu0 0.0
        %2925 = vmatpush1.msra.mxu0 %v2897
        %2926 = vmatprep.subr.mxu0 0.0
        %2927 = vmatpush1.msra.mxu0 %v2898
        %2928 = vmatprep.subr.mxu0 0.0
        %2929 = vmatpush1.msra.mxu0 %v2899
        %2930 = vmatprep.subr.mxu0 0.0
        %2931 = vmatpush1.msra.mxu0 %v2900
        %2932 = vmatprep.subr.mxu0 0.0
        %2933 = vmatpush1.msra.mxu0 %v2901
        %2934 = vmatprep.subr.mxu0 0.0
        %2935 = vmatpush1.msra.mxu0 %v2902
        %2936 = vmatprep.subr.mxu0 0.0
        %2937 = vmatpush1.msra.mxu0 %v2903
        %2938 = vmatprep.subr.mxu0 0.0
        %2939 = vmatpush1.msra.mxu0 %v2904
        %2940 = vmatprep.subr.mxu0 0.0
        %2941 = vmatpush1.msra.mxu0 %v2905
        %2942 = vmatprep.subr.mxu0 0.0
        %2943 = vmatpush1.msra.mxu0 %v2906
        %2944 = vmatprep.subr.mxu0 0.0
        %2945 = vmatpush1.msra.mxu0 %v2907
        %2946 = vmatprep.subr.mxu0 0.0
        %2947 = vmatpush1.msra.mxu0 %v2908
        %2948 = vmatprep.subr.mxu0 0.0
        %2949 = vmatpush1.msra.mxu0 0.0
        %2950 = vmatprep.subr.mxu0 0.0
        %2951 = vmatpush1.msra.mxu0 0.0
        %2952 = vmatprep.subr.mxu0 0.0
        %2953 = vmatpush1.msra.mxu0 0.0
        %2954 = vmatprep.subr.mxu0 0.0
        %2955 = vmatpush1.msra.mxu0 0.0
        %2956 = vmatprep.subr.mxu0 0.0
        %2957 = vmatpush1.msra.mxu0 0.0
        %2958 = vmatprep.subr.mxu0 0.0
        %2959 = vmatpush1.msra.mxu0 0.0
        %2960 = vmatprep.subr.mxu0 0.0
        %2961 = vmatpush1.msra.mxu0 0.0
        %2962 = vmatprep.subr.mxu0 0.0
        %2963 = vmatpush1.msra.mxu0 0.0
        %2964 = vmatprep.subr.mxu0 0.0
        %2965 = vmatpush1.msra.mxu0 0.0
        %2966 = vmatprep.subr.mxu0 0.0
        %2967 = vmatpush1.msra.mxu0 0.0
        %2968 = vmatprep.subr.mxu0 0.0
        %2969 = vmatpush1.msra.mxu0 0.0
        %2970 = vmatprep.subr.mxu0 0.0
        %2971 = vmatpush1.msra.mxu0 0.0
        %2972 = vmatprep.subr.mxu0 0.0
        %2973 = vmatpush1.msra.mxu0 0.0
        %2974 = vmatprep.subr.mxu0 0.0
        %2975 = vmatpush1.msra.mxu0 0.0
        %2976 = vmatprep.subr.mxu0 0.0
        %2977 = vmatpush1.msra.mxu0 0.0
        %2978 = vmatprep.subr.mxu0 0.0
        %2979 = vmatpush1.msra.mxu0 0.0
        %2980 = vmatprep.mubr.f32.mxu0 0.0
        %2981 = vmatmul.mubr.f32.gmra.mrb[0].mxu0 %v2914
        %v2982 = vpop.f32.mrb[0].mxu0
        %v2983 = vadd.f32 0.0, %v2982
        %v2984 = vpop.f32.mrb[0].mxu0
        %2985 = vdwg.mxu0
        %v2986 = vmul.f32 %v2983, %v2915
        %2987 = vst [vmem:[%s131] sm:$0xff] %v2986
        %s2988 = sand.u32 %s52, 1
        %s2989 = scalar_lea.sflag [#allocation4], %s2988
        %s2990 = sand.u32 %s52, 1
        %s2991 = smul.addr %s2990, 8
        %s2992 = scalar_lea.vmem [#allocation5], %s2991
        // Predicated region
        $region29: #{tpu_custom_call.1} parent=23 // pred_check
          %p2993 = pneg %p62
        $region30: #{tpu_custom_call.1} parent=23 // pred_check_branch
          %2995 = sbr.rel (%p2993) target = $region32
        $region31: #{tpu_custom_call.1} parent=23 // pred_region
          %s2997 = ssub.s32 128, 128
          %2998 = vsyncadd %s2989, %s2997
          %s2999 = smul.addr %s18, 128
          %s3000 = scalar_lea.hbm %s1, %s2999
          %s3002 = sshll.u32 %s2992, 4
          %s3003 = int_to_ptr.vmem [resolvable:$true] %s3002
          %3005 = dma.vmem_to_hbm [thread:$0]  %s3003, 128, %s3000, %s2989
        $region32: #{tpu_custom_call.1} parent=23 // pred_fallthru
          _
      $region24: #{tpu_custom_call.1} parent=5 // pred_fallthru
        _
      %p3006 = scmp.le.s32.totalorder 2, %s13
      // Predicated region
      $region33: #{tpu_custom_call.1} parent=5 // pred_check
        %p3007 = pneg %p3006
      $region34: #{tpu_custom_call.1} parent=5 // pred_check_branch
        %3009 = sbr.rel (%p3007) target = $region36
      $region35: #{tpu_custom_call.1} parent=5 // pred_region
        %s3010 = ssub.s32 %s13, 2
        // Predicated region
        $region37: #{tpu_custom_call.1} parent=35 // pred_check
          %p3011 = pneg %p68
        $region38: #{tpu_custom_call.1} parent=35 // pred_check_branch
          %3013 = sbr.rel (%p3011) target = $region40
        $region39: #{tpu_custom_call.1} parent=35 // pred_region
          %s3014 = sand.u32 %s53, 1
          %s3015 = scalar_lea.sflag [#allocation4], %s3014
          %s3016 = sand.u32 %s53, 1
          %s3017 = smul.addr %s3016, 8
          %s3018 = scalar_lea.vmem [#allocation5], %s3017
          %3019 = dma.done %s3015, 128
        $region40: #{tpu_custom_call.1} parent=35 // pred_fallthru
          _
      $region36: #{tpu_custom_call.1} parent=5 // pred_fallthru
        _
    $region6: #{tpu_custom_call.1} parent=1 // loop_footer
      %s17 = sadd.s32 1, %s13
    $region7: #{tpu_custom_call.1} parent=1 // loop_footer_branch
      %12 = sbr.rel target = $region3
    $region8: #{tpu_custom_call.1} parent=1 // loop_exit
      _
    %3020 = vsyncpa [#allocation3], 1
    %s3021 = scalar_lea.sflag [#allocation3], 1
    %3022 = vsyncpa %s3021, 1
    %3023 = vsyncpa [#allocation4], 1
    %s3024 = scalar_lea.sflag [#allocation4], 1
    %3025 = vsyncpa %s3024, 1

</llo_original>
